<compile_context>
chip_gen: v6e
topology: v6e:2x2x1
jax: 0.10.0
libtpu: 0.0.40
codegen_flags: <defaults>
</compile_context>

<pallas_src>
import functools

import jax
import jax.numpy as jnp
from jax.experimental import pallas as pl
from jax.experimental.pallas import tpu as pltpu


def _odernn_kernel(x_ref, wihT_ref, whhT_ref, brz_ref, bin_ref, bhn_ref,
                   w1T_ref, w2T_ref, gamma_ref, beta_ref, out_ref, *, nodes):
    """Full T-step ODE-RNN recurrence in one kernel invocation (no grid).

    x_ref:      [T, B*N, 1] f32   whole sequence, resident in VMEM
    wihT_ref:   [1, 3H]     f32   W_ih^T (input dim 1 -> broadcast multiply, VPU)
    whhT_ref:   [H, 3H]     cdt   W_hh^T (MXU)
    brz_ref:    [1, 2H]     f32   b_ih[:2H] + b_hh[:2H]   (r,z gates pre-summed)
    bin_ref:    [1, H]      f32   b_ih[2H:]                (n gate, input side)
    bhn_ref:    [1, H]      f32   b_hh[2H:]                (n gate, hidden side)
    w1T_ref:    [H, H]      cdt   GCN l1.weight^T
    w2T_ref:    [H, H]      cdt   GCN l2.weight^T
    gamma/beta: [1, H]      f32   BatchNorm1d affine parameters
    out_ref:    [B*N, H]    f32   final hidden state (written once)
    """
    T = x_ref.shape[0]
    BN, H = out_ref.shape
    N = nodes
    B = BN // N
    H2 = 2 * H
    f32 = jnp.float32
    cdt = whhT_ref.dtype                      # MXU compute dtype (bf16 or f32)

    # ---- loop-invariant loads (hoisted); [1,H] rows broadcast implicitly per op ----
    whhT = whhT_ref[...]                      # [H, 3H]
    w1T = w1T_ref[...]                        # [H, H]
    w2T = w2T_ref[...]                        # [H, H]
    bhn = bhn_ref[...]                        # [1, H]
    gamma = gamma_ref[...]                    # [1, H]
    beta = beta_ref[...]                      # [1, H]

    # ---- input-side gate math for all T, off the serial critical path ----
    gi_all = x_ref[...] * wihT_ref[...]               # [T, BN, 3H] f32 (lane broadcast)
    gi_rz_all = gi_all[..., :H2] + brz_ref[...]       # [T, BN, 2H]
    gi_n_all = gi_all[..., H2:] + bin_ref[...]        # [T, BN, H]

    inv_h = 1.0 / float(H)
    inv_bn = 1.0 / float(BN)

    h = jnp.zeros((BN, H), f32)
    # Fully unrolled recurrence (T is static & small): equivalent to
    # lax.fori_loop(..., unroll=True) but guarantees static per-step slices.
    for t in range(T):
        # ---------------- GRU cell (nn.GRUCell semantics) ----------------
        gh = jnp.dot(h.astype(cdt), whhT, preferred_element_type=f32)     # [BN, 3H]
        rz = jax.nn.sigmoid(gi_rz_all[t] + gh[:, :H2])                    # [BN, 2H]
        r = rz[:, :H]
        z = rz[:, H:]
        n = jnp.tanh(gi_n_all[t] + r * (gh[:, H2:] + bhn))
        h_new = (1.0 - z) * n + z * h                                     # [BN, H]

        # ---------- GCN = ODE right-hand side, one Euler step of size 1 ----------
        # Pearson row stats in one fused pass: ssd = sum(x^2) - mu*sum(x).
        s1 = jnp.sum(h_new, axis=-1, keepdims=True)                       # [BN, 1]
        s2 = jnp.sum(h_new * h_new, axis=-1, keepdims=True)               # [BN, 1]
        mu = s1 * inv_h
        ssd = s2 - mu * s1
        xn = (h_new - mu) * jax.lax.rsqrt(ssd + 1e-8)                     # [BN, H]

        # Per-batch correlation adj_b = xn_b @ xn_b^T and aggregation adj_b @ h_b
        # (block-diagonal PCC; B is static -> unrolled plain 2D matmuls).
        aggs = []
        for b in range(B):
            lo = b * N
            xb = xn[lo:lo + N, :]                                         # [N, H]
            hb = h_new[lo:lo + N, :]                                      # [N, H]
            adj_b = jax.lax.dot_general(
                xb, xb, dimension_numbers=(((1,), (1,)), ((), ())),
                preferred_element_type=f32)                               # [N, N]
            aggs.append(jnp.dot(adj_b.astype(cdt), hb.astype(cdt),
                                preferred_element_type=f32))              # [N, H]
        agg = jnp.concatenate(aggs, axis=0) if B > 1 else aggs[0]         # [BN, H]

        # Two-layer GCN as flat [BN,H] x [H,H] matmuls.
        o = jnp.maximum(
            jnp.dot(agg.astype(cdt), w1T, preferred_element_type=f32), 0.0)
        o = jnp.dot(o.astype(cdt), w2T, preferred_element_type=f32)       # [BN, H]

        # BatchNorm1d (training mode, biased var) with fused one-pass statistics.
        bm = jnp.sum(o, axis=0, keepdims=True) * inv_bn                   # [1, H]
        e2 = jnp.sum(o * o, axis=0, keepdims=True) * inv_bn               # [1, H]
        bv = e2 - bm * bm
        o = (o - bm) * jax.lax.rsqrt(bv + 1e-5) * gamma + beta

        h = h_new + o                                  # Euler step (tt = [0, 1])

    out_ref[...] = h


def odernn_encoder(inputs, w_ih, w_hh, b_ih, b_hh, w1, w2, gamma, beta,
                   hidden_dim, *, matmul_dtype=jnp.bfloat16):
    """inputs: [B, N, T] -> final hidden state [B, N, hidden_dim] float32."""
    B, N, T = inputs.shape
    H = hidden_dim
    BN = B * N
    f32 = jnp.float32

    # [B, N, T] -> [T, B*N, 1]: whole sequence DMA'd to VMEM once, no per-step DMA.
    x = jnp.transpose(inputs.astype(f32), (2, 0, 1)).reshape(T, BN, 1)

    wihT = w_ih.T.astype(f32)                                  # [1, 3H] (VPU path)
    whhT = w_hh.T.astype(matmul_dtype)                         # [H, 3H] (MXU path)
    w1T = w1.T.astype(matmul_dtype)                            # [H, H]
    w2T = w2.T.astype(matmul_dtype)                            # [H, H]
    brz = (b_ih[:2 * H] + b_hh[:2 * H]).astype(f32)[None, :]   # [1, 2H]
    bin_ = b_ih[2 * H:].astype(f32)[None, :]                   # [1, H]
    bhn = b_hh[2 * H:].astype(f32)[None, :]                    # [1, H]
    g2 = gamma.astype(f32)[None, :]                            # [1, H]
    b2 = beta.astype(f32)[None, :]                             # [1, H]

    # Explicit VMEM budget: defaults are only 16 MiB (v5e) / 32 MiB (v6e/v7x).
    itemsize = jnp.dtype(matmul_dtype).itemsize
    resident = ((x.size + wihT.size + brz.size + bin_.size + bhn.size
                 + g2.size + b2.size + BN * H) * 4
                + (whhT.size + w1T.size + w2T.size) * itemsize
                + T * BN * 3 * H * 4)                          # hoisted gi_* values
    vmem_limit = int(min(100 * 2**20, max(16 * 2**20, 2 * resident + (1 << 20))))

    vmem = pl.BlockSpec(memory_space=pltpu.MemorySpace.VMEM)
    out2d = pl.pallas_call(
        functools.partial(_odernn_kernel, nodes=N),
        out_shape=jax.ShapeDtypeStruct((BN, H), f32),          # lane-dense flat 2D out
        in_specs=[vmem] * 10,
        out_specs=vmem,
        compiler_params=pltpu.CompilerParams(vmem_limit_bytes=vmem_limit),
    )(x, wihT, whhT, brz, bin_, bhn, w1T, w2T, g2, b2)
    return out2d.reshape(B, N, H)


if __name__ == "__main__":
    B, N, T = 2, 4, 8          # batch, nodes, sequence length
    H, IN = 32, 1              # hidden dim, input feature dim (after unsqueeze)

    key = jax.random.PRNGKey(0)
    ks = jax.random.split(key, 7)

    s = 1.0 / jnp.sqrt(jnp.float32(H))
    w_ih = jax.random.uniform(ks[0], (3 * H, IN), jnp.float32, -s, s)   # GRUCell weight_ih
    w_hh = jax.random.uniform(ks[1], (3 * H, H), jnp.float32, -s, s)    # GRUCell weight_hh
    b_ih = jax.random.uniform(ks[2], (3 * H,), jnp.float32, -s, s)
    b_hh = jax.random.uniform(ks[3], (3 * H,), jnp.float32, -s, s)
    w1 = jax.random.uniform(ks[4], (H, H), jnp.float32, -s, s)          # GCN l1.weight
    w2 = jax.random.uniform(ks[5], (H, H), jnp.float32, -s, s)          # GCN l2.weight
    gamma = jnp.ones((H,), jnp.float32)                                 # BatchNorm1d weight
    beta = jnp.zeros((H,), jnp.float32)                                 # BatchNorm1d bias

    inputs = jax.random.normal(ks[6], (B, N, T), jnp.float32)

    out = odernn_encoder(inputs, w_ih, w_hh, b_ih, b_hh, w1, w2, gamma, beta, H)
    jax.block_until_ready(out)
    assert out.shape == (B, N, H) and out.dtype == jnp.float32
    assert bool(jnp.all(jnp.isfinite(out)))
    print("KERNEL_OK")
</pallas_src>

<mosaic_0001>
module attributes {stable_mosaic.version = 11 : i64} {
  func.func @_odernn_kernel(%arg0: memref<8x8x1xf32, #tpu.memory_space<vmem>>, %arg1: memref<1x96xf32, #tpu.memory_space<vmem>>, %arg2: memref<32x96xbf16, #tpu.memory_space<vmem>>, %arg3: memref<1x64xf32, #tpu.memory_space<vmem>>, %arg4: memref<1x32xf32, #tpu.memory_space<vmem>>, %arg5: memref<1x32xf32, #tpu.memory_space<vmem>>, %arg6: memref<32x32xbf16, #tpu.memory_space<vmem>>, %arg7: memref<32x32xbf16, #tpu.memory_space<vmem>>, %arg8: memref<1x32xf32, #tpu.memory_space<vmem>>, %arg9: memref<1x32xf32, #tpu.memory_space<vmem>>, %arg10: memref<8x32xf32, #tpu.memory_space<vmem>>) attributes {dimension_semantics = [], scalar_prefetch = 0 : i64, scratch_operands = 0 : i64, tpu.core_type = #tpu.core_type<tc>} {
    %c0 = arith.constant 0 : index
    %c0_0 = arith.constant 0 : index
    %0 = vector.load %arg2[%c0, %c0_0] : memref<32x96xbf16, #tpu.memory_space<vmem>>, vector<32x96xbf16>
    %c0_1 = arith.constant 0 : index
    %c0_2 = arith.constant 0 : index
    %1 = vector.load %arg6[%c0_1, %c0_2] : memref<32x32xbf16, #tpu.memory_space<vmem>>, vector<32x32xbf16>
    %c0_3 = arith.constant 0 : index
    %c0_4 = arith.constant 0 : index
    %2 = vector.load %arg7[%c0_3, %c0_4] : memref<32x32xbf16, #tpu.memory_space<vmem>>, vector<32x32xbf16>
    %c0_5 = arith.constant 0 : index
    %c0_6 = arith.constant 0 : index
    %3 = vector.load %arg5[%c0_5, %c0_6] : memref<1x32xf32, #tpu.memory_space<vmem>>, vector<1x32xf32>
    %c0_7 = arith.constant 0 : index
    %c0_8 = arith.constant 0 : index
    %4 = vector.load %arg8[%c0_7, %c0_8] : memref<1x32xf32, #tpu.memory_space<vmem>>, vector<1x32xf32>
    %c0_9 = arith.constant 0 : index
    %c0_10 = arith.constant 0 : index
    %5 = vector.load %arg9[%c0_9, %c0_10] : memref<1x32xf32, #tpu.memory_space<vmem>>, vector<1x32xf32>
    %c0_11 = arith.constant 0 : index
    %c0_12 = arith.constant 0 : index
    %c0_13 = arith.constant 0 : index
    %6 = vector.load %arg0[%c0_11, %c0_12, %c0_13] : memref<8x8x1xf32, #tpu.memory_space<vmem>>, vector<8x8x1xf32>
    %c0_14 = arith.constant 0 : index
    %c0_15 = arith.constant 0 : index
    %7 = vector.load %arg1[%c0_14, %c0_15] : memref<1x96xf32, #tpu.memory_space<vmem>>, vector<1x96xf32>
    %8 = vector.shape_cast %7 : vector<1x96xf32> to vector<1x1x96xf32>
    %9 = vector.broadcast %6 : vector<8x8x1xf32> to vector<8x8x96xf32>
    %10 = vector.broadcast %8 : vector<1x1x96xf32> to vector<8x8x96xf32>
    %11 = arith.mulf %9, %10 : vector<8x8x96xf32>
    %12 = vector.extract_strided_slice %11 {offsets = [0, 0, 0], sizes = [8, 8, 64], strides = [1, 1, 1]} : vector<8x8x96xf32> to vector<8x8x64xf32>
    %c0_16 = arith.constant 0 : index
    %c0_17 = arith.constant 0 : index
    %13 = vector.load %arg3[%c0_16, %c0_17] : memref<1x64xf32, #tpu.memory_space<vmem>>, vector<1x64xf32>
    %14 = vector.shape_cast %13 : vector<1x64xf32> to vector<1x1x64xf32>
    %15 = vector.broadcast %14 : vector<1x1x64xf32> to vector<8x8x64xf32>
    %16 = arith.addf %12, %15 : vector<8x8x64xf32>
    %17 = vector.extract_strided_slice %11 {offsets = [0, 0, 64], sizes = [8, 8, 32], strides = [1, 1, 1]} : vector<8x8x96xf32> to vector<8x8x32xf32>
    %c0_18 = arith.constant 0 : index
    %c0_19 = arith.constant 0 : index
    %18 = vector.load %arg4[%c0_18, %c0_19] : memref<1x32xf32, #tpu.memory_space<vmem>>, vector<1x32xf32>
    %19 = vector.shape_cast %18 : vector<1x32xf32> to vector<1x1x32xf32>
    %20 = vector.broadcast %19 : vector<1x1x32xf32> to vector<8x8x32xf32>
    %21 = arith.addf %17, %20 : vector<8x8x32xf32>
    %cst = arith.constant 0.000000e+00 : f32
    %22 = vector.broadcast %cst : f32 to vector<8x32xf32>
    %23 = arith.truncf %22 : vector<8x32xf32> to vector<8x32xbf16>
    %cst_20 = arith.constant dense<0.000000e+00> : vector<8x96xf32>
    %24 = tpu.matmul %23, %0, %cst_20 {dimension_numbers = #tpu.dot_dimension_numbers<[1], [0], [0], [1], [0, 0, 1, 1], [], []>} : vector<8x32xbf16>, vector<32x96xbf16>, vector<8x96xf32> -> vector<8x96xf32>
    %25 = vector.extract_strided_slice %16 {offsets = [0, 0, 0], sizes = [1, 8, 64], strides = [1, 1, 1]} : vector<8x8x64xf32> to vector<1x8x64xf32>
    %26 = vector.shape_cast %25 : vector<1x8x64xf32> to vector<8x64xf32>
    %27 = vector.extract_strided_slice %24 {offsets = [0, 0], sizes = [8, 64], strides = [1, 1]} : vector<8x96xf32> to vector<8x64xf32>
    %28 = arith.addf %26, %27 : vector<8x64xf32>
    %29 = arith.negf %28 : vector<8x64xf32>
    %30 = math.exp %29 : vector<8x64xf32>
    %cst_21 = arith.constant 1.000000e+00 : f32
    %31 = vector.broadcast %cst_21 : f32 to vector<8x64xf32>
    %32 = arith.addf %31, %30 : vector<8x64xf32>
    %33 = arith.divf %31, %32 : vector<8x64xf32>
    %34 = vector.extract_strided_slice %33 {offsets = [0, 0], sizes = [8, 32], strides = [1, 1]} : vector<8x64xf32> to vector<8x32xf32>
    %35 = vector.extract_strided_slice %33 {offsets = [0, 32], sizes = [8, 32], strides = [1, 1]} : vector<8x64xf32> to vector<8x32xf32>
    %36 = vector.extract_strided_slice %21 {offsets = [0, 0, 0], sizes = [1, 8, 32], strides = [1, 1, 1]} : vector<8x8x32xf32> to vector<1x8x32xf32>
    %37 = vector.shape_cast %36 : vector<1x8x32xf32> to vector<8x32xf32>
    %38 = vector.extract_strided_slice %24 {offsets = [0, 64], sizes = [8, 32], strides = [1, 1]} : vector<8x96xf32> to vector<8x32xf32>
    %39 = vector.broadcast %3 : vector<1x32xf32> to vector<8x32xf32>
    %40 = arith.addf %38, %39 : vector<8x32xf32>
    %41 = arith.mulf %34, %40 : vector<8x32xf32>
    %42 = arith.addf %37, %41 : vector<8x32xf32>
    %43 = math.tanh %42 : vector<8x32xf32>
    %cst_22 = arith.constant 1.000000e+00 : f32
    %44 = vector.broadcast %cst_22 : f32 to vector<8x32xf32>
    %45 = arith.subf %44, %35 : vector<8x32xf32>
    %46 = arith.mulf %45, %43 : vector<8x32xf32>
    %47 = arith.mulf %35, %22 : vector<8x32xf32>
    %48 = arith.addf %46, %47 : vector<8x32xf32>
    %cst_23 = arith.constant dense<0.000000e+00> : vector<8xf32>
    %49 = vector.multi_reduction <add>, %48, %cst_23 [1] : vector<8x32xf32> to vector<8xf32>
    %50 = vector.shape_cast %49 : vector<8xf32> to vector<8x1xf32>
    %51 = arith.mulf %48, %48 : vector<8x32xf32>
    %cst_24 = arith.constant dense<0.000000e+00> : vector<8xf32>
    %52 = vector.multi_reduction <add>, %51, %cst_24 [1] : vector<8x32xf32> to vector<8xf32>
    %53 = vector.shape_cast %52 : vector<8xf32> to vector<8x1xf32>
    %cst_25 = arith.constant 3.125000e-02 : f32
    %54 = vector.broadcast %cst_25 : f32 to vector<8x1xf32>
    %55 = arith.mulf %50, %54 : vector<8x1xf32>
    %56 = arith.mulf %55, %50 : vector<8x1xf32>
    %57 = arith.subf %53, %56 : vector<8x1xf32>
    %58 = vector.broadcast %55 : vector<8x1xf32> to vector<8x32xf32>
    %59 = arith.subf %48, %58 : vector<8x32xf32>
    %cst_26 = arith.constant 9.99999993E-9 : f32
    %60 = vector.broadcast %cst_26 : f32 to vector<8x1xf32>
    %61 = arith.addf %57, %60 : vector<8x1xf32>
    %62 = math.rsqrt %61 : vector<8x1xf32>
    %63 = vector.broadcast %62 : vector<8x1xf32> to vector<8x32xf32>
    %64 = arith.mulf %59, %63 : vector<8x32xf32>
    %65 = vector.extract_strided_slice %64 {offsets = [0, 0], sizes = [4, 32], strides = [1, 1]} : vector<8x32xf32> to vector<4x32xf32>
    %66 = vector.extract_strided_slice %48 {offsets = [0, 0], sizes = [4, 32], strides = [1, 1]} : vector<8x32xf32> to vector<4x32xf32>
    %cst_27 = arith.constant dense<0.000000e+00> : vector<4x4xf32>
    %67 = tpu.matmul %65, %65, %cst_27 {dimension_numbers = #tpu.dot_dimension_numbers<[1], [1], [0], [0], [0, 0, 1, 0], [], []>} : vector<4x32xf32>, vector<4x32xf32>, vector<4x4xf32> -> vector<4x4xf32>
    %68 = arith.truncf %67 : vector<4x4xf32> to vector<4x4xbf16>
    %69 = arith.truncf %66 : vector<4x32xf32> to vector<4x32xbf16>
    %cst_28 = arith.constant dense<0.000000e+00> : vector<4x32xf32>
    %70 = tpu.matmul %68, %69, %cst_28 {dimension_numbers = #tpu.dot_dimension_numbers<[1], [0], [0], [1], [0, 0, 1, 1], [], []>} : vector<4x4xbf16>, vector<4x32xbf16>, vector<4x32xf32> -> vector<4x32xf32>
    %71 = vector.extract_strided_slice %64 {offsets = [4, 0], sizes = [4, 32], strides = [1, 1]} : vector<8x32xf32> to vector<4x32xf32>
    %72 = vector.extract_strided_slice %48 {offsets = [4, 0], sizes = [4, 32], strides = [1, 1]} : vector<8x32xf32> to vector<4x32xf32>
    %cst_29 = arith.constant dense<0.000000e+00> : vector<4x4xf32>
    %73 = tpu.matmul %71, %71, %cst_29 {dimension_numbers = #tpu.dot_dimension_numbers<[1], [1], [0], [0], [0, 0, 1, 0], [], []>} : vector<4x32xf32>, vector<4x32xf32>, vector<4x4xf32> -> vector<4x4xf32>
    %74 = arith.truncf %73 : vector<4x4xf32> to vector<4x4xbf16>
    %75 = arith.truncf %72 : vector<4x32xf32> to vector<4x32xbf16>
    %cst_30 = arith.constant dense<0.000000e+00> : vector<4x32xf32>
    %76 = tpu.matmul %74, %75, %cst_30 {dimension_numbers = #tpu.dot_dimension_numbers<[1], [0], [0], [1], [0, 0, 1, 1], [], []>} : vector<4x4xbf16>, vector<4x32xbf16>, vector<4x32xf32> -> vector<4x32xf32>
    %77 = tpu.concatenate %70, %76 in 0 : vector<4x32xf32>, vector<4x32xf32> -> vector<8x32xf32>
    %78 = arith.truncf %77 : vector<8x32xf32> to vector<8x32xbf16>
    %cst_31 = arith.constant dense<0.000000e+00> : vector<8x32xf32>
    %79 = tpu.matmul %78, %1, %cst_31 {dimension_numbers = #tpu.dot_dimension_numbers<[1], [0], [0], [1], [0, 0, 1, 1], [], []>} : vector<8x32xbf16>, vector<32x32xbf16>, vector<8x32xf32> -> vector<8x32xf32>
    %cst_32 = arith.constant 0.000000e+00 : f32
    %80 = vector.broadcast %cst_32 : f32 to vector<8x32xf32>
    %81 = arith.maximumf %79, %80 : vector<8x32xf32>
    %82 = arith.truncf %81 : vector<8x32xf32> to vector<8x32xbf16>
    %cst_33 = arith.constant dense<0.000000e+00> : vector<8x32xf32>
    %83 = tpu.matmul %82, %2, %cst_33 {dimension_numbers = #tpu.dot_dimension_numbers<[1], [0], [0], [1], [0, 0, 1, 1], [], []>} : vector<8x32xbf16>, vector<32x32xbf16>, vector<8x32xf32> -> vector<8x32xf32>
    %cst_34 = arith.constant dense<0.000000e+00> : vector<32xf32>
    %84 = vector.multi_reduction <add>, %83, %cst_34 [0] : vector<8x32xf32> to vector<32xf32>
    %85 = vector.shape_cast %84 : vector<32xf32> to vector<1x32xf32>
    %cst_35 = arith.constant 1.250000e-01 : f32
    %86 = vector.broadcast %cst_35 : f32 to vector<1x32xf32>
    %87 = arith.mulf %85, %86 : vector<1x32xf32>
    %88 = arith.mulf %83, %83 : vector<8x32xf32>
    %cst_36 = arith.constant dense<0.000000e+00> : vector<32xf32>
    %89 = vector.multi_reduction <add>, %88, %cst_36 [0] : vector<8x32xf32> to vector<32xf32>
    %90 = vector.shape_cast %89 : vector<32xf32> to vector<1x32xf32>
    %cst_37 = arith.constant 1.250000e-01 : f32
    %91 = vector.broadcast %cst_37 : f32 to vector<1x32xf32>
    %92 = arith.mulf %90, %91 : vector<1x32xf32>
    %93 = arith.mulf %87, %87 : vector<1x32xf32>
    %94 = arith.subf %92, %93 : vector<1x32xf32>
    %95 = vector.broadcast %87 : vector<1x32xf32> to vector<8x32xf32>
    %96 = arith.subf %83, %95 : vector<8x32xf32>
    %cst_38 = arith.constant 9.99999974E-6 : f32
    %97 = vector.broadcast %cst_38 : f32 to vector<1x32xf32>
    %98 = arith.addf %94, %97 : vector<1x32xf32>
    %99 = math.rsqrt %98 : vector<1x32xf32>
    %100 = vector.broadcast %99 : vector<1x32xf32> to vector<8x32xf32>
    %101 = arith.mulf %96, %100 : vector<8x32xf32>
    %102 = vector.broadcast %4 : vector<1x32xf32> to vector<8x32xf32>
    %103 = arith.mulf %101, %102 : vector<8x32xf32>
    %104 = vector.broadcast %5 : vector<1x32xf32> to vector<8x32xf32>
    %105 = arith.addf %103, %104 : vector<8x32xf32>
    %106 = arith.addf %48, %105 : vector<8x32xf32>
    %107 = arith.truncf %106 : vector<8x32xf32> to vector<8x32xbf16>
    %cst_39 = arith.constant dense<0.000000e+00> : vector<8x96xf32>
    %108 = tpu.matmul %107, %0, %cst_39 {dimension_numbers = #tpu.dot_dimension_numbers<[1], [0], [0], [1], [0, 0, 1, 1], [], []>} : vector<8x32xbf16>, vector<32x96xbf16>, vector<8x96xf32> -> vector<8x96xf32>
    %109 = vector.extract_strided_slice %16 {offsets = [1, 0, 0], sizes = [1, 8, 64], strides = [1, 1, 1]} : vector<8x8x64xf32> to vector<1x8x64xf32>
    %110 = vector.shape_cast %109 : vector<1x8x64xf32> to vector<8x64xf32>
    %111 = vector.extract_strided_slice %108 {offsets = [0, 0], sizes = [8, 64], strides = [1, 1]} : vector<8x96xf32> to vector<8x64xf32>
    %112 = arith.addf %110, %111 : vector<8x64xf32>
    %113 = arith.negf %112 : vector<8x64xf32>
    %114 = math.exp %113 : vector<8x64xf32>
    %cst_40 = arith.constant 1.000000e+00 : f32
    %115 = vector.broadcast %cst_40 : f32 to vector<8x64xf32>
    %116 = arith.addf %115, %114 : vector<8x64xf32>
    %117 = arith.divf %115, %116 : vector<8x64xf32>
    %118 = vector.extract_strided_slice %117 {offsets = [0, 0], sizes = [8, 32], strides = [1, 1]} : vector<8x64xf32> to vector<8x32xf32>
    %119 = vector.extract_strided_slice %117 {offsets = [0, 32], sizes = [8, 32], strides = [1, 1]} : vector<8x64xf32> to vector<8x32xf32>
    %120 = vector.extract_strided_slice %21 {offsets = [1, 0, 0], sizes = [1, 8, 32], strides = [1, 1, 1]} : vector<8x8x32xf32> to vector<1x8x32xf32>
    %121 = vector.shape_cast %120 : vector<1x8x32xf32> to vector<8x32xf32>
    %122 = vector.extract_strided_slice %108 {offsets = [0, 64], sizes = [8, 32], strides = [1, 1]} : vector<8x96xf32> to vector<8x32xf32>
    %123 = vector.broadcast %3 : vector<1x32xf32> to vector<8x32xf32>
    %124 = arith.addf %122, %123 : vector<8x32xf32>
    %125 = arith.mulf %118, %124 : vector<8x32xf32>
    %126 = arith.addf %121, %125 : vector<8x32xf32>
    %127 = math.tanh %126 : vector<8x32xf32>
    %cst_41 = arith.constant 1.000000e+00 : f32
    %128 = vector.broadcast %cst_41 : f32 to vector<8x32xf32>
    %129 = arith.subf %128, %119 : vector<8x32xf32>
    %130 = arith.mulf %129, %127 : vector<8x32xf32>
    %131 = arith.mulf %119, %106 : vector<8x32xf32>
    %132 = arith.addf %130, %131 : vector<8x32xf32>
    %cst_42 = arith.constant dense<0.000000e+00> : vector<8xf32>
    %133 = vector.multi_reduction <add>, %132, %cst_42 [1] : vector<8x32xf32> to vector<8xf32>
    %134 = vector.shape_cast %133 : vector<8xf32> to vector<8x1xf32>
    %135 = arith.mulf %132, %132 : vector<8x32xf32>
    %cst_43 = arith.constant dense<0.000000e+00> : vector<8xf32>
    %136 = vector.multi_reduction <add>, %135, %cst_43 [1] : vector<8x32xf32> to vector<8xf32>
    %137 = vector.shape_cast %136 : vector<8xf32> to vector<8x1xf32>
    %cst_44 = arith.constant 3.125000e-02 : f32
    %138 = vector.broadcast %cst_44 : f32 to vector<8x1xf32>
    %139 = arith.mulf %134, %138 : vector<8x1xf32>
    %140 = arith.mulf %139, %134 : vector<8x1xf32>
    %141 = arith.subf %137, %140 : vector<8x1xf32>
    %142 = vector.broadcast %139 : vector<8x1xf32> to vector<8x32xf32>
    %143 = arith.subf %132, %142 : vector<8x32xf32>
    %cst_45 = arith.constant 9.99999993E-9 : f32
    %144 = vector.broadcast %cst_45 : f32 to vector<8x1xf32>
    %145 = arith.addf %141, %144 : vector<8x1xf32>
    %146 = math.rsqrt %145 : vector<8x1xf32>
    %147 = vector.broadcast %146 : vector<8x1xf32> to vector<8x32xf32>
    %148 = arith.mulf %143, %147 : vector<8x32xf32>
    %149 = vector.extract_strided_slice %148 {offsets = [0, 0], sizes = [4, 32], strides = [1, 1]} : vector<8x32xf32> to vector<4x32xf32>
    %150 = vector.extract_strided_slice %132 {offsets = [0, 0], sizes = [4, 32], strides = [1, 1]} : vector<8x32xf32> to vector<4x32xf32>
    %cst_46 = arith.constant dense<0.000000e+00> : vector<4x4xf32>
    %151 = tpu.matmul %149, %149, %cst_46 {dimension_numbers = #tpu.dot_dimension_numbers<[1], [1], [0], [0], [0, 0, 1, 0], [], []>} : vector<4x32xf32>, vector<4x32xf32>, vector<4x4xf32> -> vector<4x4xf32>
    %152 = arith.truncf %151 : vector<4x4xf32> to vector<4x4xbf16>
    %153 = arith.truncf %150 : vector<4x32xf32> to vector<4x32xbf16>
    %cst_47 = arith.constant dense<0.000000e+00> : vector<4x32xf32>
    %154 = tpu.matmul %152, %153, %cst_47 {dimension_numbers = #tpu.dot_dimension_numbers<[1], [0], [0], [1], [0, 0, 1, 1], [], []>} : vector<4x4xbf16>, vector<4x32xbf16>, vector<4x32xf32> -> vector<4x32xf32>
    %155 = vector.extract_strided_slice %148 {offsets = [4, 0], sizes = [4, 32], strides = [1, 1]} : vector<8x32xf32> to vector<4x32xf32>
    %156 = vector.extract_strided_slice %132 {offsets = [4, 0], sizes = [4, 32], strides = [1, 1]} : vector<8x32xf32> to vector<4x32xf32>
    %cst_48 = arith.constant dense<0.000000e+00> : vector<4x4xf32>
    %157 = tpu.matmul %155, %155, %cst_48 {dimension_numbers = #tpu.dot_dimension_numbers<[1], [1], [0], [0], [0, 0, 1, 0], [], []>} : vector<4x32xf32>, vector<4x32xf32>, vector<4x4xf32> -> vector<4x4xf32>
    %158 = arith.truncf %157 : vector<4x4xf32> to vector<4x4xbf16>
    %159 = arith.truncf %156 : vector<4x32xf32> to vector<4x32xbf16>
    %cst_49 = arith.constant dense<0.000000e+00> : vector<4x32xf32>
    %160 = tpu.matmul %158, %159, %cst_49 {dimension_numbers = #tpu.dot_dimension_numbers<[1], [0], [0], [1], [0, 0, 1, 1], [], []>} : vector<4x4xbf16>, vector<4x32xbf16>, vector<4x32xf32> -> vector<4x32xf32>
    %161 = tpu.concatenate %154, %160 in 0 : vector<4x32xf32>, vector<4x32xf32> -> vector<8x32xf32>
    %162 = arith.truncf %161 : vector<8x32xf32> to vector<8x32xbf16>
    %cst_50 = arith.constant dense<0.000000e+00> : vector<8x32xf32>
    %163 = tpu.matmul %162, %1, %cst_50 {dimension_numbers = #tpu.dot_dimension_numbers<[1], [0], [0], [1], [0, 0, 1, 1], [], []>} : vector<8x32xbf16>, vector<32x32xbf16>, vector<8x32xf32> -> vector<8x32xf32>
    %cst_51 = arith.constant 0.000000e+00 : f32
    %164 = vector.broadcast %cst_51 : f32 to vector<8x32xf32>
    %165 = arith.maximumf %163, %164 : vector<8x32xf32>
    %166 = arith.truncf %165 : vector<8x32xf32> to vector<8x32xbf16>
    %cst_52 = arith.constant dense<0.000000e+00> : vector<8x32xf32>
    %167 = tpu.matmul %166, %2, %cst_52 {dimension_numbers = #tpu.dot_dimension_numbers<[1], [0], [0], [1], [0, 0, 1, 1], [], []>} : vector<8x32xbf16>, vector<32x32xbf16>, vector<8x32xf32> -> vector<8x32xf32>
    %cst_53 = arith.constant dense<0.000000e+00> : vector<32xf32>
    %168 = vector.multi_reduction <add>, %167, %cst_53 [0] : vector<8x32xf32> to vector<32xf32>
    %169 = vector.shape_cast %168 : vector<32xf32> to vector<1x32xf32>
    %cst_54 = arith.constant 1.250000e-01 : f32
    %170 = vector.broadcast %cst_54 : f32 to vector<1x32xf32>
    %171 = arith.mulf %169, %170 : vector<1x32xf32>
    %172 = arith.mulf %167, %167 : vector<8x32xf32>
    %cst_55 = arith.constant dense<0.000000e+00> : vector<32xf32>
    %173 = vector.multi_reduction <add>, %172, %cst_55 [0] : vector<8x32xf32> to vector<32xf32>
    %174 = vector.shape_cast %173 : vector<32xf32> to vector<1x32xf32>
    %cst_56 = arith.constant 1.250000e-01 : f32
    %175 = vector.broadcast %cst_56 : f32 to vector<1x32xf32>
    %176 = arith.mulf %174, %175 : vector<1x32xf32>
    %177 = arith.mulf %171, %171 : vector<1x32xf32>
    %178 = arith.subf %176, %177 : vector<1x32xf32>
    %179 = vector.broadcast %171 : vector<1x32xf32> to vector<8x32xf32>
    %180 = arith.subf %167, %179 : vector<8x32xf32>
    %cst_57 = arith.constant 9.99999974E-6 : f32
    %181 = vector.broadcast %cst_57 : f32 to vector<1x32xf32>
    %182 = arith.addf %178, %181 : vector<1x32xf32>
    %183 = math.rsqrt %182 : vector<1x32xf32>
    %184 = vector.broadcast %183 : vector<1x32xf32> to vector<8x32xf32>
    %185 = arith.mulf %180, %184 : vector<8x32xf32>
    %186 = vector.broadcast %4 : vector<1x32xf32> to vector<8x32xf32>
    %187 = arith.mulf %185, %186 : vector<8x32xf32>
    %188 = vector.broadcast %5 : vector<1x32xf32> to vector<8x32xf32>
    %189 = arith.addf %187, %188 : vector<8x32xf32>
    %190 = arith.addf %132, %189 : vector<8x32xf32>
    %191 = arith.truncf %190 : vector<8x32xf32> to vector<8x32xbf16>
    %cst_58 = arith.constant dense<0.000000e+00> : vector<8x96xf32>
    %192 = tpu.matmul %191, %0, %cst_58 {dimension_numbers = #tpu.dot_dimension_numbers<[1], [0], [0], [1], [0, 0, 1, 1], [], []>} : vector<8x32xbf16>, vector<32x96xbf16>, vector<8x96xf32> -> vector<8x96xf32>
    %193 = vector.extract_strided_slice %16 {offsets = [2, 0, 0], sizes = [1, 8, 64], strides = [1, 1, 1]} : vector<8x8x64xf32> to vector<1x8x64xf32>
    %194 = vector.shape_cast %193 : vector<1x8x64xf32> to vector<8x64xf32>
    %195 = vector.extract_strided_slice %192 {offsets = [0, 0], sizes = [8, 64], strides = [1, 1]} : vector<8x96xf32> to vector<8x64xf32>
    %196 = arith.addf %194, %195 : vector<8x64xf32>
    %197 = arith.negf %196 : vector<8x64xf32>
    %198 = math.exp %197 : vector<8x64xf32>
    %cst_59 = arith.constant 1.000000e+00 : f32
    %199 = vector.broadcast %cst_59 : f32 to vector<8x64xf32>
    %200 = arith.addf %199, %198 : vector<8x64xf32>
    %201 = arith.divf %199, %200 : vector<8x64xf32>
    %202 = vector.extract_strided_slice %201 {offsets = [0, 0], sizes = [8, 32], strides = [1, 1]} : vector<8x64xf32> to vector<8x32xf32>
    %203 = vector.extract_strided_slice %201 {offsets = [0, 32], sizes = [8, 32], strides = [1, 1]} : vector<8x64xf32> to vector<8x32xf32>
    %204 = vector.extract_strided_slice %21 {offsets = [2, 0, 0], sizes = [1, 8, 32], strides = [1, 1, 1]} : vector<8x8x32xf32> to vector<1x8x32xf32>
    %205 = vector.shape_cast %204 : vector<1x8x32xf32> to vector<8x32xf32>
    %206 = vector.extract_strided_slice %192 {offsets = [0, 64], sizes = [8, 32], strides = [1, 1]} : vector<8x96xf32> to vector<8x32xf32>
    %207 = vector.broadcast %3 : vector<1x32xf32> to vector<8x32xf32>
    %208 = arith.addf %206, %207 : vector<8x32xf32>
    %209 = arith.mulf %202, %208 : vector<8x32xf32>
    %210 = arith.addf %205, %209 : vector<8x32xf32>
    %211 = math.tanh %210 : vector<8x32xf32>
    %cst_60 = arith.constant 1.000000e+00 : f32
    %212 = vector.broadcast %cst_60 : f32 to vector<8x32xf32>
    %213 = arith.subf %212, %203 : vector<8x32xf32>
    %214 = arith.mulf %213, %211 : vector<8x32xf32>
    %215 = arith.mulf %203, %190 : vector<8x32xf32>
    %216 = arith.addf %214, %215 : vector<8x32xf32>
    %cst_61 = arith.constant dense<0.000000e+00> : vector<8xf32>
    %217 = vector.multi_reduction <add>, %216, %cst_61 [1] : vector<8x32xf32> to vector<8xf32>
    %218 = vector.shape_cast %217 : vector<8xf32> to vector<8x1xf32>
    %219 = arith.mulf %216, %216 : vector<8x32xf32>
    %cst_62 = arith.constant dense<0.000000e+00> : vector<8xf32>
    %220 = vector.multi_reduction <add>, %219, %cst_62 [1] : vector<8x32xf32> to vector<8xf32>
    %221 = vector.shape_cast %220 : vector<8xf32> to vector<8x1xf32>
    %cst_63 = arith.constant 3.125000e-02 : f32
    %222 = vector.broadcast %cst_63 : f32 to vector<8x1xf32>
    %223 = arith.mulf %218, %222 : vector<8x1xf32>
    %224 = arith.mulf %223, %218 : vector<8x1xf32>
    %225 = arith.subf %221, %224 : vector<8x1xf32>
    %226 = vector.broadcast %223 : vector<8x1xf32> to vector<8x32xf32>
    %227 = arith.subf %216, %226 : vector<8x32xf32>
    %cst_64 = arith.constant 9.99999993E-9 : f32
    %228 = vector.broadcast %cst_64 : f32 to vector<8x1xf32>
    %229 = arith.addf %225, %228 : vector<8x1xf32>
    %230 = math.rsqrt %229 : vector<8x1xf32>
    %231 = vector.broadcast %230 : vector<8x1xf32> to vector<8x32xf32>
    %232 = arith.mulf %227, %231 : vector<8x32xf32>
    %233 = vector.extract_strided_slice %232 {offsets = [0, 0], sizes = [4, 32], strides = [1, 1]} : vector<8x32xf32> to vector<4x32xf32>
    %234 = vector.extract_strided_slice %216 {offsets = [0, 0], sizes = [4, 32], strides = [1, 1]} : vector<8x32xf32> to vector<4x32xf32>
    %cst_65 = arith.constant dense<0.000000e+00> : vector<4x4xf32>
    %235 = tpu.matmul %233, %233, %cst_65 {dimension_numbers = #tpu.dot_dimension_numbers<[1], [1], [0], [0], [0, 0, 1, 0], [], []>} : vector<4x32xf32>, vector<4x32xf32>, vector<4x4xf32> -> vector<4x4xf32>
    %236 = arith.truncf %235 : vector<4x4xf32> to vector<4x4xbf16>
    %237 = arith.truncf %234 : vector<4x32xf32> to vector<4x32xbf16>
    %cst_66 = arith.constant dense<0.000000e+00> : vector<4x32xf32>
    %238 = tpu.matmul %236, %237, %cst_66 {dimension_numbers = #tpu.dot_dimension_numbers<[1], [0], [0], [1], [0, 0, 1, 1], [], []>} : vector<4x4xbf16>, vector<4x32xbf16>, vector<4x32xf32> -> vector<4x32xf32>
    %239 = vector.extract_strided_slice %232 {offsets = [4, 0], sizes = [4, 32], strides = [1, 1]} : vector<8x32xf32> to vector<4x32xf32>
    %240 = vector.extract_strided_slice %216 {offsets = [4, 0], sizes = [4, 32], strides = [1, 1]} : vector<8x32xf32> to vector<4x32xf32>
    %cst_67 = arith.constant dense<0.000000e+00> : vector<4x4xf32>
    %241 = tpu.matmul %239, %239, %cst_67 {dimension_numbers = #tpu.dot_dimension_numbers<[1], [1], [0], [0], [0, 0, 1, 0], [], []>} : vector<4x32xf32>, vector<4x32xf32>, vector<4x4xf32> -> vector<4x4xf32>
    %242 = arith.truncf %241 : vector<4x4xf32> to vector<4x4xbf16>
    %243 = arith.truncf %240 : vector<4x32xf32> to vector<4x32xbf16>
    %cst_68 = arith.constant dense<0.000000e+00> : vector<4x32xf32>
    %244 = tpu.matmul %242, %243, %cst_68 {dimension_numbers = #tpu.dot_dimension_numbers<[1], [0], [0], [1], [0, 0, 1, 1], [], []>} : vector<4x4xbf16>, vector<4x32xbf16>, vector<4x32xf32> -> vector<4x32xf32>
    %245 = tpu.concatenate %238, %244 in 0 : vector<4x32xf32>, vector<4x32xf32> -> vector<8x32xf32>
    %246 = arith.truncf %245 : vector<8x32xf32> to vector<8x32xbf16>
    %cst_69 = arith.constant dense<0.000000e+00> : vector<8x32xf32>
    %247 = tpu.matmul %246, %1, %cst_69 {dimension_numbers = #tpu.dot_dimension_numbers<[1], [0], [0], [1], [0, 0, 1, 1], [], []>} : vector<8x32xbf16>, vector<32x32xbf16>, vector<8x32xf32> -> vector<8x32xf32>
    %cst_70 = arith.constant 0.000000e+00 : f32
    %248 = vector.broadcast %cst_70 : f32 to vector<8x32xf32>
    %249 = arith.maximumf %247, %248 : vector<8x32xf32>
    %250 = arith.truncf %249 : vector<8x32xf32> to vector<8x32xbf16>
    %cst_71 = arith.constant dense<0.000000e+00> : vector<8x32xf32>
    %251 = tpu.matmul %250, %2, %cst_71 {dimension_numbers = #tpu.dot_dimension_numbers<[1], [0], [0], [1], [0, 0, 1, 1], [], []>} : vector<8x32xbf16>, vector<32x32xbf16>, vector<8x32xf32> -> vector<8x32xf32>
    %cst_72 = arith.constant dense<0.000000e+00> : vector<32xf32>
    %252 = vector.multi_reduction <add>, %251, %cst_72 [0] : vector<8x32xf32> to vector<32xf32>
    %253 = vector.shape_cast %252 : vector<32xf32> to vector<1x32xf32>
    %cst_73 = arith.constant 1.250000e-01 : f32
    %254 = vector.broadcast %cst_73 : f32 to vector<1x32xf32>
    %255 = arith.mulf %253, %254 : vector<1x32xf32>
    %256 = arith.mulf %251, %251 : vector<8x32xf32>
    %cst_74 = arith.constant dense<0.000000e+00> : vector<32xf32>
    %257 = vector.multi_reduction <add>, %256, %cst_74 [0] : vector<8x32xf32> to vector<32xf32>
    %258 = vector.shape_cast %257 : vector<32xf32> to vector<1x32xf32>
    %cst_75 = arith.constant 1.250000e-01 : f32
    %259 = vector.broadcast %cst_75 : f32 to vector<1x32xf32>
    %260 = arith.mulf %258, %259 : vector<1x32xf32>
    %261 = arith.mulf %255, %255 : vector<1x32xf32>
    %262 = arith.subf %260, %261 : vector<1x32xf32>
    %263 = vector.broadcast %255 : vector<1x32xf32> to vector<8x32xf32>
    %264 = arith.subf %251, %263 : vector<8x32xf32>
    %cst_76 = arith.constant 9.99999974E-6 : f32
    %265 = vector.broadcast %cst_76 : f32 to vector<1x32xf32>
    %266 = arith.addf %262, %265 : vector<1x32xf32>
    %267 = math.rsqrt %266 : vector<1x32xf32>
    %268 = vector.broadcast %267 : vector<1x32xf32> to vector<8x32xf32>
    %269 = arith.mulf %264, %268 : vector<8x32xf32>
    %270 = vector.broadcast %4 : vector<1x32xf32> to vector<8x32xf32>
    %271 = arith.mulf %269, %270 : vector<8x32xf32>
    %272 = vector.broadcast %5 : vector<1x32xf32> to vector<8x32xf32>
    %273 = arith.addf %271, %272 : vector<8x32xf32>
    %274 = arith.addf %216, %273 : vector<8x32xf32>
    %275 = arith.truncf %274 : vector<8x32xf32> to vector<8x32xbf16>
    %cst_77 = arith.constant dense<0.000000e+00> : vector<8x96xf32>
    %276 = tpu.matmul %275, %0, %cst_77 {dimension_numbers = #tpu.dot_dimension_numbers<[1], [0], [0], [1], [0, 0, 1, 1], [], []>} : vector<8x32xbf16>, vector<32x96xbf16>, vector<8x96xf32> -> vector<8x96xf32>
    %277 = vector.extract_strided_slice %16 {offsets = [3, 0, 0], sizes = [1, 8, 64], strides = [1, 1, 1]} : vector<8x8x64xf32> to vector<1x8x64xf32>
    %278 = vector.shape_cast %277 : vector<1x8x64xf32> to vector<8x64xf32>
    %279 = vector.extract_strided_slice %276 {offsets = [0, 0], sizes = [8, 64], strides = [1, 1]} : vector<8x96xf32> to vector<8x64xf32>
    %280 = arith.addf %278, %279 : vector<8x64xf32>
    %281 = arith.negf %280 : vector<8x64xf32>
    %282 = math.exp %281 : vector<8x64xf32>
    %cst_78 = arith.constant 1.000000e+00 : f32
    %283 = vector.broadcast %cst_78 : f32 to vector<8x64xf32>
    %284 = arith.addf %283, %282 : vector<8x64xf32>
    %285 = arith.divf %283, %284 : vector<8x64xf32>
    %286 = vector.extract_strided_slice %285 {offsets = [0, 0], sizes = [8, 32], strides = [1, 1]} : vector<8x64xf32> to vector<8x32xf32>
    %287 = vector.extract_strided_slice %285 {offsets = [0, 32], sizes = [8, 32], strides = [1, 1]} : vector<8x64xf32> to vector<8x32xf32>
    %288 = vector.extract_strided_slice %21 {offsets = [3, 0, 0], sizes = [1, 8, 32], strides = [1, 1, 1]} : vector<8x8x32xf32> to vector<1x8x32xf32>
    %289 = vector.shape_cast %288 : vector<1x8x32xf32> to vector<8x32xf32>
    %290 = vector.extract_strided_slice %276 {offsets = [0, 64], sizes = [8, 32], strides = [1, 1]} : vector<8x96xf32> to vector<8x32xf32>
    %291 = vector.broadcast %3 : vector<1x32xf32> to vector<8x32xf32>
    %292 = arith.addf %290, %291 : vector<8x32xf32>
    %293 = arith.mulf %286, %292 : vector<8x32xf32>
    %294 = arith.addf %289, %293 : vector<8x32xf32>
    %295 = math.tanh %294 : vector<8x32xf32>
    %cst_79 = arith.constant 1.000000e+00 : f32
    %296 = vector.broadcast %cst_79 : f32 to vector<8x32xf32>
    %297 = arith.subf %296, %287 : vector<8x32xf32>
    %298 = arith.mulf %297, %295 : vector<8x32xf32>
    %299 = arith.mulf %287, %274 : vector<8x32xf32>
    %300 = arith.addf %298, %299 : vector<8x32xf32>
    %cst_80 = arith.constant dense<0.000000e+00> : vector<8xf32>
    %301 = vector.multi_reduction <add>, %300, %cst_80 [1] : vector<8x32xf32> to vector<8xf32>
    %302 = vector.shape_cast %301 : vector<8xf32> to vector<8x1xf32>
    %303 = arith.mulf %300, %300 : vector<8x32xf32>
    %cst_81 = arith.constant dense<0.000000e+00> : vector<8xf32>
    %304 = vector.multi_reduction <add>, %303, %cst_81 [1] : vector<8x32xf32> to vector<8xf32>
    %305 = vector.shape_cast %304 : vector<8xf32> to vector<8x1xf32>
    %cst_82 = arith.constant 3.125000e-02 : f32
    %306 = vector.broadcast %cst_82 : f32 to vector<8x1xf32>
    %307 = arith.mulf %302, %306 : vector<8x1xf32>
    %308 = arith.mulf %307, %302 : vector<8x1xf32>
    %309 = arith.subf %305, %308 : vector<8x1xf32>
    %310 = vector.broadcast %307 : vector<8x1xf32> to vector<8x32xf32>
    %311 = arith.subf %300, %310 : vector<8x32xf32>
    %cst_83 = arith.constant 9.99999993E-9 : f32
    %312 = vector.broadcast %cst_83 : f32 to vector<8x1xf32>
    %313 = arith.addf %309, %312 : vector<8x1xf32>
    %314 = math.rsqrt %313 : vector<8x1xf32>
    %315 = vector.broadcast %314 : vector<8x1xf32> to vector<8x32xf32>
    %316 = arith.mulf %311, %315 : vector<8x32xf32>
    %317 = vector.extract_strided_slice %316 {offsets = [0, 0], sizes = [4, 32], strides = [1, 1]} : vector<8x32xf32> to vector<4x32xf32>
    %318 = vector.extract_strided_slice %300 {offsets = [0, 0], sizes = [4, 32], strides = [1, 1]} : vector<8x32xf32> to vector<4x32xf32>
    %cst_84 = arith.constant dense<0.000000e+00> : vector<4x4xf32>
    %319 = tpu.matmul %317, %317, %cst_84 {dimension_numbers = #tpu.dot_dimension_numbers<[1], [1], [0], [0], [0, 0, 1, 0], [], []>} : vector<4x32xf32>, vector<4x32xf32>, vector<4x4xf32> -> vector<4x4xf32>
    %320 = arith.truncf %319 : vector<4x4xf32> to vector<4x4xbf16>
    %321 = arith.truncf %318 : vector<4x32xf32> to vector<4x32xbf16>
    %cst_85 = arith.constant dense<0.000000e+00> : vector<4x32xf32>
    %322 = tpu.matmul %320, %321, %cst_85 {dimension_numbers = #tpu.dot_dimension_numbers<[1], [0], [0], [1], [0, 0, 1, 1], [], []>} : vector<4x4xbf16>, vector<4x32xbf16>, vector<4x32xf32> -> vector<4x32xf32>
    %323 = vector.extract_strided_slice %316 {offsets = [4, 0], sizes = [4, 32], strides = [1, 1]} : vector<8x32xf32> to vector<4x32xf32>
    %324 = vector.extract_strided_slice %300 {offsets = [4, 0], sizes = [4, 32], strides = [1, 1]} : vector<8x32xf32> to vector<4x32xf32>
    %cst_86 = arith.constant dense<0.000000e+00> : vector<4x4xf32>
    %325 = tpu.matmul %323, %323, %cst_86 {dimension_numbers = #tpu.dot_dimension_numbers<[1], [1], [0], [0], [0, 0, 1, 0], [], []>} : vector<4x32xf32>, vector<4x32xf32>, vector<4x4xf32> -> vector<4x4xf32>
    %326 = arith.truncf %325 : vector<4x4xf32> to vector<4x4xbf16>
    %327 = arith.truncf %324 : vector<4x32xf32> to vector<4x32xbf16>
    %cst_87 = arith.constant dense<0.000000e+00> : vector<4x32xf32>
    %328 = tpu.matmul %326, %327, %cst_87 {dimension_numbers = #tpu.dot_dimension_numbers<[1], [0], [0], [1], [0, 0, 1, 1], [], []>} : vector<4x4xbf16>, vector<4x32xbf16>, vector<4x32xf32> -> vector<4x32xf32>
    %329 = tpu.concatenate %322, %328 in 0 : vector<4x32xf32>, vector<4x32xf32> -> vector<8x32xf32>
    %330 = arith.truncf %329 : vector<8x32xf32> to vector<8x32xbf16>
    %cst_88 = arith.constant dense<0.000000e+00> : vector<8x32xf32>
    %331 = tpu.matmul %330, %1, %cst_88 {dimension_numbers = #tpu.dot_dimension_numbers<[1], [0], [0], [1], [0, 0, 1, 1], [], []>} : vector<8x32xbf16>, vector<32x32xbf16>, vector<8x32xf32> -> vector<8x32xf32>
    %cst_89 = arith.constant 0.000000e+00 : f32
    %332 = vector.broadcast %cst_89 : f32 to vector<8x32xf32>
    %333 = arith.maximumf %331, %332 : vector<8x32xf32>
    %334 = arith.truncf %333 : vector<8x32xf32> to vector<8x32xbf16>
    %cst_90 = arith.constant dense<0.000000e+00> : vector<8x32xf32>
    %335 = tpu.matmul %334, %2, %cst_90 {dimension_numbers = #tpu.dot_dimension_numbers<[1], [0], [0], [1], [0, 0, 1, 1], [], []>} : vector<8x32xbf16>, vector<32x32xbf16>, vector<8x32xf32> -> vector<8x32xf32>
    %cst_91 = arith.constant dense<0.000000e+00> : vector<32xf32>
    %336 = vector.multi_reduction <add>, %335, %cst_91 [0] : vector<8x32xf32> to vector<32xf32>
    %337 = vector.shape_cast %336 : vector<32xf32> to vector<1x32xf32>
    %cst_92 = arith.constant 1.250000e-01 : f32
    %338 = vector.broadcast %cst_92 : f32 to vector<1x32xf32>
    %339 = arith.mulf %337, %338 : vector<1x32xf32>
    %340 = arith.mulf %335, %335 : vector<8x32xf32>
    %cst_93 = arith.constant dense<0.000000e+00> : vector<32xf32>
    %341 = vector.multi_reduction <add>, %340, %cst_93 [0] : vector<8x32xf32> to vector<32xf32>
    %342 = vector.shape_cast %341 : vector<32xf32> to vector<1x32xf32>
    %cst_94 = arith.constant 1.250000e-01 : f32
    %343 = vector.broadcast %cst_94 : f32 to vector<1x32xf32>
    %344 = arith.mulf %342, %343 : vector<1x32xf32>
    %345 = arith.mulf %339, %339 : vector<1x32xf32>
    %346 = arith.subf %344, %345 : vector<1x32xf32>
    %347 = vector.broadcast %339 : vector<1x32xf32> to vector<8x32xf32>
    %348 = arith.subf %335, %347 : vector<8x32xf32>
    %cst_95 = arith.constant 9.99999974E-6 : f32
    %349 = vector.broadcast %cst_95 : f32 to vector<1x32xf32>
    %350 = arith.addf %346, %349 : vector<1x32xf32>
    %351 = math.rsqrt %350 : vector<1x32xf32>
    %352 = vector.broadcast %351 : vector<1x32xf32> to vector<8x32xf32>
    %353 = arith.mulf %348, %352 : vector<8x32xf32>
    %354 = vector.broadcast %4 : vector<1x32xf32> to vector<8x32xf32>
    %355 = arith.mulf %353, %354 : vector<8x32xf32>
    %356 = vector.broadcast %5 : vector<1x32xf32> to vector<8x32xf32>
    %357 = arith.addf %355, %356 : vector<8x32xf32>
    %358 = arith.addf %300, %357 : vector<8x32xf32>
    %359 = arith.truncf %358 : vector<8x32xf32> to vector<8x32xbf16>
    %cst_96 = arith.constant dense<0.000000e+00> : vector<8x96xf32>
    %360 = tpu.matmul %359, %0, %cst_96 {dimension_numbers = #tpu.dot_dimension_numbers<[1], [0], [0], [1], [0, 0, 1, 1], [], []>} : vector<8x32xbf16>, vector<32x96xbf16>, vector<8x96xf32> -> vector<8x96xf32>
    %361 = vector.extract_strided_slice %16 {offsets = [4, 0, 0], sizes = [1, 8, 64], strides = [1, 1, 1]} : vector<8x8x64xf32> to vector<1x8x64xf32>
    %362 = vector.shape_cast %361 : vector<1x8x64xf32> to vector<8x64xf32>
    %363 = vector.extract_strided_slice %360 {offsets = [0, 0], sizes = [8, 64], strides = [1, 1]} : vector<8x96xf32> to vector<8x64xf32>
    %364 = arith.addf %362, %363 : vector<8x64xf32>
    %365 = arith.negf %364 : vector<8x64xf32>
    %366 = math.exp %365 : vector<8x64xf32>
    %cst_97 = arith.constant 1.000000e+00 : f32
    %367 = vector.broadcast %cst_97 : f32 to vector<8x64xf32>
    %368 = arith.addf %367, %366 : vector<8x64xf32>
    %369 = arith.divf %367, %368 : vector<8x64xf32>
    %370 = vector.extract_strided_slice %369 {offsets = [0, 0], sizes = [8, 32], strides = [1, 1]} : vector<8x64xf32> to vector<8x32xf32>
    %371 = vector.extract_strided_slice %369 {offsets = [0, 32], sizes = [8, 32], strides = [1, 1]} : vector<8x64xf32> to vector<8x32xf32>
    %372 = vector.extract_strided_slice %21 {offsets = [4, 0, 0], sizes = [1, 8, 32], strides = [1, 1, 1]} : vector<8x8x32xf32> to vector<1x8x32xf32>
    %373 = vector.shape_cast %372 : vector<1x8x32xf32> to vector<8x32xf32>
    %374 = vector.extract_strided_slice %360 {offsets = [0, 64], sizes = [8, 32], strides = [1, 1]} : vector<8x96xf32> to vector<8x32xf32>
    %375 = vector.broadcast %3 : vector<1x32xf32> to vector<8x32xf32>
    %376 = arith.addf %374, %375 : vector<8x32xf32>
    %377 = arith.mulf %370, %376 : vector<8x32xf32>
    %378 = arith.addf %373, %377 : vector<8x32xf32>
    %379 = math.tanh %378 : vector<8x32xf32>
    %cst_98 = arith.constant 1.000000e+00 : f32
    %380 = vector.broadcast %cst_98 : f32 to vector<8x32xf32>
    %381 = arith.subf %380, %371 : vector<8x32xf32>
    %382 = arith.mulf %381, %379 : vector<8x32xf32>
    %383 = arith.mulf %371, %358 : vector<8x32xf32>
    %384 = arith.addf %382, %383 : vector<8x32xf32>
    %cst_99 = arith.constant dense<0.000000e+00> : vector<8xf32>
    %385 = vector.multi_reduction <add>, %384, %cst_99 [1] : vector<8x32xf32> to vector<8xf32>
    %386 = vector.shape_cast %385 : vector<8xf32> to vector<8x1xf32>
    %387 = arith.mulf %384, %384 : vector<8x32xf32>
    %cst_100 = arith.constant dense<0.000000e+00> : vector<8xf32>
    %388 = vector.multi_reduction <add>, %387, %cst_100 [1] : vector<8x32xf32> to vector<8xf32>
    %389 = vector.shape_cast %388 : vector<8xf32> to vector<8x1xf32>
    %cst_101 = arith.constant 3.125000e-02 : f32
    %390 = vector.broadcast %cst_101 : f32 to vector<8x1xf32>
    %391 = arith.mulf %386, %390 : vector<8x1xf32>
    %392 = arith.mulf %391, %386 : vector<8x1xf32>
    %393 = arith.subf %389, %392 : vector<8x1xf32>
    %394 = vector.broadcast %391 : vector<8x1xf32> to vector<8x32xf32>
    %395 = arith.subf %384, %394 : vector<8x32xf32>
    %cst_102 = arith.constant 9.99999993E-9 : f32
    %396 = vector.broadcast %cst_102 : f32 to vector<8x1xf32>
    %397 = arith.addf %393, %396 : vector<8x1xf32>
    %398 = math.rsqrt %397 : vector<8x1xf32>
    %399 = vector.broadcast %398 : vector<8x1xf32> to vector<8x32xf32>
    %400 = arith.mulf %395, %399 : vector<8x32xf32>
    %401 = vector.extract_strided_slice %400 {offsets = [0, 0], sizes = [4, 32], strides = [1, 1]} : vector<8x32xf32> to vector<4x32xf32>
    %402 = vector.extract_strided_slice %384 {offsets = [0, 0], sizes = [4, 32], strides = [1, 1]} : vector<8x32xf32> to vector<4x32xf32>
    %cst_103 = arith.constant dense<0.000000e+00> : vector<4x4xf32>
    %403 = tpu.matmul %401, %401, %cst_103 {dimension_numbers = #tpu.dot_dimension_numbers<[1], [1], [0], [0], [0, 0, 1, 0], [], []>} : vector<4x32xf32>, vector<4x32xf32>, vector<4x4xf32> -> vector<4x4xf32>
    %404 = arith.truncf %403 : vector<4x4xf32> to vector<4x4xbf16>
    %405 = arith.truncf %402 : vector<4x32xf32> to vector<4x32xbf16>
    %cst_104 = arith.constant dense<0.000000e+00> : vector<4x32xf32>
    %406 = tpu.matmul %404, %405, %cst_104 {dimension_numbers = #tpu.dot_dimension_numbers<[1], [0], [0], [1], [0, 0, 1, 1], [], []>} : vector<4x4xbf16>, vector<4x32xbf16>, vector<4x32xf32> -> vector<4x32xf32>
    %407 = vector.extract_strided_slice %400 {offsets = [4, 0], sizes = [4, 32], strides = [1, 1]} : vector<8x32xf32> to vector<4x32xf32>
    %408 = vector.extract_strided_slice %384 {offsets = [4, 0], sizes = [4, 32], strides = [1, 1]} : vector<8x32xf32> to vector<4x32xf32>
    %cst_105 = arith.constant dense<0.000000e+00> : vector<4x4xf32>
    %409 = tpu.matmul %407, %407, %cst_105 {dimension_numbers = #tpu.dot_dimension_numbers<[1], [1], [0], [0], [0, 0, 1, 0], [], []>} : vector<4x32xf32>, vector<4x32xf32>, vector<4x4xf32> -> vector<4x4xf32>
    %410 = arith.truncf %409 : vector<4x4xf32> to vector<4x4xbf16>
    %411 = arith.truncf %408 : vector<4x32xf32> to vector<4x32xbf16>
    %cst_106 = arith.constant dense<0.000000e+00> : vector<4x32xf32>
    %412 = tpu.matmul %410, %411, %cst_106 {dimension_numbers = #tpu.dot_dimension_numbers<[1], [0], [0], [1], [0, 0, 1, 1], [], []>} : vector<4x4xbf16>, vector<4x32xbf16>, vector<4x32xf32> -> vector<4x32xf32>
    %413 = tpu.concatenate %406, %412 in 0 : vector<4x32xf32>, vector<4x32xf32> -> vector<8x32xf32>
    %414 = arith.truncf %413 : vector<8x32xf32> to vector<8x32xbf16>
    %cst_107 = arith.constant dense<0.000000e+00> : vector<8x32xf32>
    %415 = tpu.matmul %414, %1, %cst_107 {dimension_numbers = #tpu.dot_dimension_numbers<[1], [0], [0], [1], [0, 0, 1, 1], [], []>} : vector<8x32xbf16>, vector<32x32xbf16>, vector<8x32xf32> -> vector<8x32xf32>
    %cst_108 = arith.constant 0.000000e+00 : f32
    %416 = vector.broadcast %cst_108 : f32 to vector<8x32xf32>
    %417 = arith.maximumf %415, %416 : vector<8x32xf32>
    %418 = arith.truncf %417 : vector<8x32xf32> to vector<8x32xbf16>
    %cst_109 = arith.constant dense<0.000000e+00> : vector<8x32xf32>
    %419 = tpu.matmul %418, %2, %cst_109 {dimension_numbers = #tpu.dot_dimension_numbers<[1], [0], [0], [1], [0, 0, 1, 1], [], []>} : vector<8x32xbf16>, vector<32x32xbf16>, vector<8x32xf32> -> vector<8x32xf32>
    %cst_110 = arith.constant dense<0.000000e+00> : vector<32xf32>
    %420 = vector.multi_reduction <add>, %419, %cst_110 [0] : vector<8x32xf32> to vector<32xf32>
    %421 = vector.shape_cast %420 : vector<32xf32> to vector<1x32xf32>
    %cst_111 = arith.constant 1.250000e-01 : f32
    %422 = vector.broadcast %cst_111 : f32 to vector<1x32xf32>
    %423 = arith.mulf %421, %422 : vector<1x32xf32>
    %424 = arith.mulf %419, %419 : vector<8x32xf32>
    %cst_112 = arith.constant dense<0.000000e+00> : vector<32xf32>
    %425 = vector.multi_reduction <add>, %424, %cst_112 [0] : vector<8x32xf32> to vector<32xf32>
    %426 = vector.shape_cast %425 : vector<32xf32> to vector<1x32xf32>
    %cst_113 = arith.constant 1.250000e-01 : f32
    %427 = vector.broadcast %cst_113 : f32 to vector<1x32xf32>
    %428 = arith.mulf %426, %427 : vector<1x32xf32>
    %429 = arith.mulf %423, %423 : vector<1x32xf32>
    %430 = arith.subf %428, %429 : vector<1x32xf32>
    %431 = vector.broadcast %423 : vector<1x32xf32> to vector<8x32xf32>
    %432 = arith.subf %419, %431 : vector<8x32xf32>
    %cst_114 = arith.constant 9.99999974E-6 : f32
    %433 = vector.broadcast %cst_114 : f32 to vector<1x32xf32>
    %434 = arith.addf %430, %433 : vector<1x32xf32>
    %435 = math.rsqrt %434 : vector<1x32xf32>
    %436 = vector.broadcast %435 : vector<1x32xf32> to vector<8x32xf32>
    %437 = arith.mulf %432, %436 : vector<8x32xf32>
    %438 = vector.broadcast %4 : vector<1x32xf32> to vector<8x32xf32>
    %439 = arith.mulf %437, %438 : vector<8x32xf32>
    %440 = vector.broadcast %5 : vector<1x32xf32> to vector<8x32xf32>
    %441 = arith.addf %439, %440 : vector<8x32xf32>
    %442 = arith.addf %384, %441 : vector<8x32xf32>
    %443 = arith.truncf %442 : vector<8x32xf32> to vector<8x32xbf16>
    %cst_115 = arith.constant dense<0.000000e+00> : vector<8x96xf32>
    %444 = tpu.matmul %443, %0, %cst_115 {dimension_numbers = #tpu.dot_dimension_numbers<[1], [0], [0], [1], [0, 0, 1, 1], [], []>} : vector<8x32xbf16>, vector<32x96xbf16>, vector<8x96xf32> -> vector<8x96xf32>
    %445 = vector.extract_strided_slice %16 {offsets = [5, 0, 0], sizes = [1, 8, 64], strides = [1, 1, 1]} : vector<8x8x64xf32> to vector<1x8x64xf32>
    %446 = vector.shape_cast %445 : vector<1x8x64xf32> to vector<8x64xf32>
    %447 = vector.extract_strided_slice %444 {offsets = [0, 0], sizes = [8, 64], strides = [1, 1]} : vector<8x96xf32> to vector<8x64xf32>
    %448 = arith.addf %446, %447 : vector<8x64xf32>
    %449 = arith.negf %448 : vector<8x64xf32>
    %450 = math.exp %449 : vector<8x64xf32>
    %cst_116 = arith.constant 1.000000e+00 : f32
    %451 = vector.broadcast %cst_116 : f32 to vector<8x64xf32>
    %452 = arith.addf %451, %450 : vector<8x64xf32>
    %453 = arith.divf %451, %452 : vector<8x64xf32>
    %454 = vector.extract_strided_slice %453 {offsets = [0, 0], sizes = [8, 32], strides = [1, 1]} : vector<8x64xf32> to vector<8x32xf32>
    %455 = vector.extract_strided_slice %453 {offsets = [0, 32], sizes = [8, 32], strides = [1, 1]} : vector<8x64xf32> to vector<8x32xf32>
    %456 = vector.extract_strided_slice %21 {offsets = [5, 0, 0], sizes = [1, 8, 32], strides = [1, 1, 1]} : vector<8x8x32xf32> to vector<1x8x32xf32>
    %457 = vector.shape_cast %456 : vector<1x8x32xf32> to vector<8x32xf32>
    %458 = vector.extract_strided_slice %444 {offsets = [0, 64], sizes = [8, 32], strides = [1, 1]} : vector<8x96xf32> to vector<8x32xf32>
    %459 = vector.broadcast %3 : vector<1x32xf32> to vector<8x32xf32>
    %460 = arith.addf %458, %459 : vector<8x32xf32>
    %461 = arith.mulf %454, %460 : vector<8x32xf32>
    %462 = arith.addf %457, %461 : vector<8x32xf32>
    %463 = math.tanh %462 : vector<8x32xf32>
    %cst_117 = arith.constant 1.000000e+00 : f32
    %464 = vector.broadcast %cst_117 : f32 to vector<8x32xf32>
    %465 = arith.subf %464, %455 : vector<8x32xf32>
    %466 = arith.mulf %465, %463 : vector<8x32xf32>
    %467 = arith.mulf %455, %442 : vector<8x32xf32>
    %468 = arith.addf %466, %467 : vector<8x32xf32>
    %cst_118 = arith.constant dense<0.000000e+00> : vector<8xf32>
    %469 = vector.multi_reduction <add>, %468, %cst_118 [1] : vector<8x32xf32> to vector<8xf32>
    %470 = vector.shape_cast %469 : vector<8xf32> to vector<8x1xf32>
    %471 = arith.mulf %468, %468 : vector<8x32xf32>
    %cst_119 = arith.constant dense<0.000000e+00> : vector<8xf32>
    %472 = vector.multi_reduction <add>, %471, %cst_119 [1] : vector<8x32xf32> to vector<8xf32>
    %473 = vector.shape_cast %472 : vector<8xf32> to vector<8x1xf32>
    %cst_120 = arith.constant 3.125000e-02 : f32
    %474 = vector.broadcast %cst_120 : f32 to vector<8x1xf32>
    %475 = arith.mulf %470, %474 : vector<8x1xf32>
    %476 = arith.mulf %475, %470 : vector<8x1xf32>
    %477 = arith.subf %473, %476 : vector<8x1xf32>
    %478 = vector.broadcast %475 : vector<8x1xf32> to vector<8x32xf32>
    %479 = arith.subf %468, %478 : vector<8x32xf32>
    %cst_121 = arith.constant 9.99999993E-9 : f32
    %480 = vector.broadcast %cst_121 : f32 to vector<8x1xf32>
    %481 = arith.addf %477, %480 : vector<8x1xf32>
    %482 = math.rsqrt %481 : vector<8x1xf32>
    %483 = vector.broadcast %482 : vector<8x1xf32> to vector<8x32xf32>
    %484 = arith.mulf %479, %483 : vector<8x32xf32>
    %485 = vector.extract_strided_slice %484 {offsets = [0, 0], sizes = [4, 32], strides = [1, 1]} : vector<8x32xf32> to vector<4x32xf32>
    %486 = vector.extract_strided_slice %468 {offsets = [0, 0], sizes = [4, 32], strides = [1, 1]} : vector<8x32xf32> to vector<4x32xf32>
    %cst_122 = arith.constant dense<0.000000e+00> : vector<4x4xf32>
    %487 = tpu.matmul %485, %485, %cst_122 {dimension_numbers = #tpu.dot_dimension_numbers<[1], [1], [0], [0], [0, 0, 1, 0], [], []>} : vector<4x32xf32>, vector<4x32xf32>, vector<4x4xf32> -> vector<4x4xf32>
    %488 = arith.truncf %487 : vector<4x4xf32> to vector<4x4xbf16>
    %489 = arith.truncf %486 : vector<4x32xf32> to vector<4x32xbf16>
    %cst_123 = arith.constant dense<0.000000e+00> : vector<4x32xf32>
    %490 = tpu.matmul %488, %489, %cst_123 {dimension_numbers = #tpu.dot_dimension_numbers<[1], [0], [0], [1], [0, 0, 1, 1], [], []>} : vector<4x4xbf16>, vector<4x32xbf16>, vector<4x32xf32> -> vector<4x32xf32>
    %491 = vector.extract_strided_slice %484 {offsets = [4, 0], sizes = [4, 32], strides = [1, 1]} : vector<8x32xf32> to vector<4x32xf32>
    %492 = vector.extract_strided_slice %468 {offsets = [4, 0], sizes = [4, 32], strides = [1, 1]} : vector<8x32xf32> to vector<4x32xf32>
    %cst_124 = arith.constant dense<0.000000e+00> : vector<4x4xf32>
    %493 = tpu.matmul %491, %491, %cst_124 {dimension_numbers = #tpu.dot_dimension_numbers<[1], [1], [0], [0], [0, 0, 1, 0], [], []>} : vector<4x32xf32>, vector<4x32xf32>, vector<4x4xf32> -> vector<4x4xf32>
    %494 = arith.truncf %493 : vector<4x4xf32> to vector<4x4xbf16>
    %495 = arith.truncf %492 : vector<4x32xf32> to vector<4x32xbf16>
    %cst_125 = arith.constant dense<0.000000e+00> : vector<4x32xf32>
    %496 = tpu.matmul %494, %495, %cst_125 {dimension_numbers = #tpu.dot_dimension_numbers<[1], [0], [0], [1], [0, 0, 1, 1], [], []>} : vector<4x4xbf16>, vector<4x32xbf16>, vector<4x32xf32> -> vector<4x32xf32>
    %497 = tpu.concatenate %490, %496 in 0 : vector<4x32xf32>, vector<4x32xf32> -> vector<8x32xf32>
    %498 = arith.truncf %497 : vector<8x32xf32> to vector<8x32xbf16>
    %cst_126 = arith.constant dense<0.000000e+00> : vector<8x32xf32>
    %499 = tpu.matmul %498, %1, %cst_126 {dimension_numbers = #tpu.dot_dimension_numbers<[1], [0], [0], [1], [0, 0, 1, 1], [], []>} : vector<8x32xbf16>, vector<32x32xbf16>, vector<8x32xf32> -> vector<8x32xf32>
    %cst_127 = arith.constant 0.000000e+00 : f32
    %500 = vector.broadcast %cst_127 : f32 to vector<8x32xf32>
    %501 = arith.maximumf %499, %500 : vector<8x32xf32>
    %502 = arith.truncf %501 : vector<8x32xf32> to vector<8x32xbf16>
    %cst_128 = arith.constant dense<0.000000e+00> : vector<8x32xf32>
    %503 = tpu.matmul %502, %2, %cst_128 {dimension_numbers = #tpu.dot_dimension_numbers<[1], [0], [0], [1], [0, 0, 1, 1], [], []>} : vector<8x32xbf16>, vector<32x32xbf16>, vector<8x32xf32> -> vector<8x32xf32>
    %cst_129 = arith.constant dense<0.000000e+00> : vector<32xf32>
    %504 = vector.multi_reduction <add>, %503, %cst_129 [0] : vector<8x32xf32> to vector<32xf32>
    %505 = vector.shape_cast %504 : vector<32xf32> to vector<1x32xf32>
    %cst_130 = arith.constant 1.250000e-01 : f32
    %506 = vector.broadcast %cst_130 : f32 to vector<1x32xf32>
    %507 = arith.mulf %505, %506 : vector<1x32xf32>
    %508 = arith.mulf %503, %503 : vector<8x32xf32>
    %cst_131 = arith.constant dense<0.000000e+00> : vector<32xf32>
    %509 = vector.multi_reduction <add>, %508, %cst_131 [0] : vector<8x32xf32> to vector<32xf32>
    %510 = vector.shape_cast %509 : vector<32xf32> to vector<1x32xf32>
    %cst_132 = arith.constant 1.250000e-01 : f32
    %511 = vector.broadcast %cst_132 : f32 to vector<1x32xf32>
    %512 = arith.mulf %510, %511 : vector<1x32xf32>
    %513 = arith.mulf %507, %507 : vector<1x32xf32>
    %514 = arith.subf %512, %513 : vector<1x32xf32>
    %515 = vector.broadcast %507 : vector<1x32xf32> to vector<8x32xf32>
    %516 = arith.subf %503, %515 : vector<8x32xf32>
    %cst_133 = arith.constant 9.99999974E-6 : f32
    %517 = vector.broadcast %cst_133 : f32 to vector<1x32xf32>
    %518 = arith.addf %514, %517 : vector<1x32xf32>
    %519 = math.rsqrt %518 : vector<1x32xf32>
    %520 = vector.broadcast %519 : vector<1x32xf32> to vector<8x32xf32>
    %521 = arith.mulf %516, %520 : vector<8x32xf32>
    %522 = vector.broadcast %4 : vector<1x32xf32> to vector<8x32xf32>
    %523 = arith.mulf %521, %522 : vector<8x32xf32>
    %524 = vector.broadcast %5 : vector<1x32xf32> to vector<8x32xf32>
    %525 = arith.addf %523, %524 : vector<8x32xf32>
    %526 = arith.addf %468, %525 : vector<8x32xf32>
    %527 = arith.truncf %526 : vector<8x32xf32> to vector<8x32xbf16>
    %cst_134 = arith.constant dense<0.000000e+00> : vector<8x96xf32>
    %528 = tpu.matmul %527, %0, %cst_134 {dimension_numbers = #tpu.dot_dimension_numbers<[1], [0], [0], [1], [0, 0, 1, 1], [], []>} : vector<8x32xbf16>, vector<32x96xbf16>, vector<8x96xf32> -> vector<8x96xf32>
    %529 = vector.extract_strided_slice %16 {offsets = [6, 0, 0], sizes = [1, 8, 64], strides = [1, 1, 1]} : vector<8x8x64xf32> to vector<1x8x64xf32>
    %530 = vector.shape_cast %529 : vector<1x8x64xf32> to vector<8x64xf32>
    %531 = vector.extract_strided_slice %528 {offsets = [0, 0], sizes = [8, 64], strides = [1, 1]} : vector<8x96xf32> to vector<8x64xf32>
    %532 = arith.addf %530, %531 : vector<8x64xf32>
    %533 = arith.negf %532 : vector<8x64xf32>
    %534 = math.exp %533 : vector<8x64xf32>
    %cst_135 = arith.constant 1.000000e+00 : f32
    %535 = vector.broadcast %cst_135 : f32 to vector<8x64xf32>
    %536 = arith.addf %535, %534 : vector<8x64xf32>
    %537 = arith.divf %535, %536 : vector<8x64xf32>
    %538 = vector.extract_strided_slice %537 {offsets = [0, 0], sizes = [8, 32], strides = [1, 1]} : vector<8x64xf32> to vector<8x32xf32>
    %539 = vector.extract_strided_slice %537 {offsets = [0, 32], sizes = [8, 32], strides = [1, 1]} : vector<8x64xf32> to vector<8x32xf32>
    %540 = vector.extract_strided_slice %21 {offsets = [6, 0, 0], sizes = [1, 8, 32], strides = [1, 1, 1]} : vector<8x8x32xf32> to vector<1x8x32xf32>
    %541 = vector.shape_cast %540 : vector<1x8x32xf32> to vector<8x32xf32>
    %542 = vector.extract_strided_slice %528 {offsets = [0, 64], sizes = [8, 32], strides = [1, 1]} : vector<8x96xf32> to vector<8x32xf32>
    %543 = vector.broadcast %3 : vector<1x32xf32> to vector<8x32xf32>
    %544 = arith.addf %542, %543 : vector<8x32xf32>
    %545 = arith.mulf %538, %544 : vector<8x32xf32>
    %546 = arith.addf %541, %545 : vector<8x32xf32>
    %547 = math.tanh %546 : vector<8x32xf32>
    %cst_136 = arith.constant 1.000000e+00 : f32
    %548 = vector.broadcast %cst_136 : f32 to vector<8x32xf32>
    %549 = arith.subf %548, %539 : vector<8x32xf32>
    %550 = arith.mulf %549, %547 : vector<8x32xf32>
    %551 = arith.mulf %539, %526 : vector<8x32xf32>
    %552 = arith.addf %550, %551 : vector<8x32xf32>
    %cst_137 = arith.constant dense<0.000000e+00> : vector<8xf32>
    %553 = vector.multi_reduction <add>, %552, %cst_137 [1] : vector<8x32xf32> to vector<8xf32>
    %554 = vector.shape_cast %553 : vector<8xf32> to vector<8x1xf32>
    %555 = arith.mulf %552, %552 : vector<8x32xf32>
    %cst_138 = arith.constant dense<0.000000e+00> : vector<8xf32>
    %556 = vector.multi_reduction <add>, %555, %cst_138 [1] : vector<8x32xf32> to vector<8xf32>
    %557 = vector.shape_cast %556 : vector<8xf32> to vector<8x1xf32>
    %cst_139 = arith.constant 3.125000e-02 : f32
    %558 = vector.broadcast %cst_139 : f32 to vector<8x1xf32>
    %559 = arith.mulf %554, %558 : vector<8x1xf32>
    %560 = arith.mulf %559, %554 : vector<8x1xf32>
    %561 = arith.subf %557, %560 : vector<8x1xf32>
    %562 = vector.broadcast %559 : vector<8x1xf32> to vector<8x32xf32>
    %563 = arith.subf %552, %562 : vector<8x32xf32>
    %cst_140 = arith.constant 9.99999993E-9 : f32
    %564 = vector.broadcast %cst_140 : f32 to vector<8x1xf32>
    %565 = arith.addf %561, %564 : vector<8x1xf32>
    %566 = math.rsqrt %565 : vector<8x1xf32>
    %567 = vector.broadcast %566 : vector<8x1xf32> to vector<8x32xf32>
    %568 = arith.mulf %563, %567 : vector<8x32xf32>
    %569 = vector.extract_strided_slice %568 {offsets = [0, 0], sizes = [4, 32], strides = [1, 1]} : vector<8x32xf32> to vector<4x32xf32>
    %570 = vector.extract_strided_slice %552 {offsets = [0, 0], sizes = [4, 32], strides = [1, 1]} : vector<8x32xf32> to vector<4x32xf32>
    %cst_141 = arith.constant dense<0.000000e+00> : vector<4x4xf32>
    %571 = tpu.matmul %569, %569, %cst_141 {dimension_numbers = #tpu.dot_dimension_numbers<[1], [1], [0], [0], [0, 0, 1, 0], [], []>} : vector<4x32xf32>, vector<4x32xf32>, vector<4x4xf32> -> vector<4x4xf32>
    %572 = arith.truncf %571 : vector<4x4xf32> to vector<4x4xbf16>
    %573 = arith.truncf %570 : vector<4x32xf32> to vector<4x32xbf16>
    %cst_142 = arith.constant dense<0.000000e+00> : vector<4x32xf32>
    %574 = tpu.matmul %572, %573, %cst_142 {dimension_numbers = #tpu.dot_dimension_numbers<[1], [0], [0], [1], [0, 0, 1, 1], [], []>} : vector<4x4xbf16>, vector<4x32xbf16>, vector<4x32xf32> -> vector<4x32xf32>
    %575 = vector.extract_strided_slice %568 {offsets = [4, 0], sizes = [4, 32], strides = [1, 1]} : vector<8x32xf32> to vector<4x32xf32>
    %576 = vector.extract_strided_slice %552 {offsets = [4, 0], sizes = [4, 32], strides = [1, 1]} : vector<8x32xf32> to vector<4x32xf32>
    %cst_143 = arith.constant dense<0.000000e+00> : vector<4x4xf32>
    %577 = tpu.matmul %575, %575, %cst_143 {dimension_numbers = #tpu.dot_dimension_numbers<[1], [1], [0], [0], [0, 0, 1, 0], [], []>} : vector<4x32xf32>, vector<4x32xf32>, vector<4x4xf32> -> vector<4x4xf32>
    %578 = arith.truncf %577 : vector<4x4xf32> to vector<4x4xbf16>
    %579 = arith.truncf %576 : vector<4x32xf32> to vector<4x32xbf16>
    %cst_144 = arith.constant dense<0.000000e+00> : vector<4x32xf32>
    %580 = tpu.matmul %578, %579, %cst_144 {dimension_numbers = #tpu.dot_dimension_numbers<[1], [0], [0], [1], [0, 0, 1, 1], [], []>} : vector<4x4xbf16>, vector<4x32xbf16>, vector<4x32xf32> -> vector<4x32xf32>
    %581 = tpu.concatenate %574, %580 in 0 : vector<4x32xf32>, vector<4x32xf32> -> vector<8x32xf32>
    %582 = arith.truncf %581 : vector<8x32xf32> to vector<8x32xbf16>
    %cst_145 = arith.constant dense<0.000000e+00> : vector<8x32xf32>
    %583 = tpu.matmul %582, %1, %cst_145 {dimension_numbers = #tpu.dot_dimension_numbers<[1], [0], [0], [1], [0, 0, 1, 1], [], []>} : vector<8x32xbf16>, vector<32x32xbf16>, vector<8x32xf32> -> vector<8x32xf32>
    %cst_146 = arith.constant 0.000000e+00 : f32
    %584 = vector.broadcast %cst_146 : f32 to vector<8x32xf32>
    %585 = arith.maximumf %583, %584 : vector<8x32xf32>
    %586 = arith.truncf %585 : vector<8x32xf32> to vector<8x32xbf16>
    %cst_147 = arith.constant dense<0.000000e+00> : vector<8x32xf32>
    %587 = tpu.matmul %586, %2, %cst_147 {dimension_numbers = #tpu.dot_dimension_numbers<[1], [0], [0], [1], [0, 0, 1, 1], [], []>} : vector<8x32xbf16>, vector<32x32xbf16>, vector<8x32xf32> -> vector<8x32xf32>
    %cst_148 = arith.constant dense<0.000000e+00> : vector<32xf32>
    %588 = vector.multi_reduction <add>, %587, %cst_148 [0] : vector<8x32xf32> to vector<32xf32>
    %589 = vector.shape_cast %588 : vector<32xf32> to vector<1x32xf32>
    %cst_149 = arith.constant 1.250000e-01 : f32
    %590 = vector.broadcast %cst_149 : f32 to vector<1x32xf32>
    %591 = arith.mulf %589, %590 : vector<1x32xf32>
    %592 = arith.mulf %587, %587 : vector<8x32xf32>
    %cst_150 = arith.constant dense<0.000000e+00> : vector<32xf32>
    %593 = vector.multi_reduction <add>, %592, %cst_150 [0] : vector<8x32xf32> to vector<32xf32>
    %594 = vector.shape_cast %593 : vector<32xf32> to vector<1x32xf32>
    %cst_151 = arith.constant 1.250000e-01 : f32
    %595 = vector.broadcast %cst_151 : f32 to vector<1x32xf32>
    %596 = arith.mulf %594, %595 : vector<1x32xf32>
    %597 = arith.mulf %591, %591 : vector<1x32xf32>
    %598 = arith.subf %596, %597 : vector<1x32xf32>
    %599 = vector.broadcast %591 : vector<1x32xf32> to vector<8x32xf32>
    %600 = arith.subf %587, %599 : vector<8x32xf32>
    %cst_152 = arith.constant 9.99999974E-6 : f32
    %601 = vector.broadcast %cst_152 : f32 to vector<1x32xf32>
    %602 = arith.addf %598, %601 : vector<1x32xf32>
    %603 = math.rsqrt %602 : vector<1x32xf32>
    %604 = vector.broadcast %603 : vector<1x32xf32> to vector<8x32xf32>
    %605 = arith.mulf %600, %604 : vector<8x32xf32>
    %606 = vector.broadcast %4 : vector<1x32xf32> to vector<8x32xf32>
    %607 = arith.mulf %605, %606 : vector<8x32xf32>
    %608 = vector.broadcast %5 : vector<1x32xf32> to vector<8x32xf32>
    %609 = arith.addf %607, %608 : vector<8x32xf32>
    %610 = arith.addf %552, %609 : vector<8x32xf32>
    %611 = arith.truncf %610 : vector<8x32xf32> to vector<8x32xbf16>
    %cst_153 = arith.constant dense<0.000000e+00> : vector<8x96xf32>
    %612 = tpu.matmul %611, %0, %cst_153 {dimension_numbers = #tpu.dot_dimension_numbers<[1], [0], [0], [1], [0, 0, 1, 1], [], []>} : vector<8x32xbf16>, vector<32x96xbf16>, vector<8x96xf32> -> vector<8x96xf32>
    %613 = vector.extract_strided_slice %16 {offsets = [7, 0, 0], sizes = [1, 8, 64], strides = [1, 1, 1]} : vector<8x8x64xf32> to vector<1x8x64xf32>
    %614 = vector.shape_cast %613 : vector<1x8x64xf32> to vector<8x64xf32>
    %615 = vector.extract_strided_slice %612 {offsets = [0, 0], sizes = [8, 64], strides = [1, 1]} : vector<8x96xf32> to vector<8x64xf32>
    %616 = arith.addf %614, %615 : vector<8x64xf32>
    %617 = arith.negf %616 : vector<8x64xf32>
    %618 = math.exp %617 : vector<8x64xf32>
    %cst_154 = arith.constant 1.000000e+00 : f32
    %619 = vector.broadcast %cst_154 : f32 to vector<8x64xf32>
    %620 = arith.addf %619, %618 : vector<8x64xf32>
    %621 = arith.divf %619, %620 : vector<8x64xf32>
    %622 = vector.extract_strided_slice %621 {offsets = [0, 0], sizes = [8, 32], strides = [1, 1]} : vector<8x64xf32> to vector<8x32xf32>
    %623 = vector.extract_strided_slice %621 {offsets = [0, 32], sizes = [8, 32], strides = [1, 1]} : vector<8x64xf32> to vector<8x32xf32>
    %624 = vector.extract_strided_slice %21 {offsets = [7, 0, 0], sizes = [1, 8, 32], strides = [1, 1, 1]} : vector<8x8x32xf32> to vector<1x8x32xf32>
    %625 = vector.shape_cast %624 : vector<1x8x32xf32> to vector<8x32xf32>
    %626 = vector.extract_strided_slice %612 {offsets = [0, 64], sizes = [8, 32], strides = [1, 1]} : vector<8x96xf32> to vector<8x32xf32>
    %627 = vector.broadcast %3 : vector<1x32xf32> to vector<8x32xf32>
    %628 = arith.addf %626, %627 : vector<8x32xf32>
    %629 = arith.mulf %622, %628 : vector<8x32xf32>
    %630 = arith.addf %625, %629 : vector<8x32xf32>
    %631 = math.tanh %630 : vector<8x32xf32>
    %cst_155 = arith.constant 1.000000e+00 : f32
    %632 = vector.broadcast %cst_155 : f32 to vector<8x32xf32>
    %633 = arith.subf %632, %623 : vector<8x32xf32>
    %634 = arith.mulf %633, %631 : vector<8x32xf32>
    %635 = arith.mulf %623, %610 : vector<8x32xf32>
    %636 = arith.addf %634, %635 : vector<8x32xf32>
    %cst_156 = arith.constant dense<0.000000e+00> : vector<8xf32>
    %637 = vector.multi_reduction <add>, %636, %cst_156 [1] : vector<8x32xf32> to vector<8xf32>
    %638 = vector.shape_cast %637 : vector<8xf32> to vector<8x1xf32>
    %639 = arith.mulf %636, %636 : vector<8x32xf32>
    %cst_157 = arith.constant dense<0.000000e+00> : vector<8xf32>
    %640 = vector.multi_reduction <add>, %639, %cst_157 [1] : vector<8x32xf32> to vector<8xf32>
    %641 = vector.shape_cast %640 : vector<8xf32> to vector<8x1xf32>
    %cst_158 = arith.constant 3.125000e-02 : f32
    %642 = vector.broadcast %cst_158 : f32 to vector<8x1xf32>
    %643 = arith.mulf %638, %642 : vector<8x1xf32>
    %644 = arith.mulf %643, %638 : vector<8x1xf32>
    %645 = arith.subf %641, %644 : vector<8x1xf32>
    %646 = vector.broadcast %643 : vector<8x1xf32> to vector<8x32xf32>
    %647 = arith.subf %636, %646 : vector<8x32xf32>
    %cst_159 = arith.constant 9.99999993E-9 : f32
    %648 = vector.broadcast %cst_159 : f32 to vector<8x1xf32>
    %649 = arith.addf %645, %648 : vector<8x1xf32>
    %650 = math.rsqrt %649 : vector<8x1xf32>
    %651 = vector.broadcast %650 : vector<8x1xf32> to vector<8x32xf32>
    %652 = arith.mulf %647, %651 : vector<8x32xf32>
    %653 = vector.extract_strided_slice %652 {offsets = [0, 0], sizes = [4, 32], strides = [1, 1]} : vector<8x32xf32> to vector<4x32xf32>
    %654 = vector.extract_strided_slice %636 {offsets = [0, 0], sizes = [4, 32], strides = [1, 1]} : vector<8x32xf32> to vector<4x32xf32>
    %cst_160 = arith.constant dense<0.000000e+00> : vector<4x4xf32>
    %655 = tpu.matmul %653, %653, %cst_160 {dimension_numbers = #tpu.dot_dimension_numbers<[1], [1], [0], [0], [0, 0, 1, 0], [], []>} : vector<4x32xf32>, vector<4x32xf32>, vector<4x4xf32> -> vector<4x4xf32>
    %656 = arith.truncf %655 : vector<4x4xf32> to vector<4x4xbf16>
    %657 = arith.truncf %654 : vector<4x32xf32> to vector<4x32xbf16>
    %cst_161 = arith.constant dense<0.000000e+00> : vector<4x32xf32>
    %658 = tpu.matmul %656, %657, %cst_161 {dimension_numbers = #tpu.dot_dimension_numbers<[1], [0], [0], [1], [0, 0, 1, 1], [], []>} : vector<4x4xbf16>, vector<4x32xbf16>, vector<4x32xf32> -> vector<4x32xf32>
    %659 = vector.extract_strided_slice %652 {offsets = [4, 0], sizes = [4, 32], strides = [1, 1]} : vector<8x32xf32> to vector<4x32xf32>
    %660 = vector.extract_strided_slice %636 {offsets = [4, 0], sizes = [4, 32], strides = [1, 1]} : vector<8x32xf32> to vector<4x32xf32>
    %cst_162 = arith.constant dense<0.000000e+00> : vector<4x4xf32>
    %661 = tpu.matmul %659, %659, %cst_162 {dimension_numbers = #tpu.dot_dimension_numbers<[1], [1], [0], [0], [0, 0, 1, 0], [], []>} : vector<4x32xf32>, vector<4x32xf32>, vector<4x4xf32> -> vector<4x4xf32>
    %662 = arith.truncf %661 : vector<4x4xf32> to vector<4x4xbf16>
    %663 = arith.truncf %660 : vector<4x32xf32> to vector<4x32xbf16>
    %cst_163 = arith.constant dense<0.000000e+00> : vector<4x32xf32>
    %664 = tpu.matmul %662, %663, %cst_163 {dimension_numbers = #tpu.dot_dimension_numbers<[1], [0], [0], [1], [0, 0, 1, 1], [], []>} : vector<4x4xbf16>, vector<4x32xbf16>, vector<4x32xf32> -> vector<4x32xf32>
    %665 = tpu.concatenate %658, %664 in 0 : vector<4x32xf32>, vector<4x32xf32> -> vector<8x32xf32>
    %666 = arith.truncf %665 : vector<8x32xf32> to vector<8x32xbf16>
    %cst_164 = arith.constant dense<0.000000e+00> : vector<8x32xf32>
    %667 = tpu.matmul %666, %1, %cst_164 {dimension_numbers = #tpu.dot_dimension_numbers<[1], [0], [0], [1], [0, 0, 1, 1], [], []>} : vector<8x32xbf16>, vector<32x32xbf16>, vector<8x32xf32> -> vector<8x32xf32>
    %cst_165 = arith.constant 0.000000e+00 : f32
    %668 = vector.broadcast %cst_165 : f32 to vector<8x32xf32>
    %669 = arith.maximumf %667, %668 : vector<8x32xf32>
    %670 = arith.truncf %669 : vector<8x32xf32> to vector<8x32xbf16>
    %cst_166 = arith.constant dense<0.000000e+00> : vector<8x32xf32>
    %671 = tpu.matmul %670, %2, %cst_166 {dimension_numbers = #tpu.dot_dimension_numbers<[1], [0], [0], [1], [0, 0, 1, 1], [], []>} : vector<8x32xbf16>, vector<32x32xbf16>, vector<8x32xf32> -> vector<8x32xf32>
    %cst_167 = arith.constant dense<0.000000e+00> : vector<32xf32>
    %672 = vector.multi_reduction <add>, %671, %cst_167 [0] : vector<8x32xf32> to vector<32xf32>
    %673 = vector.shape_cast %672 : vector<32xf32> to vector<1x32xf32>
    %cst_168 = arith.constant 1.250000e-01 : f32
    %674 = vector.broadcast %cst_168 : f32 to vector<1x32xf32>
    %675 = arith.mulf %673, %674 : vector<1x32xf32>
    %676 = arith.mulf %671, %671 : vector<8x32xf32>
    %cst_169 = arith.constant dense<0.000000e+00> : vector<32xf32>
    %677 = vector.multi_reduction <add>, %676, %cst_169 [0] : vector<8x32xf32> to vector<32xf32>
    %678 = vector.shape_cast %677 : vector<32xf32> to vector<1x32xf32>
    %cst_170 = arith.constant 1.250000e-01 : f32
    %679 = vector.broadcast %cst_170 : f32 to vector<1x32xf32>
    %680 = arith.mulf %678, %679 : vector<1x32xf32>
    %681 = arith.mulf %675, %675 : vector<1x32xf32>
    %682 = arith.subf %680, %681 : vector<1x32xf32>
    %683 = vector.broadcast %675 : vector<1x32xf32> to vector<8x32xf32>
    %684 = arith.subf %671, %683 : vector<8x32xf32>
    %cst_171 = arith.constant 9.99999974E-6 : f32
    %685 = vector.broadcast %cst_171 : f32 to vector<1x32xf32>
    %686 = arith.addf %682, %685 : vector<1x32xf32>
    %687 = math.rsqrt %686 : vector<1x32xf32>
    %688 = vector.broadcast %687 : vector<1x32xf32> to vector<8x32xf32>
    %689 = arith.mulf %684, %688 : vector<8x32xf32>
    %690 = vector.broadcast %4 : vector<1x32xf32> to vector<8x32xf32>
    %691 = arith.mulf %689, %690 : vector<8x32xf32>
    %692 = vector.broadcast %5 : vector<1x32xf32> to vector<8x32xf32>
    %693 = arith.addf %691, %692 : vector<8x32xf32>
    %694 = arith.addf %636, %693 : vector<8x32xf32>
    %c0_172 = arith.constant 0 : index
    %c0_173 = arith.constant 0 : index
    %695 = vector.load %arg10[%c0_172, %c0_173] : memref<8x32xf32, #tpu.memory_space<vmem>>, vector<8x32xf32>
    tpu.vector_store %arg10[%c0_172, %c0_173], %694 {strides = array<i32>} : memref<8x32xf32, #tpu.memory_space<vmem>>, vector<8x32xf32>,
    return
  }
}

</mosaic_0001>

<llo_original>
// kernel: tpu_custom_call.1
$region0: #{tpu_custom_call.1}
  #allocation0 [shape = 'u32[]', space=smem, size = 0x4, offset = 0x4, fixed_abs, tag = 'smem constant byte address 0x4 - core index']
  #allocation1 [shape = 'u32[144,128]{1,0:T(1,128)}', space=vmem, size = 0x12000, scoped, tag = 'internal scratch']
  %s0 = inlined_call_operand.vmem [shape: f32[8,8,1], index: 0, kind: input, shape index: {}]
  %s1 = inlined_call_operand.vmem [shape: f32[1,96], index: 1, kind: input, shape index: {}]
  %s2 = inlined_call_operand.vmem [shape: bf16[32,96], index: 2, kind: input, shape index: {}]
  %s3 = inlined_call_operand.vmem [shape: f32[1,64], index: 3, kind: input, shape index: {}]
  %s4 = inlined_call_operand.vmem [shape: f32[1,32], index: 4, kind: input, shape index: {}]
  %s5 = inlined_call_operand.vmem [shape: f32[1,32], index: 5, kind: input, shape index: {}]
  %s6 = inlined_call_operand.vmem [shape: bf16[32,32], index: 6, kind: input, shape index: {}]
  %s7 = inlined_call_operand.vmem [shape: bf16[32,32], index: 7, kind: input, shape index: {}]
  %s8 = inlined_call_operand.vmem [shape: f32[1,32], index: 8, kind: input, shape index: {}]
  %s9 = inlined_call_operand.vmem [shape: f32[1,32], index: 9, kind: input, shape index: {}]
  %s10 = inlined_call_operand.hbm [shape: f32[8,32], index: 10, kind: output, shape index: {}]
  %s11 = sld [smem:[#allocation0]]
  $region50: #{tpu_custom_call.1} parent=0
    _
  %s13 = ssub.s32 1, %s11
  %s14 = scalar_select 0, %s13, %s11
  $region1: #{tpu_custom_call.1} parent=0
    #allocation2 [shape = 'u8[4096]{0}', space=vmem, size = 0x1000, scoped, tag = 'output window, operand 0, single buffered']
    #allocation3 [shape = 's32[1]{0}', space=sflag, size = 0x4, scoped, tag = 'scoped memory for tpu_custom_call.1']
    %15 = vsyncpa [#allocation3], 0
    // Predicated region
    $region2: #{tpu_custom_call.1} parent=1 // pred_check
      _
    $region3: #{tpu_custom_call.1} parent=1 // pred_check_branch
      %17 = sbr.rel (0) target = $region5
    $region4: #{tpu_custom_call.1} parent=1 // pred_region
      _
    $region5: #{tpu_custom_call.1} parent=1 // pred_fallthru
      _
    // Predicated region
    $region6: #{tpu_custom_call.1} parent=1 // pred_check
      _
    $region7: #{tpu_custom_call.1} parent=1 // pred_check_branch
      %19 = sbr.rel (0) target = $region9
    $region8: #{tpu_custom_call.1} parent=1 // pred_region
      _
    $region9: #{tpu_custom_call.1} parent=1 // pred_fallthru
      _
    // Predicated region
    $region10: #{tpu_custom_call.1} parent=1 // pred_check
      _
    $region11: #{tpu_custom_call.1} parent=1 // pred_check_branch
      %21 = sbr.rel (0) target = $region13
    $region12: #{tpu_custom_call.1} parent=1 // pred_region
      _
    $region13: #{tpu_custom_call.1} parent=1 // pred_fallthru
      _
    // Predicated region
    $region14: #{tpu_custom_call.1} parent=1 // pred_check
      _
    $region15: #{tpu_custom_call.1} parent=1 // pred_check_branch
      %23 = sbr.rel (0) target = $region17
    $region16: #{tpu_custom_call.1} parent=1 // pred_region
      _
    $region17: #{tpu_custom_call.1} parent=1 // pred_fallthru
      _
    // Predicated region
    $region18: #{tpu_custom_call.1} parent=1 // pred_check
      _
    $region19: #{tpu_custom_call.1} parent=1 // pred_check_branch
      %25 = sbr.rel (0) target = $region21
    $region20: #{tpu_custom_call.1} parent=1 // pred_region
      _
    $region21: #{tpu_custom_call.1} parent=1 // pred_fallthru
      _
    // Predicated region
    $region22: #{tpu_custom_call.1} parent=1 // pred_check
      _
    $region23: #{tpu_custom_call.1} parent=1 // pred_check_branch
      %27 = sbr.rel (0) target = $region25
    $region24: #{tpu_custom_call.1} parent=1 // pred_region
      _
    $region25: #{tpu_custom_call.1} parent=1 // pred_fallthru
      _
    // Predicated region
    $region26: #{tpu_custom_call.1} parent=1 // pred_check
      _
    $region27: #{tpu_custom_call.1} parent=1 // pred_check_branch
      %29 = sbr.rel (0) target = $region29
    $region28: #{tpu_custom_call.1} parent=1 // pred_region
      _
    $region29: #{tpu_custom_call.1} parent=1 // pred_fallthru
      _
    // Predicated region
    $region30: #{tpu_custom_call.1} parent=1 // pred_check
      _
    $region31: #{tpu_custom_call.1} parent=1 // pred_check_branch
      %31 = sbr.rel (0) target = $region33
    $region32: #{tpu_custom_call.1} parent=1 // pred_region
      _
    $region33: #{tpu_custom_call.1} parent=1 // pred_fallthru
      _
    // Predicated region
    $region34: #{tpu_custom_call.1} parent=1 // pred_check
      _
    $region35: #{tpu_custom_call.1} parent=1 // pred_check_branch
      %33 = sbr.rel (0) target = $region37
    $region36: #{tpu_custom_call.1} parent=1 // pred_region
      _
    $region37: #{tpu_custom_call.1} parent=1 // pred_fallthru
      _
    // Predicated region
    $region38: #{tpu_custom_call.1} parent=1 // pred_check
      _
    $region39: #{tpu_custom_call.1} parent=1 // pred_check_branch
      %35 = sbr.rel (0) target = $region41
    $region40: #{tpu_custom_call.1} parent=1 // pred_region
      _
    $region41: #{tpu_custom_call.1} parent=1 // pred_fallthru
      _
    %v37 = vld [vmem:[%s2] sm:$0xf]
    %v38 = vld [vmem:[%s2 + $0x4] sm:$0xf]
    %v39 = vld [vmem:[%s2 + $0x8] sm:$0xf]
    %v40 = vld [vmem:[%s2 + $0xc] sm:$0xf]
    %v41 = vld [vmem:[%s6] sm:$0xf]
    %v42 = vld [vmem:[%s6 + $0x4] sm:$0xf]
    %v43 = vld [vmem:[%s6 + $0x8] sm:$0xf]
    %v44 = vld [vmem:[%s6 + $0xc] sm:$0xf]
    %v45 = vld [vmem:[%s7] sm:$0xf]
    %v46 = vld [vmem:[%s7 + $0x4] sm:$0xf]
    %v47 = vld [vmem:[%s7 + $0x8] sm:$0xf]
    %v48 = vld [vmem:[%s7 + $0xc] sm:$0xf]
    %v49 = vld [vmem:[%s5] sm:$0x1]
    %v50 = vld [vmem:[%s8] sm:$0x1]
    %v51 = vld [vmem:[%s9] sm:$0x1]
    %v52 = vld [vmem:[%s0] sm:$0xff]
    %v53 = vld [vmem:[%s0 + $0x8] sm:$0xff]
    %v54 = vld [vmem:[%s0 + $0x10] sm:$0xff]
    %v55 = vld [vmem:[%s0 + $0x18] sm:$0xff]
    %v56 = vld [vmem:[%s0 + $0x20] sm:$0xff]
    %v57 = vld [vmem:[%s0 + $0x28] sm:$0xff]
    %v58 = vld [vmem:[%s0 + $0x30] sm:$0xff]
    %v59 = vld [vmem:[%s0 + $0x38] sm:$0xff]
    %v60 = vld [vmem:[%s1] sm:$0x1]
    %62 = vset.pattern.permute.xlu0 0
    %63 = vperm.xlu0 %62, %v52
    %v64 = vpop.permute.xlu0 %63
    %67 = vset.pattern.permute.xlu0 0
    %68 = vperm.xlu0 %67, %v53
    %v69 = vpop.permute.xlu0 %68
    %72 = vset.pattern.permute.xlu0 0
    %73 = vperm.xlu0 %72, %v54
    %v74 = vpop.permute.xlu0 %73
    %77 = vset.pattern.permute.xlu0 0
    %78 = vperm.xlu0 %77, %v55
    %v79 = vpop.permute.xlu0 %78
    %82 = vset.pattern.permute.xlu0 0
    %83 = vperm.xlu0 %82, %v56
    %v84 = vpop.permute.xlu0 %83
    %87 = vset.pattern.permute.xlu0 0
    %88 = vperm.xlu0 %87, %v57
    %v89 = vpop.permute.xlu0 %88
    %92 = vset.pattern.permute.xlu0 0
    %93 = vperm.xlu0 %92, %v58
    %v94 = vpop.permute.xlu0 %93
    %97 = vset.pattern.permute.xlu0 0
    %98 = vperm.xlu0 %97, %v59
    %v99 = vpop.permute.xlu0 %98
    %v102 = vlaneseq
    %v103 = vshrl.u32 %v102, 7
    %v104 = vsub.s32 0, %v103
    %v105 = vrot.slane %v60, %v104
    %v107 = vmul.f32 %v64, %v105
    %v108 = vmul.f32 %v69, %v105
    %v109 = vmul.f32 %v74, %v105
    %v110 = vmul.f32 %v79, %v105
    %v111 = vmul.f32 %v84, %v105
    %v112 = vmul.f32 %v89, %v105
    %v113 = vmul.f32 %v94, %v105
    %v114 = vmul.f32 %v99, %v105
    %v115 = vld [vmem:[%s3] sm:$0x1]
    %v117 = vlaneseq
    %v118 = vshrl.u32 %v117, 7
    %v119 = vsub.s32 0, %v118
    %v120 = vrot.slane %v115, %v119
    %v122 = vadd.f32 %v107, %v120
    %v123 = vadd.f32 %v108, %v120
    %v124 = vadd.f32 %v109, %v120
    %v125 = vadd.f32 %v110, %v120
    %v126 = vadd.f32 %v111, %v120
    %v127 = vadd.f32 %v112, %v120
    %v128 = vadd.f32 %v113, %v120
    %v129 = vadd.f32 %v114, %v120
    %v130 = vld [vmem:[%s4] sm:$0x1]
    %v132 = vlaneseq
    %v133 = vshrl.u32 %v132, 7
    %v134 = vsub.s32 0, %v133
    %v135 = vrot.slane %v130, %v134
    %136 = vrot.lane.b32.xlu0 %v135, 64
    %v137 = vpop.permute.xlu0 %136
    %v139 = vadd.f32 %v107, %v137
    %v140 = vadd.f32 %v108, %v137
    %v141 = vadd.f32 %v109, %v137
    %v142 = vadd.f32 %v110, %v137
    %v143 = vadd.f32 %v111, %v137
    %v144 = vadd.f32 %v112, %v137
    %v145 = vadd.f32 %v113, %v137
    %v146 = vadd.f32 %v114, %v137
    %v151 = vunpack.c.l.b16 %v37
    %v152 = vunpack.c.l.b16 %v38
    %v153 = vunpack.c.l.b16 %v39
    %v154 = vunpack.c.l.b16 %v40
    %v155 = vpack.c.b16 %v152, %v151
    %v156 = vpack.c.b16 %v154, %v153
    %vm159 = vcmask 261120
    %v161 = vsel %vm159, 0, 0
    %163 = vmatprep.subr.bf16.mxu0 0
    %164 = vmatpush1.bf16.msra.mxu0 0
    %165 = vmatprep.subr.bf16.mxu0 0
    %166 = vmatpush1.bf16.msra.mxu0 0
    %167 = vmatprep.subr.bf16.mxu0 0
    %168 = vmatpush1.bf16.msra.mxu0 0
    %169 = vmatprep.subr.bf16.mxu0 0
    %170 = vmatpush1.bf16.msra.mxu0 0
    %171 = vmatprep.subr.bf16.mxu0 0
    %172 = vmatpush1.bf16.msra.mxu0 0
    %173 = vmatprep.subr.bf16.mxu0 0
    %174 = vmatpush1.bf16.msra.mxu0 0
    %175 = vmatprep.subr.bf16.mxu0 0
    %176 = vmatpush1.bf16.msra.mxu0 %v156
    %177 = vmatprep.subr.bf16.mxu0 0
    %178 = vmatpush1.bf16.msra.mxu0 %v155
    %179 = vmatprep.subr.bf16.mxu0 0
    %180 = vmatpush2.bf16.msra.mxu0 0
    %181 = vmatprep.subr.bf16.mxu0 0
    %182 = vmatpush2.bf16.msra.mxu0 0
    %183 = vmatprep.subr.bf16.mxu0 0
    %184 = vmatpush2.bf16.msra.mxu0 0
    %185 = vmatprep.subr.bf16.mxu0 0
    %186 = vmatpush2.bf16.msra.mxu0 0
    %187 = vmatprep.subr.bf16.mxu0 0
    %188 = vmatpush2.bf16.msra.mxu0 0
    %189 = vmatprep.subr.bf16.mxu0 0
    %190 = vmatpush2.bf16.msra.mxu0 0
    %191 = vmatprep.subr.bf16.mxu0 0
    %192 = vmatpush2.bf16.msra.mxu0 0
    %193 = vmatprep.subr.bf16.mxu0 0
    %194 = vmatpush2.bf16.msra.mxu0 0
    %195 = vmatprep.mubr.bf16.mxu0 0
    %196 = vmatmul.mubr.bf16.gmra.mxu0 %v161
    %v197 = vpop.f32.mrf.mxu0
    %v198 = vadd.f32 0.0, %v197
    %v199 = vpop.f32.mrf.mxu0
    %v200 = vpop.f32.mrf.mxu0
    %v201 = vpop.f32.mrf.mxu0
    %202 = vdwg.mxu0
    %v203 = vadd.f32 %v122, %v198
    %v204 = vxor.u32 %v203, 2147483648
    %v205 = vmul.f32 %v204, 1.442695
    %v206 = vpow.pop %v205
    %v207 = vadd.f32 %v206, 1.0
    %v208 = vrcp.pop %v207
    %v209 = vmul.f32 1.0, %v208
    %v211 = vlaneseq
    %v212 = vshrl.u32 %v211, 7
    %v213 = vsub.s32 0, %v212
    %v214 = vrot.slane %v49, %v213
    %215 = vrot.lane.b32.xlu0 %v214, 64
    %v216 = vpop.permute.xlu0 %215
    %v218 = vadd.f32 %v198, %v216
    %220 = vrot.lane.b32.xlu0 %v218, 64
    %v221 = vpop.permute.xlu0 %220
    %v223 = vmul.f32 %v209, %v221
    %225 = vrot.lane.b32.xlu0 %v223, 64
    %v226 = vpop.permute.xlu0 %225
    %v228 = vadd.f32 %v139, %v226
    %v229 = vtanh.pop %v228
    %v230 = vsub.f32 1.0, %v209
    %232 = vrot.lane.b32.xlu0 %v229, 96
    %v233 = vpop.permute.xlu0 %232
    %v235 = vmul.f32 %v230, %v233
    %v236 = vmul.f32 %v209, 0.0
    %v237 = vadd.f32 %v235, %v236
    %239 = vrot.lane.b32.xlu0 %v237, 96
    %v240 = vpop.permute.xlu0 %239
    %v242 = vsel %vm159, %v240, 0.0
    %243 = vadd.xlane.f32.xlu0 %v242
    %v244 = vpop.xlane.xlu0 %243
    %v245 = vmul.f32 %v237, %v237
    %247 = vrot.lane.b32.xlu0 %v245, 96
    %v248 = vpop.permute.xlu0 %247
    %v250 = vsel %vm159, %v248, 0.0
    %251 = vadd.xlane.f32.xlu0 %v250
    %v252 = vpop.xlane.xlu0 %251
    %v253 = vmul.f32 %v244, 0.03125
    %v254 = vmul.f32 %v253, %v244
    %v255 = vsub.f32 %v252, %v254
    %v256 = vsub.f32 %v237, %v253
    %v257 = vadd.f32 %v255, 1e-08
    %v258 = vrsqrt.pop %v257
    %v259 = vmul.f32 %v256, %v258
    %261 = vrot.lane.b32.xlu0 %v259, 96
    %v262 = vpop.permute.xlu0 %261
    %v263 = vsel %vm159, %v262, 0
    %265 = vmatprep.subr.mxu0 0.0
    %266 = vmatpush1.xpose.msra.mxu0 0.0
    %267 = vmatprep.subr.mxu0 0.0
    %268 = vmatpush1.xpose.msra.mxu0 0.0
    %269 = vmatprep.subr.mxu0 0.0
    %270 = vmatpush1.xpose.msra.mxu0 0.0
    %271 = vmatprep.subr.mxu0 0.0
    %272 = vmatpush1.xpose.msra.mxu0 0.0
    %273 = vmatprep.subr.mxu0 0.0
    %274 = vmatpush1.xpose.msra.mxu0 0.0
    %275 = vmatprep.subr.mxu0 0.0
    %276 = vmatpush1.xpose.msra.mxu0 0.0
    %277 = vmatprep.subr.mxu0 0.0
    %278 = vmatpush1.xpose.msra.mxu0 0.0
    %279 = vmatprep.subr.mxu0 0.0
    %280 = vmatpush1.xpose.msra.mxu0 0.0
    %281 = vmatprep.subr.mxu0 0.0
    %282 = vmatpush1.xpose.msra.mxu0 0.0
    %283 = vmatprep.subr.mxu0 0.0
    %284 = vmatpush1.xpose.msra.mxu0 0.0
    %285 = vmatprep.subr.mxu0 0.0
    %286 = vmatpush1.xpose.msra.mxu0 0.0
    %287 = vmatprep.subr.mxu0 0.0
    %288 = vmatpush1.xpose.msra.mxu0 0.0
    %289 = vmatprep.subr.mxu0 0.0
    %290 = vmatpush1.xpose.msra.mxu0 0.0
    %291 = vmatprep.subr.mxu0 0.0
    %292 = vmatpush1.xpose.msra.mxu0 0.0
    %293 = vmatprep.subr.mxu0 0.0
    %294 = vmatpush1.xpose.msra.mxu0 0.0
    %295 = vmatprep.subr.mxu0 0.0
    %296 = vmatpush1.xpose.msra.mxu0 %v263
    %297 = vmatprep.subr.mxu0 0.0
    %298 = vmatpush2.xpose.msra.mxu0 0.0
    %299 = vmatprep.subr.mxu0 0.0
    %300 = vmatpush2.xpose.msra.mxu0 0.0
    %301 = vmatprep.subr.mxu0 0.0
    %302 = vmatpush2.xpose.msra.mxu0 0.0
    %303 = vmatprep.subr.mxu0 0.0
    %304 = vmatpush2.xpose.msra.mxu0 0.0
    %305 = vmatprep.subr.mxu0 0.0
    %306 = vmatpush2.xpose.msra.mxu0 0.0
    %307 = vmatprep.subr.mxu0 0.0
    %308 = vmatpush2.xpose.msra.mxu0 0.0
    %309 = vmatprep.subr.mxu0 0.0
    %310 = vmatpush2.xpose.msra.mxu0 0.0
    %311 = vmatprep.subr.mxu0 0.0
    %312 = vmatpush2.xpose.msra.mxu0 0.0
    %313 = vmatprep.subr.mxu0 0.0
    %314 = vmatpush2.xpose.msra.mxu0 0.0
    %315 = vmatprep.subr.mxu0 0.0
    %316 = vmatpush2.xpose.msra.mxu0 0.0
    %317 = vmatprep.subr.mxu0 0.0
    %318 = vmatpush2.xpose.msra.mxu0 0.0
    %319 = vmatprep.subr.mxu0 0.0
    %320 = vmatpush2.xpose.msra.mxu0 0.0
    %321 = vmatprep.subr.mxu0 0.0
    %322 = vmatpush2.xpose.msra.mxu0 0.0
    %323 = vmatprep.subr.mxu0 0.0
    %324 = vmatpush2.xpose.msra.mxu0 0.0
    %325 = vmatprep.subr.mxu0 0.0
    %326 = vmatpush2.xpose.msra.mxu0 0.0
    %327 = vmatprep.subr.mxu0 0.0
    %328 = vmatpush2.xpose.msra.mxu0 0.0
    %329 = vmatprep.mubr.f32.mxu0 0.0
    %330 = vmatmul.mubr.f32.gmra.mxu0 %v263
    %v331 = vpop.f32.mrf.mxu0
    %v332 = vadd.f32 0.0, %v331
    %v333 = vpop.f32.mrf.mxu0
    %334 = vdwg.mxu0
    %v335 = vpack.c.bf16 %v332, %v332
    %v336 = vpack.c.bf16 %v237, %v237
    %338 = vrot.lane.b32.xlu0 %v336, 96
    %v339 = vpop.permute.xlu0 %338
    %vm340 = vcmask 31744
    %v342 = vsel %vm340, %v335, 0
    %vm344 = vcmask 1041408
    %v346 = vsel %vm344, %v339, 0
    %348 = vmatprep.subr.bf16.mxu0 0
    %349 = vmatpush1.bf16.msra.mxu0 0
    %350 = vmatprep.subr.bf16.mxu0 0
    %351 = vmatpush1.bf16.msra.mxu0 0
    %352 = vmatprep.subr.bf16.mxu0 0
    %353 = vmatpush1.bf16.msra.mxu0 0
    %354 = vmatprep.subr.bf16.mxu0 0
    %355 = vmatpush1.bf16.msra.mxu0 0
    %356 = vmatprep.subr.bf16.mxu0 0
    %357 = vmatpush1.bf16.msra.mxu0 0
    %358 = vmatprep.subr.bf16.mxu0 0
    %359 = vmatpush1.bf16.msra.mxu0 0
    %360 = vmatprep.subr.bf16.mxu0 0
    %361 = vmatpush1.bf16.msra.mxu0 0
    %362 = vmatprep.subr.bf16.mxu0 0
    %363 = vmatpush1.bf16.msra.mxu0 %v346
    %364 = vmatprep.subr.bf16.mxu0 0
    %365 = vmatpush2.bf16.msra.mxu0 0
    %366 = vmatprep.subr.bf16.mxu0 0
    %367 = vmatpush2.bf16.msra.mxu0 0
    %368 = vmatprep.subr.bf16.mxu0 0
    %369 = vmatpush2.bf16.msra.mxu0 0
    %370 = vmatprep.subr.bf16.mxu0 0
    %371 = vmatpush2.bf16.msra.mxu0 0
    %372 = vmatprep.subr.bf16.mxu0 0
    %373 = vmatpush2.bf16.msra.mxu0 0
    %374 = vmatprep.subr.bf16.mxu0 0
    %375 = vmatpush2.bf16.msra.mxu0 0
    %376 = vmatprep.subr.bf16.mxu0 0
    %377 = vmatpush2.bf16.msra.mxu0 0
    %378 = vmatprep.subr.bf16.mxu0 0
    %379 = vmatpush2.bf16.msra.mxu0 0
    %380 = vmatprep.mubr.bf16.mxu0 0
    %381 = vmatmul.mubr.bf16.gmra.mxu0 %v342
    %v382 = vpop.f32.mrf.mxu0
    %v383 = vadd.f32 0.0, %v382
    %v384 = vpop.f32.mrf.mxu0
    %v385 = vpop.f32.mrf.mxu0
    %v386 = vpop.f32.mrf.mxu0
    %387 = vdwg.mxu0
    %v388 = vrot.slane %v259, 4
    %389 = vrot.lane.b32.xlu0 %v388, 96
    %v390 = vpop.permute.xlu0 %389
    %v391 = vsel %vm159, %v390, 0
    %393 = vmatprep.subr.mxu0 0.0
    %394 = vmatpush1.xpose.msra.mxu0 0.0
    %395 = vmatprep.subr.mxu0 0.0
    %396 = vmatpush1.xpose.msra.mxu0 0.0
    %397 = vmatprep.subr.mxu0 0.0
    %398 = vmatpush1.xpose.msra.mxu0 0.0
    %399 = vmatprep.subr.mxu0 0.0
    %400 = vmatpush1.xpose.msra.mxu0 0.0
    %401 = vmatprep.subr.mxu0 0.0
    %402 = vmatpush1.xpose.msra.mxu0 0.0
    %403 = vmatprep.subr.mxu0 0.0
    %404 = vmatpush1.xpose.msra.mxu0 0.0
    %405 = vmatprep.subr.mxu0 0.0
    %406 = vmatpush1.xpose.msra.mxu0 0.0
    %407 = vmatprep.subr.mxu0 0.0
    %408 = vmatpush1.xpose.msra.mxu0 0.0
    %409 = vmatprep.subr.mxu0 0.0
    %410 = vmatpush1.xpose.msra.mxu0 0.0
    %411 = vmatprep.subr.mxu0 0.0
    %412 = vmatpush1.xpose.msra.mxu0 0.0
    %413 = vmatprep.subr.mxu0 0.0
    %414 = vmatpush1.xpose.msra.mxu0 0.0
    %415 = vmatprep.subr.mxu0 0.0
    %416 = vmatpush1.xpose.msra.mxu0 0.0
    %417 = vmatprep.subr.mxu0 0.0
    %418 = vmatpush1.xpose.msra.mxu0 0.0
    %419 = vmatprep.subr.mxu0 0.0
    %420 = vmatpush1.xpose.msra.mxu0 0.0
    %421 = vmatprep.subr.mxu0 0.0
    %422 = vmatpush1.xpose.msra.mxu0 0.0
    %423 = vmatprep.subr.mxu0 0.0
    %424 = vmatpush1.xpose.msra.mxu0 %v391
    %425 = vmatprep.subr.mxu0 0.0
    %426 = vmatpush2.xpose.msra.mxu0 0.0
    %427 = vmatprep.subr.mxu0 0.0
    %428 = vmatpush2.xpose.msra.mxu0 0.0
    %429 = vmatprep.subr.mxu0 0.0
    %430 = vmatpush2.xpose.msra.mxu0 0.0
    %431 = vmatprep.subr.mxu0 0.0
    %432 = vmatpush2.xpose.msra.mxu0 0.0
    %433 = vmatprep.subr.mxu0 0.0
    %434 = vmatpush2.xpose.msra.mxu0 0.0
    %435 = vmatprep.subr.mxu0 0.0
    %436 = vmatpush2.xpose.msra.mxu0 0.0
    %437 = vmatprep.subr.mxu0 0.0
    %438 = vmatpush2.xpose.msra.mxu0 0.0
    %439 = vmatprep.subr.mxu0 0.0
    %440 = vmatpush2.xpose.msra.mxu0 0.0
    %441 = vmatprep.subr.mxu0 0.0
    %442 = vmatpush2.xpose.msra.mxu0 0.0
    %443 = vmatprep.subr.mxu0 0.0
    %444 = vmatpush2.xpose.msra.mxu0 0.0
    %445 = vmatprep.subr.mxu0 0.0
    %446 = vmatpush2.xpose.msra.mxu0 0.0
    %447 = vmatprep.subr.mxu0 0.0
    %448 = vmatpush2.xpose.msra.mxu0 0.0
    %449 = vmatprep.subr.mxu0 0.0
    %450 = vmatpush2.xpose.msra.mxu0 0.0
    %451 = vmatprep.subr.mxu0 0.0
    %452 = vmatpush2.xpose.msra.mxu0 0.0
    %453 = vmatprep.subr.mxu0 0.0
    %454 = vmatpush2.xpose.msra.mxu0 0.0
    %455 = vmatprep.subr.mxu0 0.0
    %456 = vmatpush2.xpose.msra.mxu0 0.0
    %457 = vmatprep.mubr.f32.mxu0 0.0
    %458 = vmatmul.mubr.f32.gmra.mxu0 %v391
    %v459 = vpop.f32.mrf.mxu0
    %v460 = vadd.f32 0.0, %v459
    %v461 = vpop.f32.mrf.mxu0
    %462 = vdwg.mxu0
    %v463 = vpack.c.bf16 %v460, %v460
    %v464 = vrot.slane %v336, 2
    %465 = vrot.lane.b32.xlu0 %v464, 96
    %v466 = vpop.permute.xlu0 %465
    %v468 = vsel %vm340, %v463, 0
    %v471 = vsel %vm344, %v466, 0
    %473 = vmatprep.subr.bf16.mxu0 0
    %474 = vmatpush1.bf16.msra.mxu0 0
    %475 = vmatprep.subr.bf16.mxu0 0
    %476 = vmatpush1.bf16.msra.mxu0 0
    %477 = vmatprep.subr.bf16.mxu0 0
    %478 = vmatpush1.bf16.msra.mxu0 0
    %479 = vmatprep.subr.bf16.mxu0 0
    %480 = vmatpush1.bf16.msra.mxu0 0
    %481 = vmatprep.subr.bf16.mxu0 0
    %482 = vmatpush1.bf16.msra.mxu0 0
    %483 = vmatprep.subr.bf16.mxu0 0
    %484 = vmatpush1.bf16.msra.mxu0 0
    %485 = vmatprep.subr.bf16.mxu0 0
    %486 = vmatpush1.bf16.msra.mxu0 0
    %487 = vmatprep.subr.bf16.mxu0 0
    %488 = vmatpush1.bf16.msra.mxu0 %v471
    %489 = vmatprep.subr.bf16.mxu0 0
    %490 = vmatpush2.bf16.msra.mxu0 0
    %491 = vmatprep.subr.bf16.mxu0 0
    %492 = vmatpush2.bf16.msra.mxu0 0
    %493 = vmatprep.subr.bf16.mxu0 0
    %494 = vmatpush2.bf16.msra.mxu0 0
    %495 = vmatprep.subr.bf16.mxu0 0
    %496 = vmatpush2.bf16.msra.mxu0 0
    %497 = vmatprep.subr.bf16.mxu0 0
    %498 = vmatpush2.bf16.msra.mxu0 0
    %499 = vmatprep.subr.bf16.mxu0 0
    %500 = vmatpush2.bf16.msra.mxu0 0
    %501 = vmatprep.subr.bf16.mxu0 0
    %502 = vmatpush2.bf16.msra.mxu0 0
    %503 = vmatprep.subr.bf16.mxu0 0
    %504 = vmatpush2.bf16.msra.mxu0 0
    %505 = vmatprep.mubr.bf16.mxu0 0
    %506 = vmatmul.mubr.bf16.gmra.mxu0 %v468
    %v507 = vpop.f32.mrf.mxu0
    %v508 = vadd.f32 0.0, %v507
    %v509 = vpop.f32.mrf.mxu0
    %v510 = vpop.f32.mrf.mxu0
    %v511 = vpop.f32.mrf.mxu0
    %512 = vdwg.mxu0
    %v514 = vrot.slane %v508, 4
    %vm516 = vcmask 1043456
    %v517 = vsel %vm516, %v383, %v514
    %v518 = vpack.c.bf16 %v517, %v517
    %v523 = vunpack.c.l.b16 %v41
    %v524 = vunpack.c.l.b16 %v42
    %v525 = vunpack.c.l.b16 %v43
    %v526 = vunpack.c.l.b16 %v44
    %v527 = vpack.c.b16 %v524, %v523
    %v528 = vpack.c.b16 %v526, %v525
    %v532 = vsel %vm159, %v518, 0
    %534 = vmatprep.subr.bf16.mxu0 0
    %535 = vmatpush1.bf16.msra.mxu0 0
    %536 = vmatprep.subr.bf16.mxu0 0
    %537 = vmatpush1.bf16.msra.mxu0 0
    %538 = vmatprep.subr.bf16.mxu0 0
    %539 = vmatpush1.bf16.msra.mxu0 0
    %540 = vmatprep.subr.bf16.mxu0 0
    %541 = vmatpush1.bf16.msra.mxu0 0
    %542 = vmatprep.subr.bf16.mxu0 0
    %543 = vmatpush1.bf16.msra.mxu0 0
    %544 = vmatprep.subr.bf16.mxu0 0
    %545 = vmatpush1.bf16.msra.mxu0 0
    %546 = vmatprep.subr.bf16.mxu0 0
    %547 = vmatpush1.bf16.msra.mxu0 %v528
    %548 = vmatprep.subr.bf16.mxu0 0
    %549 = vmatpush1.bf16.msra.mxu0 %v527
    %550 = vmatprep.subr.bf16.mxu0 0
    %551 = vmatpush2.bf16.msra.mxu0 0
    %552 = vmatprep.subr.bf16.mxu0 0
    %553 = vmatpush2.bf16.msra.mxu0 0
    %554 = vmatprep.subr.bf16.mxu0 0
    %555 = vmatpush2.bf16.msra.mxu0 0
    %556 = vmatprep.subr.bf16.mxu0 0
    %557 = vmatpush2.bf16.msra.mxu0 0
    %558 = vmatprep.subr.bf16.mxu0 0
    %559 = vmatpush2.bf16.msra.mxu0 0
    %560 = vmatprep.subr.bf16.mxu0 0
    %561 = vmatpush2.bf16.msra.mxu0 0
    %562 = vmatprep.subr.bf16.mxu0 0
    %563 = vmatpush2.bf16.msra.mxu0 0
    %564 = vmatprep.subr.bf16.mxu0 0
    %565 = vmatpush2.bf16.msra.mxu0 0
    %566 = vmatprep.mubr.bf16.mxu0 0
    %567 = vmatmul.mubr.bf16.gmra.mxu0 %v532
    %v568 = vpop.f32.mrf.mxu0
    %v569 = vadd.f32 0.0, %v568
    %v570 = vpop.f32.mrf.mxu0
    %v571 = vpop.f32.mrf.mxu0
    %v572 = vpop.f32.mrf.mxu0
    %573 = vdwg.mxu0
    %v574 = vmax.f32 %v569, 0.0
    %v575 = vpack.c.bf16 %v574, %v574
    %v580 = vunpack.c.l.b16 %v45
    %v581 = vunpack.c.l.b16 %v46
    %v582 = vunpack.c.l.b16 %v47
    %v583 = vunpack.c.l.b16 %v48
    %v584 = vpack.c.b16 %v581, %v580
    %v585 = vpack.c.b16 %v583, %v582
    %v589 = vsel %vm159, %v575, 0
    %591 = vmatprep.subr.bf16.mxu0 0
    %592 = vmatpush1.bf16.msra.mxu0 0
    %593 = vmatprep.subr.bf16.mxu0 0
    %594 = vmatpush1.bf16.msra.mxu0 0
    %595 = vmatprep.subr.bf16.mxu0 0
    %596 = vmatpush1.bf16.msra.mxu0 0
    %597 = vmatprep.subr.bf16.mxu0 0
    %598 = vmatpush1.bf16.msra.mxu0 0
    %599 = vmatprep.subr.bf16.mxu0 0
    %600 = vmatpush1.bf16.msra.mxu0 0
    %601 = vmatprep.subr.bf16.mxu0 0
    %602 = vmatpush1.bf16.msra.mxu0 0
    %603 = vmatprep.subr.bf16.mxu0 0
    %604 = vmatpush1.bf16.msra.mxu0 %v585
    %605 = vmatprep.subr.bf16.mxu0 0
    %606 = vmatpush1.bf16.msra.mxu0 %v584
    %607 = vmatprep.subr.bf16.mxu0 0
    %608 = vmatpush2.bf16.msra.mxu0 0
    %609 = vmatprep.subr.bf16.mxu0 0
    %610 = vmatpush2.bf16.msra.mxu0 0
    %611 = vmatprep.subr.bf16.mxu0 0
    %612 = vmatpush2.bf16.msra.mxu0 0
    %613 = vmatprep.subr.bf16.mxu0 0
    %614 = vmatpush2.bf16.msra.mxu0 0
    %615 = vmatprep.subr.bf16.mxu0 0
    %616 = vmatpush2.bf16.msra.mxu0 0
    %617 = vmatprep.subr.bf16.mxu0 0
    %618 = vmatpush2.bf16.msra.mxu0 0
    %619 = vmatprep.subr.bf16.mxu0 0
    %620 = vmatpush2.bf16.msra.mxu0 0
    %621 = vmatprep.subr.bf16.mxu0 0
    %622 = vmatpush2.bf16.msra.mxu0 0
    %623 = vmatprep.mubr.bf16.mxu0 0
    %624 = vmatmul.mubr.bf16.gmra.mxu0 %v589
    %v625 = vpop.f32.mrf.mxu0
    %v626 = vadd.f32 0.0, %v625
    %v627 = vpop.f32.mrf.mxu0
    %v628 = vpop.f32.mrf.mxu0
    %v629 = vpop.f32.mrf.mxu0
    %630 = vdwg.mxu0
    %v631 = vsel %vm159, %v626, 0.0
    %v632 = vrot.slane %v631, 4
    %v633 = vadd.f32 %v631, %v632
    %v634 = vrot.slane %v633, 2
    %v635 = vadd.f32 %v633, %v634
    %v636 = vrot.slane %v635, 1
    %v637 = vadd.f32 %v635, %v636
    %v638 = vmul.f32 %v637, 0.125
    %v639 = vmul.f32 %v626, %v626
    %v640 = vsel %vm159, %v639, 0.0
    %v641 = vrot.slane %v640, 4
    %v642 = vadd.f32 %v640, %v641
    %v643 = vrot.slane %v642, 2
    %v644 = vadd.f32 %v642, %v643
    %v645 = vrot.slane %v644, 1
    %v646 = vadd.f32 %v644, %v645
    %v647 = vmul.f32 %v646, 0.125
    %v648 = vmul.f32 %v638, %v638
    %v649 = vsub.f32 %v647, %v648
    %v650 = vsub.f32 %v626, %v638
    %v651 = vadd.f32 %v649, 1e-05
    %v652 = vrsqrt.pop %v651
    %v653 = vmul.f32 %v650, %v652
    %v655 = vlaneseq
    %v656 = vshrl.u32 %v655, 7
    %v657 = vsub.s32 0, %v656
    %v658 = vrot.slane %v50, %v657
    %v660 = vmul.f32 %v653, %v658
    %v662 = vlaneseq
    %v663 = vshrl.u32 %v662, 7
    %v664 = vsub.s32 0, %v663
    %v665 = vrot.slane %v51, %v664
    %v667 = vadd.f32 %v660, %v665
    %669 = vrot.lane.b32.xlu0 %v667, 32
    %v670 = vpop.permute.xlu0 %669
    %v672 = vadd.f32 %v237, %v670
    %v673 = vpack.c.bf16 %v672, %v672
    %675 = vrot.lane.b32.xlu0 %v673, 96
    %v676 = vpop.permute.xlu0 %675
    %v678 = vsel %vm159, %v676, 0
    %680 = vmatprep.subr.bf16.mxu0 0
    %681 = vmatpush1.bf16.msra.mxu0 0
    %682 = vmatprep.subr.bf16.mxu0 0
    %683 = vmatpush1.bf16.msra.mxu0 0
    %684 = vmatprep.subr.bf16.mxu0 0
    %685 = vmatpush1.bf16.msra.mxu0 0
    %686 = vmatprep.subr.bf16.mxu0 0
    %687 = vmatpush1.bf16.msra.mxu0 0
    %688 = vmatprep.subr.bf16.mxu0 0
    %689 = vmatpush1.bf16.msra.mxu0 0
    %690 = vmatprep.subr.bf16.mxu0 0
    %691 = vmatpush1.bf16.msra.mxu0 0
    %692 = vmatprep.subr.bf16.mxu0 0
    %693 = vmatpush1.bf16.msra.mxu0 %v156
    %694 = vmatprep.subr.bf16.mxu0 0
    %695 = vmatpush1.bf16.msra.mxu0 %v155
    %696 = vmatprep.subr.bf16.mxu0 0
    %697 = vmatpush2.bf16.msra.mxu0 0
    %698 = vmatprep.subr.bf16.mxu0 0
    %699 = vmatpush2.bf16.msra.mxu0 0
    %700 = vmatprep.subr.bf16.mxu0 0
    %701 = vmatpush2.bf16.msra.mxu0 0
    %702 = vmatprep.subr.bf16.mxu0 0
    %703 = vmatpush2.bf16.msra.mxu0 0
    %704 = vmatprep.subr.bf16.mxu0 0
    %705 = vmatpush2.bf16.msra.mxu0 0
    %706 = vmatprep.subr.bf16.mxu0 0
    %707 = vmatpush2.bf16.msra.mxu0 0
    %708 = vmatprep.subr.bf16.mxu0 0
    %709 = vmatpush2.bf16.msra.mxu0 0
    %710 = vmatprep.subr.bf16.mxu0 0
    %711 = vmatpush2.bf16.msra.mxu0 0
    %712 = vmatprep.mubr.bf16.mxu0 0
    %713 = vmatmul.mubr.bf16.gmra.mxu0 %v678
    %v714 = vpop.f32.mrf.mxu0
    %v715 = vadd.f32 0.0, %v714
    %v716 = vpop.f32.mrf.mxu0
    %v717 = vpop.f32.mrf.mxu0
    %v718 = vpop.f32.mrf.mxu0
    %719 = vdwg.mxu0
    %v720 = vadd.f32 %v123, %v715
    %v721 = vxor.u32 %v720, 2147483648
    %v722 = vmul.f32 %v721, 1.442695
    %v723 = vpow.pop %v722
    %v724 = vadd.f32 %v723, 1.0
    %v725 = vrcp.pop %v724
    %v726 = vmul.f32 1.0, %v725
    %v727 = vadd.f32 %v715, %v216
    %729 = vrot.lane.b32.xlu0 %v727, 64
    %v730 = vpop.permute.xlu0 %729
    %v732 = vmul.f32 %v726, %v730
    %734 = vrot.lane.b32.xlu0 %v732, 64
    %v735 = vpop.permute.xlu0 %734
    %v737 = vadd.f32 %v140, %v735
    %v738 = vtanh.pop %v737
    %v739 = vsub.f32 1.0, %v726
    %741 = vrot.lane.b32.xlu0 %v738, 96
    %v742 = vpop.permute.xlu0 %741
    %v744 = vmul.f32 %v739, %v742
    %v745 = vmul.f32 %v726, %v672
    %v746 = vadd.f32 %v744, %v745
    %748 = vrot.lane.b32.xlu0 %v746, 96
    %v749 = vpop.permute.xlu0 %748
    %v751 = vsel %vm159, %v749, 0.0
    %752 = vadd.xlane.f32.xlu0 %v751
    %v753 = vpop.xlane.xlu0 %752
    %v754 = vmul.f32 %v746, %v746
    %756 = vrot.lane.b32.xlu0 %v754, 96
    %v757 = vpop.permute.xlu0 %756
    %v759 = vsel %vm159, %v757, 0.0
    %760 = vadd.xlane.f32.xlu0 %v759
    %v761 = vpop.xlane.xlu0 %760
    %v762 = vmul.f32 %v753, 0.03125
    %v763 = vmul.f32 %v762, %v753
    %v764 = vsub.f32 %v761, %v763
    %v765 = vsub.f32 %v746, %v762
    %v766 = vadd.f32 %v764, 1e-08
    %v767 = vrsqrt.pop %v766
    %v768 = vmul.f32 %v765, %v767
    %770 = vrot.lane.b32.xlu0 %v768, 96
    %v771 = vpop.permute.xlu0 %770
    %v772 = vsel %vm159, %v771, 0
    %774 = vmatprep.subr.mxu0 0.0
    %775 = vmatpush1.xpose.msra.mxu0 0.0
    %776 = vmatprep.subr.mxu0 0.0
    %777 = vmatpush1.xpose.msra.mxu0 0.0
    %778 = vmatprep.subr.mxu0 0.0
    %779 = vmatpush1.xpose.msra.mxu0 0.0
    %780 = vmatprep.subr.mxu0 0.0
    %781 = vmatpush1.xpose.msra.mxu0 0.0
    %782 = vmatprep.subr.mxu0 0.0
    %783 = vmatpush1.xpose.msra.mxu0 0.0
    %784 = vmatprep.subr.mxu0 0.0
    %785 = vmatpush1.xpose.msra.mxu0 0.0
    %786 = vmatprep.subr.mxu0 0.0
    %787 = vmatpush1.xpose.msra.mxu0 0.0
    %788 = vmatprep.subr.mxu0 0.0
    %789 = vmatpush1.xpose.msra.mxu0 0.0
    %790 = vmatprep.subr.mxu0 0.0
    %791 = vmatpush1.xpose.msra.mxu0 0.0
    %792 = vmatprep.subr.mxu0 0.0
    %793 = vmatpush1.xpose.msra.mxu0 0.0
    %794 = vmatprep.subr.mxu0 0.0
    %795 = vmatpush1.xpose.msra.mxu0 0.0
    %796 = vmatprep.subr.mxu0 0.0
    %797 = vmatpush1.xpose.msra.mxu0 0.0
    %798 = vmatprep.subr.mxu0 0.0
    %799 = vmatpush1.xpose.msra.mxu0 0.0
    %800 = vmatprep.subr.mxu0 0.0
    %801 = vmatpush1.xpose.msra.mxu0 0.0
    %802 = vmatprep.subr.mxu0 0.0
    %803 = vmatpush1.xpose.msra.mxu0 0.0
    %804 = vmatprep.subr.mxu0 0.0
    %805 = vmatpush1.xpose.msra.mxu0 %v772
    %806 = vmatprep.subr.mxu0 0.0
    %807 = vmatpush2.xpose.msra.mxu0 0.0
    %808 = vmatprep.subr.mxu0 0.0
    %809 = vmatpush2.xpose.msra.mxu0 0.0
    %810 = vmatprep.subr.mxu0 0.0
    %811 = vmatpush2.xpose.msra.mxu0 0.0
    %812 = vmatprep.subr.mxu0 0.0
    %813 = vmatpush2.xpose.msra.mxu0 0.0
    %814 = vmatprep.subr.mxu0 0.0
    %815 = vmatpush2.xpose.msra.mxu0 0.0
    %816 = vmatprep.subr.mxu0 0.0
    %817 = vmatpush2.xpose.msra.mxu0 0.0
    %818 = vmatprep.subr.mxu0 0.0
    %819 = vmatpush2.xpose.msra.mxu0 0.0
    %820 = vmatprep.subr.mxu0 0.0
    %821 = vmatpush2.xpose.msra.mxu0 0.0
    %822 = vmatprep.subr.mxu0 0.0
    %823 = vmatpush2.xpose.msra.mxu0 0.0
    %824 = vmatprep.subr.mxu0 0.0
    %825 = vmatpush2.xpose.msra.mxu0 0.0
    %826 = vmatprep.subr.mxu0 0.0
    %827 = vmatpush2.xpose.msra.mxu0 0.0
    %828 = vmatprep.subr.mxu0 0.0
    %829 = vmatpush2.xpose.msra.mxu0 0.0
    %830 = vmatprep.subr.mxu0 0.0
    %831 = vmatpush2.xpose.msra.mxu0 0.0
    %832 = vmatprep.subr.mxu0 0.0
    %833 = vmatpush2.xpose.msra.mxu0 0.0
    %834 = vmatprep.subr.mxu0 0.0
    %835 = vmatpush2.xpose.msra.mxu0 0.0
    %836 = vmatprep.subr.mxu0 0.0
    %837 = vmatpush2.xpose.msra.mxu0 0.0
    %838 = vmatprep.mubr.f32.mxu0 0.0
    %839 = vmatmul.mubr.f32.gmra.mxu0 %v772
    %v840 = vpop.f32.mrf.mxu0
    %v841 = vadd.f32 0.0, %v840
    %v842 = vpop.f32.mrf.mxu0
    %843 = vdwg.mxu0
    %v844 = vpack.c.bf16 %v841, %v841
    %v845 = vpack.c.bf16 %v746, %v746
    %847 = vrot.lane.b32.xlu0 %v845, 96
    %v848 = vpop.permute.xlu0 %847
    %v850 = vsel %vm340, %v844, 0
    %v853 = vsel %vm344, %v848, 0
    %855 = vmatprep.subr.bf16.mxu0 0
    %856 = vmatpush1.bf16.msra.mxu0 0
    %857 = vmatprep.subr.bf16.mxu0 0
    %858 = vmatpush1.bf16.msra.mxu0 0
    %859 = vmatprep.subr.bf16.mxu0 0
    %860 = vmatpush1.bf16.msra.mxu0 0
    %861 = vmatprep.subr.bf16.mxu0 0
    %862 = vmatpush1.bf16.msra.mxu0 0
    %863 = vmatprep.subr.bf16.mxu0 0
    %864 = vmatpush1.bf16.msra.mxu0 0
    %865 = vmatprep.subr.bf16.mxu0 0
    %866 = vmatpush1.bf16.msra.mxu0 0
    %867 = vmatprep.subr.bf16.mxu0 0
    %868 = vmatpush1.bf16.msra.mxu0 0
    %869 = vmatprep.subr.bf16.mxu0 0
    %870 = vmatpush1.bf16.msra.mxu0 %v853
    %871 = vmatprep.subr.bf16.mxu0 0
    %872 = vmatpush2.bf16.msra.mxu0 0
    %873 = vmatprep.subr.bf16.mxu0 0
    %874 = vmatpush2.bf16.msra.mxu0 0
    %875 = vmatprep.subr.bf16.mxu0 0
    %876 = vmatpush2.bf16.msra.mxu0 0
    %877 = vmatprep.subr.bf16.mxu0 0
    %878 = vmatpush2.bf16.msra.mxu0 0
    %879 = vmatprep.subr.bf16.mxu0 0
    %880 = vmatpush2.bf16.msra.mxu0 0
    %881 = vmatprep.subr.bf16.mxu0 0
    %882 = vmatpush2.bf16.msra.mxu0 0
    %883 = vmatprep.subr.bf16.mxu0 0
    %884 = vmatpush2.bf16.msra.mxu0 0
    %885 = vmatprep.subr.bf16.mxu0 0
    %886 = vmatpush2.bf16.msra.mxu0 0
    %887 = vmatprep.mubr.bf16.mxu0 0
    %888 = vmatmul.mubr.bf16.gmra.mxu0 %v850
    %v889 = vpop.f32.mrf.mxu0
    %v890 = vadd.f32 0.0, %v889
    %v891 = vpop.f32.mrf.mxu0
    %v892 = vpop.f32.mrf.mxu0
    %v893 = vpop.f32.mrf.mxu0
    %894 = vdwg.mxu0
    %v895 = vrot.slane %v768, 4
    %896 = vrot.lane.b32.xlu0 %v895, 96
    %v897 = vpop.permute.xlu0 %896
    %v898 = vsel %vm159, %v897, 0
    %900 = vmatprep.subr.mxu0 0.0
    %901 = vmatpush1.xpose.msra.mxu0 0.0
    %902 = vmatprep.subr.mxu0 0.0
    %903 = vmatpush1.xpose.msra.mxu0 0.0
    %904 = vmatprep.subr.mxu0 0.0
    %905 = vmatpush1.xpose.msra.mxu0 0.0
    %906 = vmatprep.subr.mxu0 0.0
    %907 = vmatpush1.xpose.msra.mxu0 0.0
    %908 = vmatprep.subr.mxu0 0.0
    %909 = vmatpush1.xpose.msra.mxu0 0.0
    %910 = vmatprep.subr.mxu0 0.0
    %911 = vmatpush1.xpose.msra.mxu0 0.0
    %912 = vmatprep.subr.mxu0 0.0
    %913 = vmatpush1.xpose.msra.mxu0 0.0
    %914 = vmatprep.subr.mxu0 0.0
    %915 = vmatpush1.xpose.msra.mxu0 0.0
    %916 = vmatprep.subr.mxu0 0.0
    %917 = vmatpush1.xpose.msra.mxu0 0.0
    %918 = vmatprep.subr.mxu0 0.0
    %919 = vmatpush1.xpose.msra.mxu0 0.0
    %920 = vmatprep.subr.mxu0 0.0
    %921 = vmatpush1.xpose.msra.mxu0 0.0
    %922 = vmatprep.subr.mxu0 0.0
    %923 = vmatpush1.xpose.msra.mxu0 0.0
    %924 = vmatprep.subr.mxu0 0.0
    %925 = vmatpush1.xpose.msra.mxu0 0.0
    %926 = vmatprep.subr.mxu0 0.0
    %927 = vmatpush1.xpose.msra.mxu0 0.0
    %928 = vmatprep.subr.mxu0 0.0
    %929 = vmatpush1.xpose.msra.mxu0 0.0
    %930 = vmatprep.subr.mxu0 0.0
    %931 = vmatpush1.xpose.msra.mxu0 %v898
    %932 = vmatprep.subr.mxu0 0.0
    %933 = vmatpush2.xpose.msra.mxu0 0.0
    %934 = vmatprep.subr.mxu0 0.0
    %935 = vmatpush2.xpose.msra.mxu0 0.0
    %936 = vmatprep.subr.mxu0 0.0
    %937 = vmatpush2.xpose.msra.mxu0 0.0
    %938 = vmatprep.subr.mxu0 0.0
    %939 = vmatpush2.xpose.msra.mxu0 0.0
    %940 = vmatprep.subr.mxu0 0.0
    %941 = vmatpush2.xpose.msra.mxu0 0.0
    %942 = vmatprep.subr.mxu0 0.0
    %943 = vmatpush2.xpose.msra.mxu0 0.0
    %944 = vmatprep.subr.mxu0 0.0
    %945 = vmatpush2.xpose.msra.mxu0 0.0
    %946 = vmatprep.subr.mxu0 0.0
    %947 = vmatpush2.xpose.msra.mxu0 0.0
    %948 = vmatprep.subr.mxu0 0.0
    %949 = vmatpush2.xpose.msra.mxu0 0.0
    %950 = vmatprep.subr.mxu0 0.0
    %951 = vmatpush2.xpose.msra.mxu0 0.0
    %952 = vmatprep.subr.mxu0 0.0
    %953 = vmatpush2.xpose.msra.mxu0 0.0
    %954 = vmatprep.subr.mxu0 0.0
    %955 = vmatpush2.xpose.msra.mxu0 0.0
    %956 = vmatprep.subr.mxu0 0.0
    %957 = vmatpush2.xpose.msra.mxu0 0.0
    %958 = vmatprep.subr.mxu0 0.0
    %959 = vmatpush2.xpose.msra.mxu0 0.0
    %960 = vmatprep.subr.mxu0 0.0
    %961 = vmatpush2.xpose.msra.mxu0 0.0
    %962 = vmatprep.subr.mxu0 0.0
    %963 = vmatpush2.xpose.msra.mxu0 0.0
    %964 = vmatprep.mubr.f32.mxu0 0.0
    %965 = vmatmul.mubr.f32.gmra.mxu0 %v898
    %v966 = vpop.f32.mrf.mxu0
    %v967 = vadd.f32 0.0, %v966
    %v968 = vpop.f32.mrf.mxu0
    %969 = vdwg.mxu0
    %v970 = vpack.c.bf16 %v967, %v967
    %v971 = vrot.slane %v845, 2
    %972 = vrot.lane.b32.xlu0 %v971, 96
    %v973 = vpop.permute.xlu0 %972
    %v975 = vsel %vm340, %v970, 0
    %v978 = vsel %vm344, %v973, 0
    %980 = vmatprep.subr.bf16.mxu0 0
    %981 = vmatpush1.bf16.msra.mxu0 0
    %982 = vmatprep.subr.bf16.mxu0 0
    %983 = vmatpush1.bf16.msra.mxu0 0
    %984 = vmatprep.subr.bf16.mxu0 0
    %985 = vmatpush1.bf16.msra.mxu0 0
    %986 = vmatprep.subr.bf16.mxu0 0
    %987 = vmatpush1.bf16.msra.mxu0 0
    %988 = vmatprep.subr.bf16.mxu0 0
    %989 = vmatpush1.bf16.msra.mxu0 0
    %990 = vmatprep.subr.bf16.mxu0 0
    %991 = vmatpush1.bf16.msra.mxu0 0
    %992 = vmatprep.subr.bf16.mxu0 0
    %993 = vmatpush1.bf16.msra.mxu0 0
    %994 = vmatprep.subr.bf16.mxu0 0
    %995 = vmatpush1.bf16.msra.mxu0 %v978
    %996 = vmatprep.subr.bf16.mxu0 0
    %997 = vmatpush2.bf16.msra.mxu0 0
    %998 = vmatprep.subr.bf16.mxu0 0
    %999 = vmatpush2.bf16.msra.mxu0 0
    %1000 = vmatprep.subr.bf16.mxu0 0
    %1001 = vmatpush2.bf16.msra.mxu0 0
    %1002 = vmatprep.subr.bf16.mxu0 0
    %1003 = vmatpush2.bf16.msra.mxu0 0
    %1004 = vmatprep.subr.bf16.mxu0 0
    %1005 = vmatpush2.bf16.msra.mxu0 0
    %1006 = vmatprep.subr.bf16.mxu0 0
    %1007 = vmatpush2.bf16.msra.mxu0 0
    %1008 = vmatprep.subr.bf16.mxu0 0
    %1009 = vmatpush2.bf16.msra.mxu0 0
    %1010 = vmatprep.subr.bf16.mxu0 0
    %1011 = vmatpush2.bf16.msra.mxu0 0
    %1012 = vmatprep.mubr.bf16.mxu0 0
    %1013 = vmatmul.mubr.bf16.gmra.mxu0 %v975
    %v1014 = vpop.f32.mrf.mxu0
    %v1015 = vadd.f32 0.0, %v1014
    %v1016 = vpop.f32.mrf.mxu0
    %v1017 = vpop.f32.mrf.mxu0
    %v1018 = vpop.f32.mrf.mxu0
    %1019 = vdwg.mxu0
    %v1021 = vrot.slane %v1015, 4
    %v1023 = vsel %vm516, %v890, %v1021
    %v1024 = vpack.c.bf16 %v1023, %v1023
    %v1026 = vsel %vm159, %v1024, 0
    %1028 = vmatprep.subr.bf16.mxu0 0
    %1029 = vmatpush1.bf16.msra.mxu0 0
    %1030 = vmatprep.subr.bf16.mxu0 0
    %1031 = vmatpush1.bf16.msra.mxu0 0
    %1032 = vmatprep.subr.bf16.mxu0 0
    %1033 = vmatpush1.bf16.msra.mxu0 0
    %1034 = vmatprep.subr.bf16.mxu0 0
    %1035 = vmatpush1.bf16.msra.mxu0 0
    %1036 = vmatprep.subr.bf16.mxu0 0
    %1037 = vmatpush1.bf16.msra.mxu0 0
    %1038 = vmatprep.subr.bf16.mxu0 0
    %1039 = vmatpush1.bf16.msra.mxu0 0
    %1040 = vmatprep.subr.bf16.mxu0 0
    %1041 = vmatpush1.bf16.msra.mxu0 %v528
    %1042 = vmatprep.subr.bf16.mxu0 0
    %1043 = vmatpush1.bf16.msra.mxu0 %v527
    %1044 = vmatprep.subr.bf16.mxu0 0
    %1045 = vmatpush2.bf16.msra.mxu0 0
    %1046 = vmatprep.subr.bf16.mxu0 0
    %1047 = vmatpush2.bf16.msra.mxu0 0
    %1048 = vmatprep.subr.bf16.mxu0 0
    %1049 = vmatpush2.bf16.msra.mxu0 0
    %1050 = vmatprep.subr.bf16.mxu0 0
    %1051 = vmatpush2.bf16.msra.mxu0 0
    %1052 = vmatprep.subr.bf16.mxu0 0
    %1053 = vmatpush2.bf16.msra.mxu0 0
    %1054 = vmatprep.subr.bf16.mxu0 0
    %1055 = vmatpush2.bf16.msra.mxu0 0
    %1056 = vmatprep.subr.bf16.mxu0 0
    %1057 = vmatpush2.bf16.msra.mxu0 0
    %1058 = vmatprep.subr.bf16.mxu0 0
    %1059 = vmatpush2.bf16.msra.mxu0 0
    %1060 = vmatprep.mubr.bf16.mxu0 0
    %1061 = vmatmul.mubr.bf16.gmra.mxu0 %v1026
    %v1062 = vpop.f32.mrf.mxu0
    %v1063 = vadd.f32 0.0, %v1062
    %v1064 = vpop.f32.mrf.mxu0
    %v1065 = vpop.f32.mrf.mxu0
    %v1066 = vpop.f32.mrf.mxu0
    %1067 = vdwg.mxu0
    %v1068 = vmax.f32 %v1063, 0.0
    %v1069 = vpack.c.bf16 %v1068, %v1068
    %v1071 = vsel %vm159, %v1069, 0
    %1073 = vmatprep.subr.bf16.mxu0 0
    %1074 = vmatpush1.bf16.msra.mxu0 0
    %1075 = vmatprep.subr.bf16.mxu0 0
    %1076 = vmatpush1.bf16.msra.mxu0 0
    %1077 = vmatprep.subr.bf16.mxu0 0
    %1078 = vmatpush1.bf16.msra.mxu0 0
    %1079 = vmatprep.subr.bf16.mxu0 0
    %1080 = vmatpush1.bf16.msra.mxu0 0
    %1081 = vmatprep.subr.bf16.mxu0 0
    %1082 = vmatpush1.bf16.msra.mxu0 0
    %1083 = vmatprep.subr.bf16.mxu0 0
    %1084 = vmatpush1.bf16.msra.mxu0 0
    %1085 = vmatprep.subr.bf16.mxu0 0
    %1086 = vmatpush1.bf16.msra.mxu0 %v585
    %1087 = vmatprep.subr.bf16.mxu0 0
    %1088 = vmatpush1.bf16.msra.mxu0 %v584
    %1089 = vmatprep.subr.bf16.mxu0 0
    %1090 = vmatpush2.bf16.msra.mxu0 0
    %1091 = vmatprep.subr.bf16.mxu0 0
    %1092 = vmatpush2.bf16.msra.mxu0 0
    %1093 = vmatprep.subr.bf16.mxu0 0
    %1094 = vmatpush2.bf16.msra.mxu0 0
    %1095 = vmatprep.subr.bf16.mxu0 0
    %1096 = vmatpush2.bf16.msra.mxu0 0
    %1097 = vmatprep.subr.bf16.mxu0 0
    %1098 = vmatpush2.bf16.msra.mxu0 0
    %1099 = vmatprep.subr.bf16.mxu0 0
    %1100 = vmatpush2.bf16.msra.mxu0 0
    %1101 = vmatprep.subr.bf16.mxu0 0
    %1102 = vmatpush2.bf16.msra.mxu0 0
    %1103 = vmatprep.subr.bf16.mxu0 0
    %1104 = vmatpush2.bf16.msra.mxu0 0
    %1105 = vmatprep.mubr.bf16.mxu0 0
    %1106 = vmatmul.mubr.bf16.gmra.mxu0 %v1071
    %v1107 = vpop.f32.mrf.mxu0
    %v1108 = vadd.f32 0.0, %v1107
    %v1109 = vpop.f32.mrf.mxu0
    %v1110 = vpop.f32.mrf.mxu0
    %v1111 = vpop.f32.mrf.mxu0
    %1112 = vdwg.mxu0
    %v1113 = vsel %vm159, %v1108, 0.0
    %v1114 = vrot.slane %v1113, 4
    %v1115 = vadd.f32 %v1113, %v1114
    %v1116 = vrot.slane %v1115, 2
    %v1117 = vadd.f32 %v1115, %v1116
    %v1118 = vrot.slane %v1117, 1
    %v1119 = vadd.f32 %v1117, %v1118
    %v1120 = vmul.f32 %v1119, 0.125
    %v1121 = vmul.f32 %v1108, %v1108
    %v1122 = vsel %vm159, %v1121, 0.0
    %v1123 = vrot.slane %v1122, 4
    %v1124 = vadd.f32 %v1122, %v1123
    %v1125 = vrot.slane %v1124, 2
    %v1126 = vadd.f32 %v1124, %v1125
    %v1127 = vrot.slane %v1126, 1
    %v1128 = vadd.f32 %v1126, %v1127
    %v1129 = vmul.f32 %v1128, 0.125
    %v1130 = vmul.f32 %v1120, %v1120
    %v1131 = vsub.f32 %v1129, %v1130
    %v1132 = vsub.f32 %v1108, %v1120
    %v1133 = vadd.f32 %v1131, 1e-05
    %v1134 = vrsqrt.pop %v1133
    %v1135 = vmul.f32 %v1132, %v1134
    %v1136 = vmul.f32 %v1135, %v658
    %v1137 = vadd.f32 %v1136, %v665
    %1139 = vrot.lane.b32.xlu0 %v1137, 32
    %v1140 = vpop.permute.xlu0 %1139
    %v1142 = vadd.f32 %v746, %v1140
    %v1143 = vpack.c.bf16 %v1142, %v1142
    %1145 = vrot.lane.b32.xlu0 %v1143, 96
    %v1146 = vpop.permute.xlu0 %1145
    %v1148 = vsel %vm159, %v1146, 0
    %1150 = vmatprep.subr.bf16.mxu0 0
    %1151 = vmatpush1.bf16.msra.mxu0 0
    %1152 = vmatprep.subr.bf16.mxu0 0
    %1153 = vmatpush1.bf16.msra.mxu0 0
    %1154 = vmatprep.subr.bf16.mxu0 0
    %1155 = vmatpush1.bf16.msra.mxu0 0
    %1156 = vmatprep.subr.bf16.mxu0 0
    %1157 = vmatpush1.bf16.msra.mxu0 0
    %1158 = vmatprep.subr.bf16.mxu0 0
    %1159 = vmatpush1.bf16.msra.mxu0 0
    %1160 = vmatprep.subr.bf16.mxu0 0
    %1161 = vmatpush1.bf16.msra.mxu0 0
    %1162 = vmatprep.subr.bf16.mxu0 0
    %1163 = vmatpush1.bf16.msra.mxu0 %v156
    %1164 = vmatprep.subr.bf16.mxu0 0
    %1165 = vmatpush1.bf16.msra.mxu0 %v155
    %1166 = vmatprep.subr.bf16.mxu0 0
    %1167 = vmatpush2.bf16.msra.mxu0 0
    %1168 = vmatprep.subr.bf16.mxu0 0
    %1169 = vmatpush2.bf16.msra.mxu0 0
    %1170 = vmatprep.subr.bf16.mxu0 0
    %1171 = vmatpush2.bf16.msra.mxu0 0
    %1172 = vmatprep.subr.bf16.mxu0 0
    %1173 = vmatpush2.bf16.msra.mxu0 0
    %1174 = vmatprep.subr.bf16.mxu0 0
    %1175 = vmatpush2.bf16.msra.mxu0 0
    %1176 = vmatprep.subr.bf16.mxu0 0
    %1177 = vmatpush2.bf16.msra.mxu0 0
    %1178 = vmatprep.subr.bf16.mxu0 0
    %1179 = vmatpush2.bf16.msra.mxu0 0
    %1180 = vmatprep.subr.bf16.mxu0 0
    %1181 = vmatpush2.bf16.msra.mxu0 0
    %1182 = vmatprep.mubr.bf16.mxu0 0
    %1183 = vmatmul.mubr.bf16.gmra.mxu0 %v1148
    %v1184 = vpop.f32.mrf.mxu0
    %v1185 = vadd.f32 0.0, %v1184
    %v1186 = vpop.f32.mrf.mxu0
    %v1187 = vpop.f32.mrf.mxu0
    %v1188 = vpop.f32.mrf.mxu0
    %1189 = vdwg.mxu0
    %v1190 = vadd.f32 %v124, %v1185
    %v1191 = vxor.u32 %v1190, 2147483648
    %v1192 = vmul.f32 %v1191, 1.442695
    %v1193 = vpow.pop %v1192
    %v1194 = vadd.f32 %v1193, 1.0
    %v1195 = vrcp.pop %v1194
    %v1196 = vmul.f32 1.0, %v1195
    %v1197 = vadd.f32 %v1185, %v216
    %1199 = vrot.lane.b32.xlu0 %v1197, 64
    %v1200 = vpop.permute.xlu0 %1199
    %v1202 = vmul.f32 %v1196, %v1200
    %1204 = vrot.lane.b32.xlu0 %v1202, 64
    %v1205 = vpop.permute.xlu0 %1204
    %v1207 = vadd.f32 %v141, %v1205
    %v1208 = vtanh.pop %v1207
    %v1209 = vsub.f32 1.0, %v1196
    %1211 = vrot.lane.b32.xlu0 %v1208, 96
    %v1212 = vpop.permute.xlu0 %1211
    %v1214 = vmul.f32 %v1209, %v1212
    %v1215 = vmul.f32 %v1196, %v1142
    %v1216 = vadd.f32 %v1214, %v1215
    %1218 = vrot.lane.b32.xlu0 %v1216, 96
    %v1219 = vpop.permute.xlu0 %1218
    %v1221 = vsel %vm159, %v1219, 0.0
    %1222 = vadd.xlane.f32.xlu0 %v1221
    %v1223 = vpop.xlane.xlu0 %1222
    %v1224 = vmul.f32 %v1216, %v1216
    %1226 = vrot.lane.b32.xlu0 %v1224, 96
    %v1227 = vpop.permute.xlu0 %1226
    %v1229 = vsel %vm159, %v1227, 0.0
    %1230 = vadd.xlane.f32.xlu0 %v1229
    %v1231 = vpop.xlane.xlu0 %1230
    %v1232 = vmul.f32 %v1223, 0.03125
    %v1233 = vmul.f32 %v1232, %v1223
    %v1234 = vsub.f32 %v1231, %v1233
    %v1235 = vsub.f32 %v1216, %v1232
    %v1236 = vadd.f32 %v1234, 1e-08
    %v1237 = vrsqrt.pop %v1236
    %v1238 = vmul.f32 %v1235, %v1237
    %1240 = vrot.lane.b32.xlu0 %v1238, 96
    %v1241 = vpop.permute.xlu0 %1240
    %v1242 = vsel %vm159, %v1241, 0
    %1244 = vmatprep.subr.mxu0 0.0
    %1245 = vmatpush1.xpose.msra.mxu0 0.0
    %1246 = vmatprep.subr.mxu0 0.0
    %1247 = vmatpush1.xpose.msra.mxu0 0.0
    %1248 = vmatprep.subr.mxu0 0.0
    %1249 = vmatpush1.xpose.msra.mxu0 0.0
    %1250 = vmatprep.subr.mxu0 0.0
    %1251 = vmatpush1.xpose.msra.mxu0 0.0
    %1252 = vmatprep.subr.mxu0 0.0
    %1253 = vmatpush1.xpose.msra.mxu0 0.0
    %1254 = vmatprep.subr.mxu0 0.0
    %1255 = vmatpush1.xpose.msra.mxu0 0.0
    %1256 = vmatprep.subr.mxu0 0.0
    %1257 = vmatpush1.xpose.msra.mxu0 0.0
    %1258 = vmatprep.subr.mxu0 0.0
    %1259 = vmatpush1.xpose.msra.mxu0 0.0
    %1260 = vmatprep.subr.mxu0 0.0
    %1261 = vmatpush1.xpose.msra.mxu0 0.0
    %1262 = vmatprep.subr.mxu0 0.0
    %1263 = vmatpush1.xpose.msra.mxu0 0.0
    %1264 = vmatprep.subr.mxu0 0.0
    %1265 = vmatpush1.xpose.msra.mxu0 0.0
    %1266 = vmatprep.subr.mxu0 0.0
    %1267 = vmatpush1.xpose.msra.mxu0 0.0
    %1268 = vmatprep.subr.mxu0 0.0
    %1269 = vmatpush1.xpose.msra.mxu0 0.0
    %1270 = vmatprep.subr.mxu0 0.0
    %1271 = vmatpush1.xpose.msra.mxu0 0.0
    %1272 = vmatprep.subr.mxu0 0.0
    %1273 = vmatpush1.xpose.msra.mxu0 0.0
    %1274 = vmatprep.subr.mxu0 0.0
    %1275 = vmatpush1.xpose.msra.mxu0 %v1242
    %1276 = vmatprep.subr.mxu0 0.0
    %1277 = vmatpush2.xpose.msra.mxu0 0.0
    %1278 = vmatprep.subr.mxu0 0.0
    %1279 = vmatpush2.xpose.msra.mxu0 0.0
    %1280 = vmatprep.subr.mxu0 0.0
    %1281 = vmatpush2.xpose.msra.mxu0 0.0
    %1282 = vmatprep.subr.mxu0 0.0
    %1283 = vmatpush2.xpose.msra.mxu0 0.0
    %1284 = vmatprep.subr.mxu0 0.0
    %1285 = vmatpush2.xpose.msra.mxu0 0.0
    %1286 = vmatprep.subr.mxu0 0.0
    %1287 = vmatpush2.xpose.msra.mxu0 0.0
    %1288 = vmatprep.subr.mxu0 0.0
    %1289 = vmatpush2.xpose.msra.mxu0 0.0
    %1290 = vmatprep.subr.mxu0 0.0
    %1291 = vmatpush2.xpose.msra.mxu0 0.0
    %1292 = vmatprep.subr.mxu0 0.0
    %1293 = vmatpush2.xpose.msra.mxu0 0.0
    %1294 = vmatprep.subr.mxu0 0.0
    %1295 = vmatpush2.xpose.msra.mxu0 0.0
    %1296 = vmatprep.subr.mxu0 0.0
    %1297 = vmatpush2.xpose.msra.mxu0 0.0
    %1298 = vmatprep.subr.mxu0 0.0
    %1299 = vmatpush2.xpose.msra.mxu0 0.0
    %1300 = vmatprep.subr.mxu0 0.0
    %1301 = vmatpush2.xpose.msra.mxu0 0.0
    %1302 = vmatprep.subr.mxu0 0.0
    %1303 = vmatpush2.xpose.msra.mxu0 0.0
    %1304 = vmatprep.subr.mxu0 0.0
    %1305 = vmatpush2.xpose.msra.mxu0 0.0
    %1306 = vmatprep.subr.mxu0 0.0
    %1307 = vmatpush2.xpose.msra.mxu0 0.0
    %1308 = vmatprep.mubr.f32.mxu0 0.0
    %1309 = vmatmul.mubr.f32.gmra.mxu0 %v1242
    %v1310 = vpop.f32.mrf.mxu0
    %v1311 = vadd.f32 0.0, %v1310
    %v1312 = vpop.f32.mrf.mxu0
    %1313 = vdwg.mxu0
    %v1314 = vpack.c.bf16 %v1311, %v1311
    %v1315 = vpack.c.bf16 %v1216, %v1216
    %1317 = vrot.lane.b32.xlu0 %v1315, 96
    %v1318 = vpop.permute.xlu0 %1317
    %v1320 = vsel %vm340, %v1314, 0
    %v1323 = vsel %vm344, %v1318, 0
    %1325 = vmatprep.subr.bf16.mxu0 0
    %1326 = vmatpush1.bf16.msra.mxu0 0
    %1327 = vmatprep.subr.bf16.mxu0 0
    %1328 = vmatpush1.bf16.msra.mxu0 0
    %1329 = vmatprep.subr.bf16.mxu0 0
    %1330 = vmatpush1.bf16.msra.mxu0 0
    %1331 = vmatprep.subr.bf16.mxu0 0
    %1332 = vmatpush1.bf16.msra.mxu0 0
    %1333 = vmatprep.subr.bf16.mxu0 0
    %1334 = vmatpush1.bf16.msra.mxu0 0
    %1335 = vmatprep.subr.bf16.mxu0 0
    %1336 = vmatpush1.bf16.msra.mxu0 0
    %1337 = vmatprep.subr.bf16.mxu0 0
    %1338 = vmatpush1.bf16.msra.mxu0 0
    %1339 = vmatprep.subr.bf16.mxu0 0
    %1340 = vmatpush1.bf16.msra.mxu0 %v1323
    %1341 = vmatprep.subr.bf16.mxu0 0
    %1342 = vmatpush2.bf16.msra.mxu0 0
    %1343 = vmatprep.subr.bf16.mxu0 0
    %1344 = vmatpush2.bf16.msra.mxu0 0
    %1345 = vmatprep.subr.bf16.mxu0 0
    %1346 = vmatpush2.bf16.msra.mxu0 0
    %1347 = vmatprep.subr.bf16.mxu0 0
    %1348 = vmatpush2.bf16.msra.mxu0 0
    %1349 = vmatprep.subr.bf16.mxu0 0
    %1350 = vmatpush2.bf16.msra.mxu0 0
    %1351 = vmatprep.subr.bf16.mxu0 0
    %1352 = vmatpush2.bf16.msra.mxu0 0
    %1353 = vmatprep.subr.bf16.mxu0 0
    %1354 = vmatpush2.bf16.msra.mxu0 0
    %1355 = vmatprep.subr.bf16.mxu0 0
    %1356 = vmatpush2.bf16.msra.mxu0 0
    %1357 = vmatprep.mubr.bf16.mxu0 0
    %1358 = vmatmul.mubr.bf16.gmra.mxu0 %v1320
    %v1359 = vpop.f32.mrf.mxu0
    %v1360 = vadd.f32 0.0, %v1359
    %v1361 = vpop.f32.mrf.mxu0
    %v1362 = vpop.f32.mrf.mxu0
    %v1363 = vpop.f32.mrf.mxu0
    %1364 = vdwg.mxu0
    %v1365 = vrot.slane %v1238, 4
    %1366 = vrot.lane.b32.xlu0 %v1365, 96
    %v1367 = vpop.permute.xlu0 %1366
    %v1368 = vsel %vm159, %v1367, 0
    %1370 = vmatprep.subr.mxu0 0.0
    %1371 = vmatpush1.xpose.msra.mxu0 0.0
    %1372 = vmatprep.subr.mxu0 0.0
    %1373 = vmatpush1.xpose.msra.mxu0 0.0
    %1374 = vmatprep.subr.mxu0 0.0
    %1375 = vmatpush1.xpose.msra.mxu0 0.0
    %1376 = vmatprep.subr.mxu0 0.0
    %1377 = vmatpush1.xpose.msra.mxu0 0.0
    %1378 = vmatprep.subr.mxu0 0.0
    %1379 = vmatpush1.xpose.msra.mxu0 0.0
    %1380 = vmatprep.subr.mxu0 0.0
    %1381 = vmatpush1.xpose.msra.mxu0 0.0
    %1382 = vmatprep.subr.mxu0 0.0
    %1383 = vmatpush1.xpose.msra.mxu0 0.0
    %1384 = vmatprep.subr.mxu0 0.0
    %1385 = vmatpush1.xpose.msra.mxu0 0.0
    %1386 = vmatprep.subr.mxu0 0.0
    %1387 = vmatpush1.xpose.msra.mxu0 0.0
    %1388 = vmatprep.subr.mxu0 0.0
    %1389 = vmatpush1.xpose.msra.mxu0 0.0
    %1390 = vmatprep.subr.mxu0 0.0
    %1391 = vmatpush1.xpose.msra.mxu0 0.0
    %1392 = vmatprep.subr.mxu0 0.0
    %1393 = vmatpush1.xpose.msra.mxu0 0.0
    %1394 = vmatprep.subr.mxu0 0.0
    %1395 = vmatpush1.xpose.msra.mxu0 0.0
    %1396 = vmatprep.subr.mxu0 0.0
    %1397 = vmatpush1.xpose.msra.mxu0 0.0
    %1398 = vmatprep.subr.mxu0 0.0
    %1399 = vmatpush1.xpose.msra.mxu0 0.0
    %1400 = vmatprep.subr.mxu0 0.0
    %1401 = vmatpush1.xpose.msra.mxu0 %v1368
    %1402 = vmatprep.subr.mxu0 0.0
    %1403 = vmatpush2.xpose.msra.mxu0 0.0
    %1404 = vmatprep.subr.mxu0 0.0
    %1405 = vmatpush2.xpose.msra.mxu0 0.0
    %1406 = vmatprep.subr.mxu0 0.0
    %1407 = vmatpush2.xpose.msra.mxu0 0.0
    %1408 = vmatprep.subr.mxu0 0.0
    %1409 = vmatpush2.xpose.msra.mxu0 0.0
    %1410 = vmatprep.subr.mxu0 0.0
    %1411 = vmatpush2.xpose.msra.mxu0 0.0
    %1412 = vmatprep.subr.mxu0 0.0
    %1413 = vmatpush2.xpose.msra.mxu0 0.0
    %1414 = vmatprep.subr.mxu0 0.0
    %1415 = vmatpush2.xpose.msra.mxu0 0.0
    %1416 = vmatprep.subr.mxu0 0.0
    %1417 = vmatpush2.xpose.msra.mxu0 0.0
    %1418 = vmatprep.subr.mxu0 0.0
    %1419 = vmatpush2.xpose.msra.mxu0 0.0
    %1420 = vmatprep.subr.mxu0 0.0
    %1421 = vmatpush2.xpose.msra.mxu0 0.0
    %1422 = vmatprep.subr.mxu0 0.0
    %1423 = vmatpush2.xpose.msra.mxu0 0.0
    %1424 = vmatprep.subr.mxu0 0.0
    %1425 = vmatpush2.xpose.msra.mxu0 0.0
    %1426 = vmatprep.subr.mxu0 0.0
    %1427 = vmatpush2.xpose.msra.mxu0 0.0
    %1428 = vmatprep.subr.mxu0 0.0
    %1429 = vmatpush2.xpose.msra.mxu0 0.0
    %1430 = vmatprep.subr.mxu0 0.0
    %1431 = vmatpush2.xpose.msra.mxu0 0.0
    %1432 = vmatprep.subr.mxu0 0.0
    %1433 = vmatpush2.xpose.msra.mxu0 0.0
    %1434 = vmatprep.mubr.f32.mxu0 0.0
    %1435 = vmatmul.mubr.f32.gmra.mxu0 %v1368
    %v1436 = vpop.f32.mrf.mxu0
    %v1437 = vadd.f32 0.0, %v1436
    %v1438 = vpop.f32.mrf.mxu0
    %1439 = vdwg.mxu0
    %v1440 = vpack.c.bf16 %v1437, %v1437
    %v1441 = vrot.slane %v1315, 2
    %1442 = vrot.lane.b32.xlu0 %v1441, 96
    %v1443 = vpop.permute.xlu0 %1442
    %v1445 = vsel %vm340, %v1440, 0
    %v1448 = vsel %vm344, %v1443, 0
    %1450 = vmatprep.subr.bf16.mxu0 0
    %1451 = vmatpush1.bf16.msra.mxu0 0
    %1452 = vmatprep.subr.bf16.mxu0 0
    %1453 = vmatpush1.bf16.msra.mxu0 0
    %1454 = vmatprep.subr.bf16.mxu0 0
    %1455 = vmatpush1.bf16.msra.mxu0 0
    %1456 = vmatprep.subr.bf16.mxu0 0
    %1457 = vmatpush1.bf16.msra.mxu0 0
    %1458 = vmatprep.subr.bf16.mxu0 0
    %1459 = vmatpush1.bf16.msra.mxu0 0
    %1460 = vmatprep.subr.bf16.mxu0 0
    %1461 = vmatpush1.bf16.msra.mxu0 0
    %1462 = vmatprep.subr.bf16.mxu0 0
    %1463 = vmatpush1.bf16.msra.mxu0 0
    %1464 = vmatprep.subr.bf16.mxu0 0
    %1465 = vmatpush1.bf16.msra.mxu0 %v1448
    %1466 = vmatprep.subr.bf16.mxu0 0
    %1467 = vmatpush2.bf16.msra.mxu0 0
    %1468 = vmatprep.subr.bf16.mxu0 0
    %1469 = vmatpush2.bf16.msra.mxu0 0
    %1470 = vmatprep.subr.bf16.mxu0 0
    %1471 = vmatpush2.bf16.msra.mxu0 0
    %1472 = vmatprep.subr.bf16.mxu0 0
    %1473 = vmatpush2.bf16.msra.mxu0 0
    %1474 = vmatprep.subr.bf16.mxu0 0
    %1475 = vmatpush2.bf16.msra.mxu0 0
    %1476 = vmatprep.subr.bf16.mxu0 0
    %1477 = vmatpush2.bf16.msra.mxu0 0
    %1478 = vmatprep.subr.bf16.mxu0 0
    %1479 = vmatpush2.bf16.msra.mxu0 0
    %1480 = vmatprep.subr.bf16.mxu0 0
    %1481 = vmatpush2.bf16.msra.mxu0 0
    %1482 = vmatprep.mubr.bf16.mxu0 0
    %1483 = vmatmul.mubr.bf16.gmra.mxu0 %v1445
    %v1484 = vpop.f32.mrf.mxu0
    %v1485 = vadd.f32 0.0, %v1484
    %v1486 = vpop.f32.mrf.mxu0
    %v1487 = vpop.f32.mrf.mxu0
    %v1488 = vpop.f32.mrf.mxu0
    %1489 = vdwg.mxu0
    %v1491 = vrot.slane %v1485, 4
    %v1493 = vsel %vm516, %v1360, %v1491
    %v1494 = vpack.c.bf16 %v1493, %v1493
    %v1496 = vsel %vm159, %v1494, 0
    %1498 = vmatprep.subr.bf16.mxu0 0
    %1499 = vmatpush1.bf16.msra.mxu0 0
    %1500 = vmatprep.subr.bf16.mxu0 0
    %1501 = vmatpush1.bf16.msra.mxu0 0
    %1502 = vmatprep.subr.bf16.mxu0 0
    %1503 = vmatpush1.bf16.msra.mxu0 0
    %1504 = vmatprep.subr.bf16.mxu0 0
    %1505 = vmatpush1.bf16.msra.mxu0 0
    %1506 = vmatprep.subr.bf16.mxu0 0
    %1507 = vmatpush1.bf16.msra.mxu0 0
    %1508 = vmatprep.subr.bf16.mxu0 0
    %1509 = vmatpush1.bf16.msra.mxu0 0
    %1510 = vmatprep.subr.bf16.mxu0 0
    %1511 = vmatpush1.bf16.msra.mxu0 %v528
    %1512 = vmatprep.subr.bf16.mxu0 0
    %1513 = vmatpush1.bf16.msra.mxu0 %v527
    %1514 = vmatprep.subr.bf16.mxu0 0
    %1515 = vmatpush2.bf16.msra.mxu0 0
    %1516 = vmatprep.subr.bf16.mxu0 0
    %1517 = vmatpush2.bf16.msra.mxu0 0
    %1518 = vmatprep.subr.bf16.mxu0 0
    %1519 = vmatpush2.bf16.msra.mxu0 0
    %1520 = vmatprep.subr.bf16.mxu0 0
    %1521 = vmatpush2.bf16.msra.mxu0 0
    %1522 = vmatprep.subr.bf16.mxu0 0
    %1523 = vmatpush2.bf16.msra.mxu0 0
    %1524 = vmatprep.subr.bf16.mxu0 0
    %1525 = vmatpush2.bf16.msra.mxu0 0
    %1526 = vmatprep.subr.bf16.mxu0 0
    %1527 = vmatpush2.bf16.msra.mxu0 0
    %1528 = vmatprep.subr.bf16.mxu0 0
    %1529 = vmatpush2.bf16.msra.mxu0 0
    %1530 = vmatprep.mubr.bf16.mxu0 0
    %1531 = vmatmul.mubr.bf16.gmra.mxu0 %v1496
    %v1532 = vpop.f32.mrf.mxu0
    %v1533 = vadd.f32 0.0, %v1532
    %v1534 = vpop.f32.mrf.mxu0
    %v1535 = vpop.f32.mrf.mxu0
    %v1536 = vpop.f32.mrf.mxu0
    %1537 = vdwg.mxu0
    %v1538 = vmax.f32 %v1533, 0.0
    %v1539 = vpack.c.bf16 %v1538, %v1538
    %v1541 = vsel %vm159, %v1539, 0
    %1543 = vmatprep.subr.bf16.mxu0 0
    %1544 = vmatpush1.bf16.msra.mxu0 0
    %1545 = vmatprep.subr.bf16.mxu0 0
    %1546 = vmatpush1.bf16.msra.mxu0 0
    %1547 = vmatprep.subr.bf16.mxu0 0
    %1548 = vmatpush1.bf16.msra.mxu0 0
    %1549 = vmatprep.subr.bf16.mxu0 0
    %1550 = vmatpush1.bf16.msra.mxu0 0
    %1551 = vmatprep.subr.bf16.mxu0 0
    %1552 = vmatpush1.bf16.msra.mxu0 0
    %1553 = vmatprep.subr.bf16.mxu0 0
    %1554 = vmatpush1.bf16.msra.mxu0 0
    %1555 = vmatprep.subr.bf16.mxu0 0
    %1556 = vmatpush1.bf16.msra.mxu0 %v585
    %1557 = vmatprep.subr.bf16.mxu0 0
    %1558 = vmatpush1.bf16.msra.mxu0 %v584
    %1559 = vmatprep.subr.bf16.mxu0 0
    %1560 = vmatpush2.bf16.msra.mxu0 0
    %1561 = vmatprep.subr.bf16.mxu0 0
    %1562 = vmatpush2.bf16.msra.mxu0 0
    %1563 = vmatprep.subr.bf16.mxu0 0
    %1564 = vmatpush2.bf16.msra.mxu0 0
    %1565 = vmatprep.subr.bf16.mxu0 0
    %1566 = vmatpush2.bf16.msra.mxu0 0
    %1567 = vmatprep.subr.bf16.mxu0 0
    %1568 = vmatpush2.bf16.msra.mxu0 0
    %1569 = vmatprep.subr.bf16.mxu0 0
    %1570 = vmatpush2.bf16.msra.mxu0 0
    %1571 = vmatprep.subr.bf16.mxu0 0
    %1572 = vmatpush2.bf16.msra.mxu0 0
    %1573 = vmatprep.subr.bf16.mxu0 0
    %1574 = vmatpush2.bf16.msra.mxu0 0
    %1575 = vmatprep.mubr.bf16.mxu0 0
    %1576 = vmatmul.mubr.bf16.gmra.mxu0 %v1541
    %v1577 = vpop.f32.mrf.mxu0
    %v1578 = vadd.f32 0.0, %v1577
    %v1579 = vpop.f32.mrf.mxu0
    %v1580 = vpop.f32.mrf.mxu0
    %v1581 = vpop.f32.mrf.mxu0
    %1582 = vdwg.mxu0
    %v1583 = vsel %vm159, %v1578, 0.0
    %v1584 = vrot.slane %v1583, 4
    %v1585 = vadd.f32 %v1583, %v1584
    %v1586 = vrot.slane %v1585, 2
    %v1587 = vadd.f32 %v1585, %v1586
    %v1588 = vrot.slane %v1587, 1
    %v1589 = vadd.f32 %v1587, %v1588
    %v1590 = vmul.f32 %v1589, 0.125
    %v1591 = vmul.f32 %v1578, %v1578
    %v1592 = vsel %vm159, %v1591, 0.0
    %v1593 = vrot.slane %v1592, 4
    %v1594 = vadd.f32 %v1592, %v1593
    %v1595 = vrot.slane %v1594, 2
    %v1596 = vadd.f32 %v1594, %v1595
    %v1597 = vrot.slane %v1596, 1
    %v1598 = vadd.f32 %v1596, %v1597
    %v1599 = vmul.f32 %v1598, 0.125
    %v1600 = vmul.f32 %v1590, %v1590
    %v1601 = vsub.f32 %v1599, %v1600
    %v1602 = vsub.f32 %v1578, %v1590
    %v1603 = vadd.f32 %v1601, 1e-05
    %v1604 = vrsqrt.pop %v1603
    %v1605 = vmul.f32 %v1602, %v1604
    %v1606 = vmul.f32 %v1605, %v658
    %v1607 = vadd.f32 %v1606, %v665
    %1609 = vrot.lane.b32.xlu0 %v1607, 32
    %v1610 = vpop.permute.xlu0 %1609
    %v1612 = vadd.f32 %v1216, %v1610
    %v1613 = vpack.c.bf16 %v1612, %v1612
    %1615 = vrot.lane.b32.xlu0 %v1613, 96
    %v1616 = vpop.permute.xlu0 %1615
    %v1618 = vsel %vm159, %v1616, 0
    %1620 = vmatprep.subr.bf16.mxu0 0
    %1621 = vmatpush1.bf16.msra.mxu0 0
    %1622 = vmatprep.subr.bf16.mxu0 0
    %1623 = vmatpush1.bf16.msra.mxu0 0
    %1624 = vmatprep.subr.bf16.mxu0 0
    %1625 = vmatpush1.bf16.msra.mxu0 0
    %1626 = vmatprep.subr.bf16.mxu0 0
    %1627 = vmatpush1.bf16.msra.mxu0 0
    %1628 = vmatprep.subr.bf16.mxu0 0
    %1629 = vmatpush1.bf16.msra.mxu0 0
    %1630 = vmatprep.subr.bf16.mxu0 0
    %1631 = vmatpush1.bf16.msra.mxu0 0
    %1632 = vmatprep.subr.bf16.mxu0 0
    %1633 = vmatpush1.bf16.msra.mxu0 %v156
    %1634 = vmatprep.subr.bf16.mxu0 0
    %1635 = vmatpush1.bf16.msra.mxu0 %v155
    %1636 = vmatprep.subr.bf16.mxu0 0
    %1637 = vmatpush2.bf16.msra.mxu0 0
    %1638 = vmatprep.subr.bf16.mxu0 0
    %1639 = vmatpush2.bf16.msra.mxu0 0
    %1640 = vmatprep.subr.bf16.mxu0 0
    %1641 = vmatpush2.bf16.msra.mxu0 0
    %1642 = vmatprep.subr.bf16.mxu0 0
    %1643 = vmatpush2.bf16.msra.mxu0 0
    %1644 = vmatprep.subr.bf16.mxu0 0
    %1645 = vmatpush2.bf16.msra.mxu0 0
    %1646 = vmatprep.subr.bf16.mxu0 0
    %1647 = vmatpush2.bf16.msra.mxu0 0
    %1648 = vmatprep.subr.bf16.mxu0 0
    %1649 = vmatpush2.bf16.msra.mxu0 0
    %1650 = vmatprep.subr.bf16.mxu0 0
    %1651 = vmatpush2.bf16.msra.mxu0 0
    %1652 = vmatprep.mubr.bf16.mxu0 0
    %1653 = vmatmul.mubr.bf16.gmra.mxu0 %v1618
    %v1654 = vpop.f32.mrf.mxu0
    %v1655 = vadd.f32 0.0, %v1654
    %v1656 = vpop.f32.mrf.mxu0
    %v1657 = vpop.f32.mrf.mxu0
    %v1658 = vpop.f32.mrf.mxu0
    %1659 = vdwg.mxu0
    %v1660 = vadd.f32 %v125, %v1655
    %v1661 = vxor.u32 %v1660, 2147483648
    %v1662 = vmul.f32 %v1661, 1.442695
    %v1663 = vpow.pop %v1662
    %v1664 = vadd.f32 %v1663, 1.0
    %v1665 = vrcp.pop %v1664
    %v1666 = vmul.f32 1.0, %v1665
    %v1667 = vadd.f32 %v1655, %v216
    %1669 = vrot.lane.b32.xlu0 %v1667, 64
    %v1670 = vpop.permute.xlu0 %1669
    %v1672 = vmul.f32 %v1666, %v1670
    %1674 = vrot.lane.b32.xlu0 %v1672, 64
    %v1675 = vpop.permute.xlu0 %1674
    %v1677 = vadd.f32 %v142, %v1675
    %v1678 = vtanh.pop %v1677
    %v1679 = vsub.f32 1.0, %v1666
    %1681 = vrot.lane.b32.xlu0 %v1678, 96
    %v1682 = vpop.permute.xlu0 %1681
    %v1684 = vmul.f32 %v1679, %v1682
    %v1685 = vmul.f32 %v1666, %v1612
    %v1686 = vadd.f32 %v1684, %v1685
    %1688 = vrot.lane.b32.xlu0 %v1686, 96
    %v1689 = vpop.permute.xlu0 %1688
    %v1691 = vsel %vm159, %v1689, 0.0
    %1692 = vadd.xlane.f32.xlu0 %v1691
    %v1693 = vpop.xlane.xlu0 %1692
    %v1694 = vmul.f32 %v1686, %v1686
    %1696 = vrot.lane.b32.xlu0 %v1694, 96
    %v1697 = vpop.permute.xlu0 %1696
    %v1699 = vsel %vm159, %v1697, 0.0
    %1700 = vadd.xlane.f32.xlu0 %v1699
    %v1701 = vpop.xlane.xlu0 %1700
    %v1702 = vmul.f32 %v1693, 0.03125
    %v1703 = vmul.f32 %v1702, %v1693
    %v1704 = vsub.f32 %v1701, %v1703
    %v1705 = vsub.f32 %v1686, %v1702
    %v1706 = vadd.f32 %v1704, 1e-08
    %v1707 = vrsqrt.pop %v1706
    %v1708 = vmul.f32 %v1705, %v1707
    %1710 = vrot.lane.b32.xlu0 %v1708, 96
    %v1711 = vpop.permute.xlu0 %1710
    %v1712 = vsel %vm159, %v1711, 0
    %1714 = vmatprep.subr.mxu0 0.0
    %1715 = vmatpush1.xpose.msra.mxu0 0.0
    %1716 = vmatprep.subr.mxu0 0.0
    %1717 = vmatpush1.xpose.msra.mxu0 0.0
    %1718 = vmatprep.subr.mxu0 0.0
    %1719 = vmatpush1.xpose.msra.mxu0 0.0
    %1720 = vmatprep.subr.mxu0 0.0
    %1721 = vmatpush1.xpose.msra.mxu0 0.0
    %1722 = vmatprep.subr.mxu0 0.0
    %1723 = vmatpush1.xpose.msra.mxu0 0.0
    %1724 = vmatprep.subr.mxu0 0.0
    %1725 = vmatpush1.xpose.msra.mxu0 0.0
    %1726 = vmatprep.subr.mxu0 0.0
    %1727 = vmatpush1.xpose.msra.mxu0 0.0
    %1728 = vmatprep.subr.mxu0 0.0
    %1729 = vmatpush1.xpose.msra.mxu0 0.0
    %1730 = vmatprep.subr.mxu0 0.0
    %1731 = vmatpush1.xpose.msra.mxu0 0.0
    %1732 = vmatprep.subr.mxu0 0.0
    %1733 = vmatpush1.xpose.msra.mxu0 0.0
    %1734 = vmatprep.subr.mxu0 0.0
    %1735 = vmatpush1.xpose.msra.mxu0 0.0
    %1736 = vmatprep.subr.mxu0 0.0
    %1737 = vmatpush1.xpose.msra.mxu0 0.0
    %1738 = vmatprep.subr.mxu0 0.0
    %1739 = vmatpush1.xpose.msra.mxu0 0.0
    %1740 = vmatprep.subr.mxu0 0.0
    %1741 = vmatpush1.xpose.msra.mxu0 0.0
    %1742 = vmatprep.subr.mxu0 0.0
    %1743 = vmatpush1.xpose.msra.mxu0 0.0
    %1744 = vmatprep.subr.mxu0 0.0
    %1745 = vmatpush1.xpose.msra.mxu0 %v1712
    %1746 = vmatprep.subr.mxu0 0.0
    %1747 = vmatpush2.xpose.msra.mxu0 0.0
    %1748 = vmatprep.subr.mxu0 0.0
    %1749 = vmatpush2.xpose.msra.mxu0 0.0
    %1750 = vmatprep.subr.mxu0 0.0
    %1751 = vmatpush2.xpose.msra.mxu0 0.0
    %1752 = vmatprep.subr.mxu0 0.0
    %1753 = vmatpush2.xpose.msra.mxu0 0.0
    %1754 = vmatprep.subr.mxu0 0.0
    %1755 = vmatpush2.xpose.msra.mxu0 0.0
    %1756 = vmatprep.subr.mxu0 0.0
    %1757 = vmatpush2.xpose.msra.mxu0 0.0
    %1758 = vmatprep.subr.mxu0 0.0
    %1759 = vmatpush2.xpose.msra.mxu0 0.0
    %1760 = vmatprep.subr.mxu0 0.0
    %1761 = vmatpush2.xpose.msra.mxu0 0.0
    %1762 = vmatprep.subr.mxu0 0.0
    %1763 = vmatpush2.xpose.msra.mxu0 0.0
    %1764 = vmatprep.subr.mxu0 0.0
    %1765 = vmatpush2.xpose.msra.mxu0 0.0
    %1766 = vmatprep.subr.mxu0 0.0
    %1767 = vmatpush2.xpose.msra.mxu0 0.0
    %1768 = vmatprep.subr.mxu0 0.0
    %1769 = vmatpush2.xpose.msra.mxu0 0.0
    %1770 = vmatprep.subr.mxu0 0.0
    %1771 = vmatpush2.xpose.msra.mxu0 0.0
    %1772 = vmatprep.subr.mxu0 0.0
    %1773 = vmatpush2.xpose.msra.mxu0 0.0
    %1774 = vmatprep.subr.mxu0 0.0
    %1775 = vmatpush2.xpose.msra.mxu0 0.0
    %1776 = vmatprep.subr.mxu0 0.0
    %1777 = vmatpush2.xpose.msra.mxu0 0.0
    %1778 = vmatprep.mubr.f32.mxu0 0.0
    %1779 = vmatmul.mubr.f32.gmra.mxu0 %v1712
    %v1780 = vpop.f32.mrf.mxu0
    %v1781 = vadd.f32 0.0, %v1780
    %v1782 = vpop.f32.mrf.mxu0
    %1783 = vdwg.mxu0
    %v1784 = vpack.c.bf16 %v1781, %v1781
    %v1785 = vpack.c.bf16 %v1686, %v1686
    %1787 = vrot.lane.b32.xlu0 %v1785, 96
    %v1788 = vpop.permute.xlu0 %1787
    %v1790 = vsel %vm340, %v1784, 0
    %v1793 = vsel %vm344, %v1788, 0
    %1795 = vmatprep.subr.bf16.mxu0 0
    %1796 = vmatpush1.bf16.msra.mxu0 0
    %1797 = vmatprep.subr.bf16.mxu0 0
    %1798 = vmatpush1.bf16.msra.mxu0 0
    %1799 = vmatprep.subr.bf16.mxu0 0
    %1800 = vmatpush1.bf16.msra.mxu0 0
    %1801 = vmatprep.subr.bf16.mxu0 0
    %1802 = vmatpush1.bf16.msra.mxu0 0
    %1803 = vmatprep.subr.bf16.mxu0 0
    %1804 = vmatpush1.bf16.msra.mxu0 0
    %1805 = vmatprep.subr.bf16.mxu0 0
    %1806 = vmatpush1.bf16.msra.mxu0 0
    %1807 = vmatprep.subr.bf16.mxu0 0
    %1808 = vmatpush1.bf16.msra.mxu0 0
    %1809 = vmatprep.subr.bf16.mxu0 0
    %1810 = vmatpush1.bf16.msra.mxu0 %v1793
    %1811 = vmatprep.subr.bf16.mxu0 0
    %1812 = vmatpush2.bf16.msra.mxu0 0
    %1813 = vmatprep.subr.bf16.mxu0 0
    %1814 = vmatpush2.bf16.msra.mxu0 0
    %1815 = vmatprep.subr.bf16.mxu0 0
    %1816 = vmatpush2.bf16.msra.mxu0 0
    %1817 = vmatprep.subr.bf16.mxu0 0
    %1818 = vmatpush2.bf16.msra.mxu0 0
    %1819 = vmatprep.subr.bf16.mxu0 0
    %1820 = vmatpush2.bf16.msra.mxu0 0
    %1821 = vmatprep.subr.bf16.mxu0 0
    %1822 = vmatpush2.bf16.msra.mxu0 0
    %1823 = vmatprep.subr.bf16.mxu0 0
    %1824 = vmatpush2.bf16.msra.mxu0 0
    %1825 = vmatprep.subr.bf16.mxu0 0
    %1826 = vmatpush2.bf16.msra.mxu0 0
    %1827 = vmatprep.mubr.bf16.mxu0 0
    %1828 = vmatmul.mubr.bf16.gmra.mxu0 %v1790
    %v1829 = vpop.f32.mrf.mxu0
    %v1830 = vadd.f32 0.0, %v1829
    %v1831 = vpop.f32.mrf.mxu0
    %v1832 = vpop.f32.mrf.mxu0
    %v1833 = vpop.f32.mrf.mxu0
    %1834 = vdwg.mxu0
    %v1835 = vrot.slane %v1708, 4
    %1836 = vrot.lane.b32.xlu0 %v1835, 96
    %v1837 = vpop.permute.xlu0 %1836
    %v1838 = vsel %vm159, %v1837, 0
    %1840 = vmatprep.subr.mxu0 0.0
    %1841 = vmatpush1.xpose.msra.mxu0 0.0
    %1842 = vmatprep.subr.mxu0 0.0
    %1843 = vmatpush1.xpose.msra.mxu0 0.0
    %1844 = vmatprep.subr.mxu0 0.0
    %1845 = vmatpush1.xpose.msra.mxu0 0.0
    %1846 = vmatprep.subr.mxu0 0.0
    %1847 = vmatpush1.xpose.msra.mxu0 0.0
    %1848 = vmatprep.subr.mxu0 0.0
    %1849 = vmatpush1.xpose.msra.mxu0 0.0
    %1850 = vmatprep.subr.mxu0 0.0
    %1851 = vmatpush1.xpose.msra.mxu0 0.0
    %1852 = vmatprep.subr.mxu0 0.0
    %1853 = vmatpush1.xpose.msra.mxu0 0.0
    %1854 = vmatprep.subr.mxu0 0.0
    %1855 = vmatpush1.xpose.msra.mxu0 0.0
    %1856 = vmatprep.subr.mxu0 0.0
    %1857 = vmatpush1.xpose.msra.mxu0 0.0
    %1858 = vmatprep.subr.mxu0 0.0
    %1859 = vmatpush1.xpose.msra.mxu0 0.0
    %1860 = vmatprep.subr.mxu0 0.0
    %1861 = vmatpush1.xpose.msra.mxu0 0.0
    %1862 = vmatprep.subr.mxu0 0.0
    %1863 = vmatpush1.xpose.msra.mxu0 0.0
    %1864 = vmatprep.subr.mxu0 0.0
    %1865 = vmatpush1.xpose.msra.mxu0 0.0
    %1866 = vmatprep.subr.mxu0 0.0
    %1867 = vmatpush1.xpose.msra.mxu0 0.0
    %1868 = vmatprep.subr.mxu0 0.0
    %1869 = vmatpush1.xpose.msra.mxu0 0.0
    %1870 = vmatprep.subr.mxu0 0.0
    %1871 = vmatpush1.xpose.msra.mxu0 %v1838
    %1872 = vmatprep.subr.mxu0 0.0
    %1873 = vmatpush2.xpose.msra.mxu0 0.0
    %1874 = vmatprep.subr.mxu0 0.0
    %1875 = vmatpush2.xpose.msra.mxu0 0.0
    %1876 = vmatprep.subr.mxu0 0.0
    %1877 = vmatpush2.xpose.msra.mxu0 0.0
    %1878 = vmatprep.subr.mxu0 0.0
    %1879 = vmatpush2.xpose.msra.mxu0 0.0
    %1880 = vmatprep.subr.mxu0 0.0
    %1881 = vmatpush2.xpose.msra.mxu0 0.0
    %1882 = vmatprep.subr.mxu0 0.0
    %1883 = vmatpush2.xpose.msra.mxu0 0.0
    %1884 = vmatprep.subr.mxu0 0.0
    %1885 = vmatpush2.xpose.msra.mxu0 0.0
    %1886 = vmatprep.subr.mxu0 0.0
    %1887 = vmatpush2.xpose.msra.mxu0 0.0
    %1888 = vmatprep.subr.mxu0 0.0
    %1889 = vmatpush2.xpose.msra.mxu0 0.0
    %1890 = vmatprep.subr.mxu0 0.0
    %1891 = vmatpush2.xpose.msra.mxu0 0.0
    %1892 = vmatprep.subr.mxu0 0.0
    %1893 = vmatpush2.xpose.msra.mxu0 0.0
    %1894 = vmatprep.subr.mxu0 0.0
    %1895 = vmatpush2.xpose.msra.mxu0 0.0
    %1896 = vmatprep.subr.mxu0 0.0
    %1897 = vmatpush2.xpose.msra.mxu0 0.0
    %1898 = vmatprep.subr.mxu0 0.0
    %1899 = vmatpush2.xpose.msra.mxu0 0.0
    %1900 = vmatprep.subr.mxu0 0.0
    %1901 = vmatpush2.xpose.msra.mxu0 0.0
    %1902 = vmatprep.subr.mxu0 0.0
    %1903 = vmatpush2.xpose.msra.mxu0 0.0
    %1904 = vmatprep.mubr.f32.mxu0 0.0
    %1905 = vmatmul.mubr.f32.gmra.mxu0 %v1838
    %v1906 = vpop.f32.mrf.mxu0
    %v1907 = vadd.f32 0.0, %v1906
    %v1908 = vpop.f32.mrf.mxu0
    %1909 = vdwg.mxu0
    %v1910 = vpack.c.bf16 %v1907, %v1907
    %v1911 = vrot.slane %v1785, 2
    %1912 = vrot.lane.b32.xlu0 %v1911, 96
    %v1913 = vpop.permute.xlu0 %1912
    %v1915 = vsel %vm340, %v1910, 0
    %v1918 = vsel %vm344, %v1913, 0
    %1920 = vmatprep.subr.bf16.mxu0 0
    %1921 = vmatpush1.bf16.msra.mxu0 0
    %1922 = vmatprep.subr.bf16.mxu0 0
    %1923 = vmatpush1.bf16.msra.mxu0 0
    %1924 = vmatprep.subr.bf16.mxu0 0
    %1925 = vmatpush1.bf16.msra.mxu0 0
    %1926 = vmatprep.subr.bf16.mxu0 0
    %1927 = vmatpush1.bf16.msra.mxu0 0
    %1928 = vmatprep.subr.bf16.mxu0 0
    %1929 = vmatpush1.bf16.msra.mxu0 0
    %1930 = vmatprep.subr.bf16.mxu0 0
    %1931 = vmatpush1.bf16.msra.mxu0 0
    %1932 = vmatprep.subr.bf16.mxu0 0
    %1933 = vmatpush1.bf16.msra.mxu0 0
    %1934 = vmatprep.subr.bf16.mxu0 0
    %1935 = vmatpush1.bf16.msra.mxu0 %v1918
    %1936 = vmatprep.subr.bf16.mxu0 0
    %1937 = vmatpush2.bf16.msra.mxu0 0
    %1938 = vmatprep.subr.bf16.mxu0 0
    %1939 = vmatpush2.bf16.msra.mxu0 0
    %1940 = vmatprep.subr.bf16.mxu0 0
    %1941 = vmatpush2.bf16.msra.mxu0 0
    %1942 = vmatprep.subr.bf16.mxu0 0
    %1943 = vmatpush2.bf16.msra.mxu0 0
    %1944 = vmatprep.subr.bf16.mxu0 0
    %1945 = vmatpush2.bf16.msra.mxu0 0
    %1946 = vmatprep.subr.bf16.mxu0 0
    %1947 = vmatpush2.bf16.msra.mxu0 0
    %1948 = vmatprep.subr.bf16.mxu0 0
    %1949 = vmatpush2.bf16.msra.mxu0 0
    %1950 = vmatprep.subr.bf16.mxu0 0
    %1951 = vmatpush2.bf16.msra.mxu0 0
    %1952 = vmatprep.mubr.bf16.mxu0 0
    %1953 = vmatmul.mubr.bf16.gmra.mxu0 %v1915
    %v1954 = vpop.f32.mrf.mxu0
    %v1955 = vadd.f32 0.0, %v1954
    %v1956 = vpop.f32.mrf.mxu0
    %v1957 = vpop.f32.mrf.mxu0
    %v1958 = vpop.f32.mrf.mxu0
    %1959 = vdwg.mxu0
    %v1961 = vrot.slane %v1955, 4
    %v1963 = vsel %vm516, %v1830, %v1961
    %v1964 = vpack.c.bf16 %v1963, %v1963
    %v1966 = vsel %vm159, %v1964, 0
    %1968 = vmatprep.subr.bf16.mxu0 0
    %1969 = vmatpush1.bf16.msra.mxu0 0
    %1970 = vmatprep.subr.bf16.mxu0 0
    %1971 = vmatpush1.bf16.msra.mxu0 0
    %1972 = vmatprep.subr.bf16.mxu0 0
    %1973 = vmatpush1.bf16.msra.mxu0 0
    %1974 = vmatprep.subr.bf16.mxu0 0
    %1975 = vmatpush1.bf16.msra.mxu0 0
    %1976 = vmatprep.subr.bf16.mxu0 0
    %1977 = vmatpush1.bf16.msra.mxu0 0
    %1978 = vmatprep.subr.bf16.mxu0 0
    %1979 = vmatpush1.bf16.msra.mxu0 0
    %1980 = vmatprep.subr.bf16.mxu0 0
    %1981 = vmatpush1.bf16.msra.mxu0 %v528
    %1982 = vmatprep.subr.bf16.mxu0 0
    %1983 = vmatpush1.bf16.msra.mxu0 %v527
    %1984 = vmatprep.subr.bf16.mxu0 0
    %1985 = vmatpush2.bf16.msra.mxu0 0
    %1986 = vmatprep.subr.bf16.mxu0 0
    %1987 = vmatpush2.bf16.msra.mxu0 0
    %1988 = vmatprep.subr.bf16.mxu0 0
    %1989 = vmatpush2.bf16.msra.mxu0 0
    %1990 = vmatprep.subr.bf16.mxu0 0
    %1991 = vmatpush2.bf16.msra.mxu0 0
    %1992 = vmatprep.subr.bf16.mxu0 0
    %1993 = vmatpush2.bf16.msra.mxu0 0
    %1994 = vmatprep.subr.bf16.mxu0 0
    %1995 = vmatpush2.bf16.msra.mxu0 0
    %1996 = vmatprep.subr.bf16.mxu0 0
    %1997 = vmatpush2.bf16.msra.mxu0 0
    %1998 = vmatprep.subr.bf16.mxu0 0
    %1999 = vmatpush2.bf16.msra.mxu0 0
    %2000 = vmatprep.mubr.bf16.mxu0 0
    %2001 = vmatmul.mubr.bf16.gmra.mxu0 %v1966
    %v2002 = vpop.f32.mrf.mxu0
    %v2003 = vadd.f32 0.0, %v2002
    %v2004 = vpop.f32.mrf.mxu0
    %v2005 = vpop.f32.mrf.mxu0
    %v2006 = vpop.f32.mrf.mxu0
    %2007 = vdwg.mxu0
    %v2008 = vmax.f32 %v2003, 0.0
    %v2009 = vpack.c.bf16 %v2008, %v2008
    %v2011 = vsel %vm159, %v2009, 0
    %2013 = vmatprep.subr.bf16.mxu0 0
    %2014 = vmatpush1.bf16.msra.mxu0 0
    %2015 = vmatprep.subr.bf16.mxu0 0
    %2016 = vmatpush1.bf16.msra.mxu0 0
    %2017 = vmatprep.subr.bf16.mxu0 0
    %2018 = vmatpush1.bf16.msra.mxu0 0
    %2019 = vmatprep.subr.bf16.mxu0 0
    %2020 = vmatpush1.bf16.msra.mxu0 0
    %2021 = vmatprep.subr.bf16.mxu0 0
    %2022 = vmatpush1.bf16.msra.mxu0 0
    %2023 = vmatprep.subr.bf16.mxu0 0
    %2024 = vmatpush1.bf16.msra.mxu0 0
    %2025 = vmatprep.subr.bf16.mxu0 0
    %2026 = vmatpush1.bf16.msra.mxu0 %v585
    %2027 = vmatprep.subr.bf16.mxu0 0
    %2028 = vmatpush1.bf16.msra.mxu0 %v584
    %2029 = vmatprep.subr.bf16.mxu0 0
    %2030 = vmatpush2.bf16.msra.mxu0 0
    %2031 = vmatprep.subr.bf16.mxu0 0
    %2032 = vmatpush2.bf16.msra.mxu0 0
    %2033 = vmatprep.subr.bf16.mxu0 0
    %2034 = vmatpush2.bf16.msra.mxu0 0
    %2035 = vmatprep.subr.bf16.mxu0 0
    %2036 = vmatpush2.bf16.msra.mxu0 0
    %2037 = vmatprep.subr.bf16.mxu0 0
    %2038 = vmatpush2.bf16.msra.mxu0 0
    %2039 = vmatprep.subr.bf16.mxu0 0
    %2040 = vmatpush2.bf16.msra.mxu0 0
    %2041 = vmatprep.subr.bf16.mxu0 0
    %2042 = vmatpush2.bf16.msra.mxu0 0
    %2043 = vmatprep.subr.bf16.mxu0 0
    %2044 = vmatpush2.bf16.msra.mxu0 0
    %2045 = vmatprep.mubr.bf16.mxu0 0
    %2046 = vmatmul.mubr.bf16.gmra.mxu0 %v2011
    %v2047 = vpop.f32.mrf.mxu0
    %v2048 = vadd.f32 0.0, %v2047
    %v2049 = vpop.f32.mrf.mxu0
    %v2050 = vpop.f32.mrf.mxu0
    %v2051 = vpop.f32.mrf.mxu0
    %2052 = vdwg.mxu0
    %v2053 = vsel %vm159, %v2048, 0.0
    %v2054 = vrot.slane %v2053, 4
    %v2055 = vadd.f32 %v2053, %v2054
    %v2056 = vrot.slane %v2055, 2
    %v2057 = vadd.f32 %v2055, %v2056
    %v2058 = vrot.slane %v2057, 1
    %v2059 = vadd.f32 %v2057, %v2058
    %v2060 = vmul.f32 %v2059, 0.125
    %v2061 = vmul.f32 %v2048, %v2048
    %v2062 = vsel %vm159, %v2061, 0.0
    %v2063 = vrot.slane %v2062, 4
    %v2064 = vadd.f32 %v2062, %v2063
    %v2065 = vrot.slane %v2064, 2
    %v2066 = vadd.f32 %v2064, %v2065
    %v2067 = vrot.slane %v2066, 1
    %v2068 = vadd.f32 %v2066, %v2067
    %v2069 = vmul.f32 %v2068, 0.125
    %v2070 = vmul.f32 %v2060, %v2060
    %v2071 = vsub.f32 %v2069, %v2070
    %v2072 = vsub.f32 %v2048, %v2060
    %v2073 = vadd.f32 %v2071, 1e-05
    %v2074 = vrsqrt.pop %v2073
    %v2075 = vmul.f32 %v2072, %v2074
    %v2076 = vmul.f32 %v2075, %v658
    %v2077 = vadd.f32 %v2076, %v665
    %2079 = vrot.lane.b32.xlu0 %v2077, 32
    %v2080 = vpop.permute.xlu0 %2079
    %v2082 = vadd.f32 %v1686, %v2080
    %v2083 = vpack.c.bf16 %v2082, %v2082
    %2085 = vrot.lane.b32.xlu0 %v2083, 96
    %v2086 = vpop.permute.xlu0 %2085
    %v2088 = vsel %vm159, %v2086, 0
    %2090 = vmatprep.subr.bf16.mxu0 0
    %2091 = vmatpush1.bf16.msra.mxu0 0
    %2092 = vmatprep.subr.bf16.mxu0 0
    %2093 = vmatpush1.bf16.msra.mxu0 0
    %2094 = vmatprep.subr.bf16.mxu0 0
    %2095 = vmatpush1.bf16.msra.mxu0 0
    %2096 = vmatprep.subr.bf16.mxu0 0
    %2097 = vmatpush1.bf16.msra.mxu0 0
    %2098 = vmatprep.subr.bf16.mxu0 0
    %2099 = vmatpush1.bf16.msra.mxu0 0
    %2100 = vmatprep.subr.bf16.mxu0 0
    %2101 = vmatpush1.bf16.msra.mxu0 0
    %2102 = vmatprep.subr.bf16.mxu0 0
    %2103 = vmatpush1.bf16.msra.mxu0 %v156
    %2104 = vmatprep.subr.bf16.mxu0 0
    %2105 = vmatpush1.bf16.msra.mxu0 %v155
    %2106 = vmatprep.subr.bf16.mxu0 0
    %2107 = vmatpush2.bf16.msra.mxu0 0
    %2108 = vmatprep.subr.bf16.mxu0 0
    %2109 = vmatpush2.bf16.msra.mxu0 0
    %2110 = vmatprep.subr.bf16.mxu0 0
    %2111 = vmatpush2.bf16.msra.mxu0 0
    %2112 = vmatprep.subr.bf16.mxu0 0
    %2113 = vmatpush2.bf16.msra.mxu0 0
    %2114 = vmatprep.subr.bf16.mxu0 0
    %2115 = vmatpush2.bf16.msra.mxu0 0
    %2116 = vmatprep.subr.bf16.mxu0 0
    %2117 = vmatpush2.bf16.msra.mxu0 0
    %2118 = vmatprep.subr.bf16.mxu0 0
    %2119 = vmatpush2.bf16.msra.mxu0 0
    %2120 = vmatprep.subr.bf16.mxu0 0
    %2121 = vmatpush2.bf16.msra.mxu0 0
    %2122 = vmatprep.mubr.bf16.mxu0 0
    %2123 = vmatmul.mubr.bf16.gmra.mxu0 %v2088
    %v2124 = vpop.f32.mrf.mxu0
    %v2125 = vadd.f32 0.0, %v2124
    %v2126 = vpop.f32.mrf.mxu0
    %v2127 = vpop.f32.mrf.mxu0
    %v2128 = vpop.f32.mrf.mxu0
    %2129 = vdwg.mxu0
    %v2130 = vadd.f32 %v126, %v2125
    %v2131 = vxor.u32 %v2130, 2147483648
    %v2132 = vmul.f32 %v2131, 1.442695
    %v2133 = vpow.pop %v2132
    %v2134 = vadd.f32 %v2133, 1.0
    %v2135 = vrcp.pop %v2134
    %v2136 = vmul.f32 1.0, %v2135
    %v2137 = vadd.f32 %v2125, %v216
    %2139 = vrot.lane.b32.xlu0 %v2137, 64
    %v2140 = vpop.permute.xlu0 %2139
    %v2142 = vmul.f32 %v2136, %v2140
    %2144 = vrot.lane.b32.xlu0 %v2142, 64
    %v2145 = vpop.permute.xlu0 %2144
    %v2147 = vadd.f32 %v143, %v2145
    %v2148 = vtanh.pop %v2147
    %v2149 = vsub.f32 1.0, %v2136
    %2151 = vrot.lane.b32.xlu0 %v2148, 96
    %v2152 = vpop.permute.xlu0 %2151
    %v2154 = vmul.f32 %v2149, %v2152
    %v2155 = vmul.f32 %v2136, %v2082
    %v2156 = vadd.f32 %v2154, %v2155
    %2158 = vrot.lane.b32.xlu0 %v2156, 96
    %v2159 = vpop.permute.xlu0 %2158
    %v2161 = vsel %vm159, %v2159, 0.0
    %2162 = vadd.xlane.f32.xlu0 %v2161
    %v2163 = vpop.xlane.xlu0 %2162
    %v2164 = vmul.f32 %v2156, %v2156
    %2166 = vrot.lane.b32.xlu0 %v2164, 96
    %v2167 = vpop.permute.xlu0 %2166
    %v2169 = vsel %vm159, %v2167, 0.0
    %2170 = vadd.xlane.f32.xlu0 %v2169
    %v2171 = vpop.xlane.xlu0 %2170
    %v2172 = vmul.f32 %v2163, 0.03125
    %v2173 = vmul.f32 %v2172, %v2163
    %v2174 = vsub.f32 %v2171, %v2173
    %v2175 = vsub.f32 %v2156, %v2172
    %v2176 = vadd.f32 %v2174, 1e-08
    %v2177 = vrsqrt.pop %v2176
    %v2178 = vmul.f32 %v2175, %v2177
    %2180 = vrot.lane.b32.xlu0 %v2178, 96
    %v2181 = vpop.permute.xlu0 %2180
    %v2182 = vsel %vm159, %v2181, 0
    %2184 = vmatprep.subr.mxu0 0.0
    %2185 = vmatpush1.xpose.msra.mxu0 0.0
    %2186 = vmatprep.subr.mxu0 0.0
    %2187 = vmatpush1.xpose.msra.mxu0 0.0
    %2188 = vmatprep.subr.mxu0 0.0
    %2189 = vmatpush1.xpose.msra.mxu0 0.0
    %2190 = vmatprep.subr.mxu0 0.0
    %2191 = vmatpush1.xpose.msra.mxu0 0.0
    %2192 = vmatprep.subr.mxu0 0.0
    %2193 = vmatpush1.xpose.msra.mxu0 0.0
    %2194 = vmatprep.subr.mxu0 0.0
    %2195 = vmatpush1.xpose.msra.mxu0 0.0
    %2196 = vmatprep.subr.mxu0 0.0
    %2197 = vmatpush1.xpose.msra.mxu0 0.0
    %2198 = vmatprep.subr.mxu0 0.0
    %2199 = vmatpush1.xpose.msra.mxu0 0.0
    %2200 = vmatprep.subr.mxu0 0.0
    %2201 = vmatpush1.xpose.msra.mxu0 0.0
    %2202 = vmatprep.subr.mxu0 0.0
    %2203 = vmatpush1.xpose.msra.mxu0 0.0
    %2204 = vmatprep.subr.mxu0 0.0
    %2205 = vmatpush1.xpose.msra.mxu0 0.0
    %2206 = vmatprep.subr.mxu0 0.0
    %2207 = vmatpush1.xpose.msra.mxu0 0.0
    %2208 = vmatprep.subr.mxu0 0.0
    %2209 = vmatpush1.xpose.msra.mxu0 0.0
    %2210 = vmatprep.subr.mxu0 0.0
    %2211 = vmatpush1.xpose.msra.mxu0 0.0
    %2212 = vmatprep.subr.mxu0 0.0
    %2213 = vmatpush1.xpose.msra.mxu0 0.0
    %2214 = vmatprep.subr.mxu0 0.0
    %2215 = vmatpush1.xpose.msra.mxu0 %v2182
    %2216 = vmatprep.subr.mxu0 0.0
    %2217 = vmatpush2.xpose.msra.mxu0 0.0
    %2218 = vmatprep.subr.mxu0 0.0
    %2219 = vmatpush2.xpose.msra.mxu0 0.0
    %2220 = vmatprep.subr.mxu0 0.0
    %2221 = vmatpush2.xpose.msra.mxu0 0.0
    %2222 = vmatprep.subr.mxu0 0.0
    %2223 = vmatpush2.xpose.msra.mxu0 0.0
    %2224 = vmatprep.subr.mxu0 0.0
    %2225 = vmatpush2.xpose.msra.mxu0 0.0
    %2226 = vmatprep.subr.mxu0 0.0
    %2227 = vmatpush2.xpose.msra.mxu0 0.0
    %2228 = vmatprep.subr.mxu0 0.0
    %2229 = vmatpush2.xpose.msra.mxu0 0.0
    %2230 = vmatprep.subr.mxu0 0.0
    %2231 = vmatpush2.xpose.msra.mxu0 0.0
    %2232 = vmatprep.subr.mxu0 0.0
    %2233 = vmatpush2.xpose.msra.mxu0 0.0
    %2234 = vmatprep.subr.mxu0 0.0
    %2235 = vmatpush2.xpose.msra.mxu0 0.0
    %2236 = vmatprep.subr.mxu0 0.0
    %2237 = vmatpush2.xpose.msra.mxu0 0.0
    %2238 = vmatprep.subr.mxu0 0.0
    %2239 = vmatpush2.xpose.msra.mxu0 0.0
    %2240 = vmatprep.subr.mxu0 0.0
    %2241 = vmatpush2.xpose.msra.mxu0 0.0
    %2242 = vmatprep.subr.mxu0 0.0
    %2243 = vmatpush2.xpose.msra.mxu0 0.0
    %2244 = vmatprep.subr.mxu0 0.0
    %2245 = vmatpush2.xpose.msra.mxu0 0.0
    %2246 = vmatprep.subr.mxu0 0.0
    %2247 = vmatpush2.xpose.msra.mxu0 0.0
    %2248 = vmatprep.mubr.f32.mxu0 0.0
    %2249 = vmatmul.mubr.f32.gmra.mxu0 %v2182
    %v2250 = vpop.f32.mrf.mxu0
    %v2251 = vadd.f32 0.0, %v2250
    %v2252 = vpop.f32.mrf.mxu0
    %2253 = vdwg.mxu0
    %v2254 = vpack.c.bf16 %v2251, %v2251
    %v2255 = vpack.c.bf16 %v2156, %v2156
    %2257 = vrot.lane.b32.xlu0 %v2255, 96
    %v2258 = vpop.permute.xlu0 %2257
    %v2260 = vsel %vm340, %v2254, 0
    %v2263 = vsel %vm344, %v2258, 0
    %2265 = vmatprep.subr.bf16.mxu0 0
    %2266 = vmatpush1.bf16.msra.mxu0 0
    %2267 = vmatprep.subr.bf16.mxu0 0
    %2268 = vmatpush1.bf16.msra.mxu0 0
    %2269 = vmatprep.subr.bf16.mxu0 0
    %2270 = vmatpush1.bf16.msra.mxu0 0
    %2271 = vmatprep.subr.bf16.mxu0 0
    %2272 = vmatpush1.bf16.msra.mxu0 0
    %2273 = vmatprep.subr.bf16.mxu0 0
    %2274 = vmatpush1.bf16.msra.mxu0 0
    %2275 = vmatprep.subr.bf16.mxu0 0
    %2276 = vmatpush1.bf16.msra.mxu0 0
    %2277 = vmatprep.subr.bf16.mxu0 0
    %2278 = vmatpush1.bf16.msra.mxu0 0
    %2279 = vmatprep.subr.bf16.mxu0 0
    %2280 = vmatpush1.bf16.msra.mxu0 %v2263
    %2281 = vmatprep.subr.bf16.mxu0 0
    %2282 = vmatpush2.bf16.msra.mxu0 0
    %2283 = vmatprep.subr.bf16.mxu0 0
    %2284 = vmatpush2.bf16.msra.mxu0 0
    %2285 = vmatprep.subr.bf16.mxu0 0
    %2286 = vmatpush2.bf16.msra.mxu0 0
    %2287 = vmatprep.subr.bf16.mxu0 0
    %2288 = vmatpush2.bf16.msra.mxu0 0
    %2289 = vmatprep.subr.bf16.mxu0 0
    %2290 = vmatpush2.bf16.msra.mxu0 0
    %2291 = vmatprep.subr.bf16.mxu0 0
    %2292 = vmatpush2.bf16.msra.mxu0 0
    %2293 = vmatprep.subr.bf16.mxu0 0
    %2294 = vmatpush2.bf16.msra.mxu0 0
    %2295 = vmatprep.subr.bf16.mxu0 0
    %2296 = vmatpush2.bf16.msra.mxu0 0
    %2297 = vmatprep.mubr.bf16.mxu0 0
    %2298 = vmatmul.mubr.bf16.gmra.mxu0 %v2260
    %v2299 = vpop.f32.mrf.mxu0
    %v2300 = vadd.f32 0.0, %v2299
    %v2301 = vpop.f32.mrf.mxu0
    %v2302 = vpop.f32.mrf.mxu0
    %v2303 = vpop.f32.mrf.mxu0
    %2304 = vdwg.mxu0
    %v2305 = vrot.slane %v2178, 4
    %2306 = vrot.lane.b32.xlu0 %v2305, 96
    %v2307 = vpop.permute.xlu0 %2306
    %v2308 = vsel %vm159, %v2307, 0
    %2310 = vmatprep.subr.mxu0 0.0
    %2311 = vmatpush1.xpose.msra.mxu0 0.0
    %2312 = vmatprep.subr.mxu0 0.0
    %2313 = vmatpush1.xpose.msra.mxu0 0.0
    %2314 = vmatprep.subr.mxu0 0.0
    %2315 = vmatpush1.xpose.msra.mxu0 0.0
    %2316 = vmatprep.subr.mxu0 0.0
    %2317 = vmatpush1.xpose.msra.mxu0 0.0
    %2318 = vmatprep.subr.mxu0 0.0
    %2319 = vmatpush1.xpose.msra.mxu0 0.0
    %2320 = vmatprep.subr.mxu0 0.0
    %2321 = vmatpush1.xpose.msra.mxu0 0.0
    %2322 = vmatprep.subr.mxu0 0.0
    %2323 = vmatpush1.xpose.msra.mxu0 0.0
    %2324 = vmatprep.subr.mxu0 0.0
    %2325 = vmatpush1.xpose.msra.mxu0 0.0
    %2326 = vmatprep.subr.mxu0 0.0
    %2327 = vmatpush1.xpose.msra.mxu0 0.0
    %2328 = vmatprep.subr.mxu0 0.0
    %2329 = vmatpush1.xpose.msra.mxu0 0.0
    %2330 = vmatprep.subr.mxu0 0.0
    %2331 = vmatpush1.xpose.msra.mxu0 0.0
    %2332 = vmatprep.subr.mxu0 0.0
    %2333 = vmatpush1.xpose.msra.mxu0 0.0
    %2334 = vmatprep.subr.mxu0 0.0
    %2335 = vmatpush1.xpose.msra.mxu0 0.0
    %2336 = vmatprep.subr.mxu0 0.0
    %2337 = vmatpush1.xpose.msra.mxu0 0.0
    %2338 = vmatprep.subr.mxu0 0.0
    %2339 = vmatpush1.xpose.msra.mxu0 0.0
    %2340 = vmatprep.subr.mxu0 0.0
    %2341 = vmatpush1.xpose.msra.mxu0 %v2308
    %2342 = vmatprep.subr.mxu0 0.0
    %2343 = vmatpush2.xpose.msra.mxu0 0.0
    %2344 = vmatprep.subr.mxu0 0.0
    %2345 = vmatpush2.xpose.msra.mxu0 0.0
    %2346 = vmatprep.subr.mxu0 0.0
    %2347 = vmatpush2.xpose.msra.mxu0 0.0
    %2348 = vmatprep.subr.mxu0 0.0
    %2349 = vmatpush2.xpose.msra.mxu0 0.0
    %2350 = vmatprep.subr.mxu0 0.0
    %2351 = vmatpush2.xpose.msra.mxu0 0.0
    %2352 = vmatprep.subr.mxu0 0.0
    %2353 = vmatpush2.xpose.msra.mxu0 0.0
    %2354 = vmatprep.subr.mxu0 0.0
    %2355 = vmatpush2.xpose.msra.mxu0 0.0
    %2356 = vmatprep.subr.mxu0 0.0
    %2357 = vmatpush2.xpose.msra.mxu0 0.0
    %2358 = vmatprep.subr.mxu0 0.0
    %2359 = vmatpush2.xpose.msra.mxu0 0.0
    %2360 = vmatprep.subr.mxu0 0.0
    %2361 = vmatpush2.xpose.msra.mxu0 0.0
    %2362 = vmatprep.subr.mxu0 0.0
    %2363 = vmatpush2.xpose.msra.mxu0 0.0
    %2364 = vmatprep.subr.mxu0 0.0
    %2365 = vmatpush2.xpose.msra.mxu0 0.0
    %2366 = vmatprep.subr.mxu0 0.0
    %2367 = vmatpush2.xpose.msra.mxu0 0.0
    %2368 = vmatprep.subr.mxu0 0.0
    %2369 = vmatpush2.xpose.msra.mxu0 0.0
    %2370 = vmatprep.subr.mxu0 0.0
    %2371 = vmatpush2.xpose.msra.mxu0 0.0
    %2372 = vmatprep.subr.mxu0 0.0
    %2373 = vmatpush2.xpose.msra.mxu0 0.0
    %2374 = vmatprep.mubr.f32.mxu0 0.0
    %2375 = vmatmul.mubr.f32.gmra.mxu0 %v2308
    %v2376 = vpop.f32.mrf.mxu0
    %v2377 = vadd.f32 0.0, %v2376
    %v2378 = vpop.f32.mrf.mxu0
    %2379 = vdwg.mxu0
    %v2380 = vpack.c.bf16 %v2377, %v2377
    %v2381 = vrot.slane %v2255, 2
    %2382 = vrot.lane.b32.xlu0 %v2381, 96
    %v2383 = vpop.permute.xlu0 %2382
    %v2385 = vsel %vm340, %v2380, 0
    %v2388 = vsel %vm344, %v2383, 0
    %2390 = vmatprep.subr.bf16.mxu0 0
    %2391 = vmatpush1.bf16.msra.mxu0 0
    %2392 = vmatprep.subr.bf16.mxu0 0
    %2393 = vmatpush1.bf16.msra.mxu0 0
    %2394 = vmatprep.subr.bf16.mxu0 0
    %2395 = vmatpush1.bf16.msra.mxu0 0
    %2396 = vmatprep.subr.bf16.mxu0 0
    %2397 = vmatpush1.bf16.msra.mxu0 0
    %2398 = vmatprep.subr.bf16.mxu0 0
    %2399 = vmatpush1.bf16.msra.mxu0 0
    %2400 = vmatprep.subr.bf16.mxu0 0
    %2401 = vmatpush1.bf16.msra.mxu0 0
    %2402 = vmatprep.subr.bf16.mxu0 0
    %2403 = vmatpush1.bf16.msra.mxu0 0
    %2404 = vmatprep.subr.bf16.mxu0 0
    %2405 = vmatpush1.bf16.msra.mxu0 %v2388
    %2406 = vmatprep.subr.bf16.mxu0 0
    %2407 = vmatpush2.bf16.msra.mxu0 0
    %2408 = vmatprep.subr.bf16.mxu0 0
    %2409 = vmatpush2.bf16.msra.mxu0 0
    %2410 = vmatprep.subr.bf16.mxu0 0
    %2411 = vmatpush2.bf16.msra.mxu0 0
    %2412 = vmatprep.subr.bf16.mxu0 0
    %2413 = vmatpush2.bf16.msra.mxu0 0
    %2414 = vmatprep.subr.bf16.mxu0 0
    %2415 = vmatpush2.bf16.msra.mxu0 0
    %2416 = vmatprep.subr.bf16.mxu0 0
    %2417 = vmatpush2.bf16.msra.mxu0 0
    %2418 = vmatprep.subr.bf16.mxu0 0
    %2419 = vmatpush2.bf16.msra.mxu0 0
    %2420 = vmatprep.subr.bf16.mxu0 0
    %2421 = vmatpush2.bf16.msra.mxu0 0
    %2422 = vmatprep.mubr.bf16.mxu0 0
    %2423 = vmatmul.mubr.bf16.gmra.mxu0 %v2385
    %v2424 = vpop.f32.mrf.mxu0
    %v2425 = vadd.f32 0.0, %v2424
    %v2426 = vpop.f32.mrf.mxu0
    %v2427 = vpop.f32.mrf.mxu0
    %v2428 = vpop.f32.mrf.mxu0
    %2429 = vdwg.mxu0
    %v2431 = vrot.slane %v2425, 4
    %v2433 = vsel %vm516, %v2300, %v2431
    %v2434 = vpack.c.bf16 %v2433, %v2433
    %v2436 = vsel %vm159, %v2434, 0
    %2438 = vmatprep.subr.bf16.mxu0 0
    %2439 = vmatpush1.bf16.msra.mxu0 0
    %2440 = vmatprep.subr.bf16.mxu0 0
    %2441 = vmatpush1.bf16.msra.mxu0 0
    %2442 = vmatprep.subr.bf16.mxu0 0
    %2443 = vmatpush1.bf16.msra.mxu0 0
    %2444 = vmatprep.subr.bf16.mxu0 0
    %2445 = vmatpush1.bf16.msra.mxu0 0
    %2446 = vmatprep.subr.bf16.mxu0 0
    %2447 = vmatpush1.bf16.msra.mxu0 0
    %2448 = vmatprep.subr.bf16.mxu0 0
    %2449 = vmatpush1.bf16.msra.mxu0 0
    %2450 = vmatprep.subr.bf16.mxu0 0
    %2451 = vmatpush1.bf16.msra.mxu0 %v528
    %2452 = vmatprep.subr.bf16.mxu0 0
    %2453 = vmatpush1.bf16.msra.mxu0 %v527
    %2454 = vmatprep.subr.bf16.mxu0 0
    %2455 = vmatpush2.bf16.msra.mxu0 0
    %2456 = vmatprep.subr.bf16.mxu0 0
    %2457 = vmatpush2.bf16.msra.mxu0 0
    %2458 = vmatprep.subr.bf16.mxu0 0
    %2459 = vmatpush2.bf16.msra.mxu0 0
    %2460 = vmatprep.subr.bf16.mxu0 0
    %2461 = vmatpush2.bf16.msra.mxu0 0
    %2462 = vmatprep.subr.bf16.mxu0 0
    %2463 = vmatpush2.bf16.msra.mxu0 0
    %2464 = vmatprep.subr.bf16.mxu0 0
    %2465 = vmatpush2.bf16.msra.mxu0 0
    %2466 = vmatprep.subr.bf16.mxu0 0
    %2467 = vmatpush2.bf16.msra.mxu0 0
    %2468 = vmatprep.subr.bf16.mxu0 0
    %2469 = vmatpush2.bf16.msra.mxu0 0
    %2470 = vmatprep.mubr.bf16.mxu0 0
    %2471 = vmatmul.mubr.bf16.gmra.mxu0 %v2436
    %v2472 = vpop.f32.mrf.mxu0
    %v2473 = vadd.f32 0.0, %v2472
    %v2474 = vpop.f32.mrf.mxu0
    %v2475 = vpop.f32.mrf.mxu0
    %v2476 = vpop.f32.mrf.mxu0
    %2477 = vdwg.mxu0
    %v2478 = vmax.f32 %v2473, 0.0
    %v2479 = vpack.c.bf16 %v2478, %v2478
    %v2481 = vsel %vm159, %v2479, 0
    %2483 = vmatprep.subr.bf16.mxu0 0
    %2484 = vmatpush1.bf16.msra.mxu0 0
    %2485 = vmatprep.subr.bf16.mxu0 0
    %2486 = vmatpush1.bf16.msra.mxu0 0
    %2487 = vmatprep.subr.bf16.mxu0 0
    %2488 = vmatpush1.bf16.msra.mxu0 0
    %2489 = vmatprep.subr.bf16.mxu0 0
    %2490 = vmatpush1.bf16.msra.mxu0 0
    %2491 = vmatprep.subr.bf16.mxu0 0
    %2492 = vmatpush1.bf16.msra.mxu0 0
    %2493 = vmatprep.subr.bf16.mxu0 0
    %2494 = vmatpush1.bf16.msra.mxu0 0
    %2495 = vmatprep.subr.bf16.mxu0 0
    %2496 = vmatpush1.bf16.msra.mxu0 %v585
    %2497 = vmatprep.subr.bf16.mxu0 0
    %2498 = vmatpush1.bf16.msra.mxu0 %v584
    %2499 = vmatprep.subr.bf16.mxu0 0
    %2500 = vmatpush2.bf16.msra.mxu0 0
    %2501 = vmatprep.subr.bf16.mxu0 0
    %2502 = vmatpush2.bf16.msra.mxu0 0
    %2503 = vmatprep.subr.bf16.mxu0 0
    %2504 = vmatpush2.bf16.msra.mxu0 0
    %2505 = vmatprep.subr.bf16.mxu0 0
    %2506 = vmatpush2.bf16.msra.mxu0 0
    %2507 = vmatprep.subr.bf16.mxu0 0
    %2508 = vmatpush2.bf16.msra.mxu0 0
    %2509 = vmatprep.subr.bf16.mxu0 0
    %2510 = vmatpush2.bf16.msra.mxu0 0
    %2511 = vmatprep.subr.bf16.mxu0 0
    %2512 = vmatpush2.bf16.msra.mxu0 0
    %2513 = vmatprep.subr.bf16.mxu0 0
    %2514 = vmatpush2.bf16.msra.mxu0 0
    %2515 = vmatprep.mubr.bf16.mxu0 0
    %2516 = vmatmul.mubr.bf16.gmra.mxu0 %v2481
    %v2517 = vpop.f32.mrf.mxu0
    %v2518 = vadd.f32 0.0, %v2517
    %v2519 = vpop.f32.mrf.mxu0
    %v2520 = vpop.f32.mrf.mxu0
    %v2521 = vpop.f32.mrf.mxu0
    %2522 = vdwg.mxu0
    %v2523 = vsel %vm159, %v2518, 0.0
    %v2524 = vrot.slane %v2523, 4
    %v2525 = vadd.f32 %v2523, %v2524
    %v2526 = vrot.slane %v2525, 2
    %v2527 = vadd.f32 %v2525, %v2526
    %v2528 = vrot.slane %v2527, 1
    %v2529 = vadd.f32 %v2527, %v2528
    %v2530 = vmul.f32 %v2529, 0.125
    %v2531 = vmul.f32 %v2518, %v2518
    %v2532 = vsel %vm159, %v2531, 0.0
    %v2533 = vrot.slane %v2532, 4
    %v2534 = vadd.f32 %v2532, %v2533
    %v2535 = vrot.slane %v2534, 2
    %v2536 = vadd.f32 %v2534, %v2535
    %v2537 = vrot.slane %v2536, 1
    %v2538 = vadd.f32 %v2536, %v2537
    %v2539 = vmul.f32 %v2538, 0.125
    %v2540 = vmul.f32 %v2530, %v2530
    %v2541 = vsub.f32 %v2539, %v2540
    %v2542 = vsub.f32 %v2518, %v2530
    %v2543 = vadd.f32 %v2541, 1e-05
    %v2544 = vrsqrt.pop %v2543
    %v2545 = vmul.f32 %v2542, %v2544
    %v2546 = vmul.f32 %v2545, %v658
    %v2547 = vadd.f32 %v2546, %v665
    %2549 = vrot.lane.b32.xlu0 %v2547, 32
    %v2550 = vpop.permute.xlu0 %2549
    %v2552 = vadd.f32 %v2156, %v2550
    %v2553 = vpack.c.bf16 %v2552, %v2552
    %2555 = vrot.lane.b32.xlu0 %v2553, 96
    %v2556 = vpop.permute.xlu0 %2555
    %v2558 = vsel %vm159, %v2556, 0
    %2560 = vmatprep.subr.bf16.mxu0 0
    %2561 = vmatpush1.bf16.msra.mxu0 0
    %2562 = vmatprep.subr.bf16.mxu0 0
    %2563 = vmatpush1.bf16.msra.mxu0 0
    %2564 = vmatprep.subr.bf16.mxu0 0
    %2565 = vmatpush1.bf16.msra.mxu0 0
    %2566 = vmatprep.subr.bf16.mxu0 0
    %2567 = vmatpush1.bf16.msra.mxu0 0
    %2568 = vmatprep.subr.bf16.mxu0 0
    %2569 = vmatpush1.bf16.msra.mxu0 0
    %2570 = vmatprep.subr.bf16.mxu0 0
    %2571 = vmatpush1.bf16.msra.mxu0 0
    %2572 = vmatprep.subr.bf16.mxu0 0
    %2573 = vmatpush1.bf16.msra.mxu0 %v156
    %2574 = vmatprep.subr.bf16.mxu0 0
    %2575 = vmatpush1.bf16.msra.mxu0 %v155
    %2576 = vmatprep.subr.bf16.mxu0 0
    %2577 = vmatpush2.bf16.msra.mxu0 0
    %2578 = vmatprep.subr.bf16.mxu0 0
    %2579 = vmatpush2.bf16.msra.mxu0 0
    %2580 = vmatprep.subr.bf16.mxu0 0
    %2581 = vmatpush2.bf16.msra.mxu0 0
    %2582 = vmatprep.subr.bf16.mxu0 0
    %2583 = vmatpush2.bf16.msra.mxu0 0
    %2584 = vmatprep.subr.bf16.mxu0 0
    %2585 = vmatpush2.bf16.msra.mxu0 0
    %2586 = vmatprep.subr.bf16.mxu0 0
    %2587 = vmatpush2.bf16.msra.mxu0 0
    %2588 = vmatprep.subr.bf16.mxu0 0
    %2589 = vmatpush2.bf16.msra.mxu0 0
    %2590 = vmatprep.subr.bf16.mxu0 0
    %2591 = vmatpush2.bf16.msra.mxu0 0
    %2592 = vmatprep.mubr.bf16.mxu0 0
    %2593 = vmatmul.mubr.bf16.gmra.mxu0 %v2558
    %v2594 = vpop.f32.mrf.mxu0
    %v2595 = vadd.f32 0.0, %v2594
    %v2596 = vpop.f32.mrf.mxu0
    %v2597 = vpop.f32.mrf.mxu0
    %v2598 = vpop.f32.mrf.mxu0
    %2599 = vdwg.mxu0
    %v2600 = vadd.f32 %v127, %v2595
    %v2601 = vxor.u32 %v2600, 2147483648
    %v2602 = vmul.f32 %v2601, 1.442695
    %v2603 = vpow.pop %v2602
    %v2604 = vadd.f32 %v2603, 1.0
    %v2605 = vrcp.pop %v2604
    %v2606 = vmul.f32 1.0, %v2605
    %v2607 = vadd.f32 %v2595, %v216
    %2609 = vrot.lane.b32.xlu0 %v2607, 64
    %v2610 = vpop.permute.xlu0 %2609
    %v2612 = vmul.f32 %v2606, %v2610
    %2614 = vrot.lane.b32.xlu0 %v2612, 64
    %v2615 = vpop.permute.xlu0 %2614
    %v2617 = vadd.f32 %v144, %v2615
    %v2618 = vtanh.pop %v2617
    %v2619 = vsub.f32 1.0, %v2606
    %2621 = vrot.lane.b32.xlu0 %v2618, 96
    %v2622 = vpop.permute.xlu0 %2621
    %v2624 = vmul.f32 %v2619, %v2622
    %v2625 = vmul.f32 %v2606, %v2552
    %v2626 = vadd.f32 %v2624, %v2625
    %2628 = vrot.lane.b32.xlu0 %v2626, 96
    %v2629 = vpop.permute.xlu0 %2628
    %v2631 = vsel %vm159, %v2629, 0.0
    %2632 = vadd.xlane.f32.xlu0 %v2631
    %v2633 = vpop.xlane.xlu0 %2632
    %v2634 = vmul.f32 %v2626, %v2626
    %2636 = vrot.lane.b32.xlu0 %v2634, 96
    %v2637 = vpop.permute.xlu0 %2636
    %v2639 = vsel %vm159, %v2637, 0.0
    %2640 = vadd.xlane.f32.xlu0 %v2639
    %v2641 = vpop.xlane.xlu0 %2640
    %v2642 = vmul.f32 %v2633, 0.03125
    %v2643 = vmul.f32 %v2642, %v2633
    %v2644 = vsub.f32 %v2641, %v2643
    %v2645 = vsub.f32 %v2626, %v2642
    %v2646 = vadd.f32 %v2644, 1e-08
    %v2647 = vrsqrt.pop %v2646
    %v2648 = vmul.f32 %v2645, %v2647
    %2650 = vrot.lane.b32.xlu0 %v2648, 96
    %v2651 = vpop.permute.xlu0 %2650
    %v2652 = vsel %vm159, %v2651, 0
    %2654 = vmatprep.subr.mxu0 0.0
    %2655 = vmatpush1.xpose.msra.mxu0 0.0
    %2656 = vmatprep.subr.mxu0 0.0
    %2657 = vmatpush1.xpose.msra.mxu0 0.0
    %2658 = vmatprep.subr.mxu0 0.0
    %2659 = vmatpush1.xpose.msra.mxu0 0.0
    %2660 = vmatprep.subr.mxu0 0.0
    %2661 = vmatpush1.xpose.msra.mxu0 0.0
    %2662 = vmatprep.subr.mxu0 0.0
    %2663 = vmatpush1.xpose.msra.mxu0 0.0
    %2664 = vmatprep.subr.mxu0 0.0
    %2665 = vmatpush1.xpose.msra.mxu0 0.0
    %2666 = vmatprep.subr.mxu0 0.0
    %2667 = vmatpush1.xpose.msra.mxu0 0.0
    %2668 = vmatprep.subr.mxu0 0.0
    %2669 = vmatpush1.xpose.msra.mxu0 0.0
    %2670 = vmatprep.subr.mxu0 0.0
    %2671 = vmatpush1.xpose.msra.mxu0 0.0
    %2672 = vmatprep.subr.mxu0 0.0
    %2673 = vmatpush1.xpose.msra.mxu0 0.0
    %2674 = vmatprep.subr.mxu0 0.0
    %2675 = vmatpush1.xpose.msra.mxu0 0.0
    %2676 = vmatprep.subr.mxu0 0.0
    %2677 = vmatpush1.xpose.msra.mxu0 0.0
    %2678 = vmatprep.subr.mxu0 0.0
    %2679 = vmatpush1.xpose.msra.mxu0 0.0
    %2680 = vmatprep.subr.mxu0 0.0
    %2681 = vmatpush1.xpose.msra.mxu0 0.0
    %2682 = vmatprep.subr.mxu0 0.0
    %2683 = vmatpush1.xpose.msra.mxu0 0.0
    %2684 = vmatprep.subr.mxu0 0.0
    %2685 = vmatpush1.xpose.msra.mxu0 %v2652
    %2686 = vmatprep.subr.mxu0 0.0
    %2687 = vmatpush2.xpose.msra.mxu0 0.0
    %2688 = vmatprep.subr.mxu0 0.0
    %2689 = vmatpush2.xpose.msra.mxu0 0.0
    %2690 = vmatprep.subr.mxu0 0.0
    %2691 = vmatpush2.xpose.msra.mxu0 0.0
    %2692 = vmatprep.subr.mxu0 0.0
    %2693 = vmatpush2.xpose.msra.mxu0 0.0
    %2694 = vmatprep.subr.mxu0 0.0
    %2695 = vmatpush2.xpose.msra.mxu0 0.0
    %2696 = vmatprep.subr.mxu0 0.0
    %2697 = vmatpush2.xpose.msra.mxu0 0.0
    %2698 = vmatprep.subr.mxu0 0.0
    %2699 = vmatpush2.xpose.msra.mxu0 0.0
    %2700 = vmatprep.subr.mxu0 0.0
    %2701 = vmatpush2.xpose.msra.mxu0 0.0
    %2702 = vmatprep.subr.mxu0 0.0
    %2703 = vmatpush2.xpose.msra.mxu0 0.0
    %2704 = vmatprep.subr.mxu0 0.0
    %2705 = vmatpush2.xpose.msra.mxu0 0.0
    %2706 = vmatprep.subr.mxu0 0.0
    %2707 = vmatpush2.xpose.msra.mxu0 0.0
    %2708 = vmatprep.subr.mxu0 0.0
    %2709 = vmatpush2.xpose.msra.mxu0 0.0
    %2710 = vmatprep.subr.mxu0 0.0
    %2711 = vmatpush2.xpose.msra.mxu0 0.0
    %2712 = vmatprep.subr.mxu0 0.0
    %2713 = vmatpush2.xpose.msra.mxu0 0.0
    %2714 = vmatprep.subr.mxu0 0.0
    %2715 = vmatpush2.xpose.msra.mxu0 0.0
    %2716 = vmatprep.subr.mxu0 0.0
    %2717 = vmatpush2.xpose.msra.mxu0 0.0
    %2718 = vmatprep.mubr.f32.mxu0 0.0
    %2719 = vmatmul.mubr.f32.gmra.mxu0 %v2652
    %v2720 = vpop.f32.mrf.mxu0
    %v2721 = vadd.f32 0.0, %v2720
    %v2722 = vpop.f32.mrf.mxu0
    %2723 = vdwg.mxu0
    %v2724 = vpack.c.bf16 %v2721, %v2721
    %v2725 = vpack.c.bf16 %v2626, %v2626
    %2727 = vrot.lane.b32.xlu0 %v2725, 96
    %v2728 = vpop.permute.xlu0 %2727
    %v2730 = vsel %vm340, %v2724, 0
    %v2733 = vsel %vm344, %v2728, 0
    %2735 = vmatprep.subr.bf16.mxu0 0
    %2736 = vmatpush1.bf16.msra.mxu0 0
    %2737 = vmatprep.subr.bf16.mxu0 0
    %2738 = vmatpush1.bf16.msra.mxu0 0
    %2739 = vmatprep.subr.bf16.mxu0 0
    %2740 = vmatpush1.bf16.msra.mxu0 0
    %2741 = vmatprep.subr.bf16.mxu0 0
    %2742 = vmatpush1.bf16.msra.mxu0 0
    %2743 = vmatprep.subr.bf16.mxu0 0
    %2744 = vmatpush1.bf16.msra.mxu0 0
    %2745 = vmatprep.subr.bf16.mxu0 0
    %2746 = vmatpush1.bf16.msra.mxu0 0
    %2747 = vmatprep.subr.bf16.mxu0 0
    %2748 = vmatpush1.bf16.msra.mxu0 0
    %2749 = vmatprep.subr.bf16.mxu0 0
    %2750 = vmatpush1.bf16.msra.mxu0 %v2733
    %2751 = vmatprep.subr.bf16.mxu0 0
    %2752 = vmatpush2.bf16.msra.mxu0 0
    %2753 = vmatprep.subr.bf16.mxu0 0
    %2754 = vmatpush2.bf16.msra.mxu0 0
    %2755 = vmatprep.subr.bf16.mxu0 0
    %2756 = vmatpush2.bf16.msra.mxu0 0
    %2757 = vmatprep.subr.bf16.mxu0 0
    %2758 = vmatpush2.bf16.msra.mxu0 0
    %2759 = vmatprep.subr.bf16.mxu0 0
    %2760 = vmatpush2.bf16.msra.mxu0 0
    %2761 = vmatprep.subr.bf16.mxu0 0
    %2762 = vmatpush2.bf16.msra.mxu0 0
    %2763 = vmatprep.subr.bf16.mxu0 0
    %2764 = vmatpush2.bf16.msra.mxu0 0
    %2765 = vmatprep.subr.bf16.mxu0 0
    %2766 = vmatpush2.bf16.msra.mxu0 0
    %2767 = vmatprep.mubr.bf16.mxu0 0
    %2768 = vmatmul.mubr.bf16.gmra.mxu0 %v2730
    %v2769 = vpop.f32.mrf.mxu0
    %v2770 = vadd.f32 0.0, %v2769
    %v2771 = vpop.f32.mrf.mxu0
    %v2772 = vpop.f32.mrf.mxu0
    %v2773 = vpop.f32.mrf.mxu0
    %2774 = vdwg.mxu0
    %v2775 = vrot.slane %v2648, 4
    %2776 = vrot.lane.b32.xlu0 %v2775, 96
    %v2777 = vpop.permute.xlu0 %2776
    %v2778 = vsel %vm159, %v2777, 0
    %2780 = vmatprep.subr.mxu0 0.0
    %2781 = vmatpush1.xpose.msra.mxu0 0.0
    %2782 = vmatprep.subr.mxu0 0.0
    %2783 = vmatpush1.xpose.msra.mxu0 0.0
    %2784 = vmatprep.subr.mxu0 0.0
    %2785 = vmatpush1.xpose.msra.mxu0 0.0
    %2786 = vmatprep.subr.mxu0 0.0
    %2787 = vmatpush1.xpose.msra.mxu0 0.0
    %2788 = vmatprep.subr.mxu0 0.0
    %2789 = vmatpush1.xpose.msra.mxu0 0.0
    %2790 = vmatprep.subr.mxu0 0.0
    %2791 = vmatpush1.xpose.msra.mxu0 0.0
    %2792 = vmatprep.subr.mxu0 0.0
    %2793 = vmatpush1.xpose.msra.mxu0 0.0
    %2794 = vmatprep.subr.mxu0 0.0
    %2795 = vmatpush1.xpose.msra.mxu0 0.0
    %2796 = vmatprep.subr.mxu0 0.0
    %2797 = vmatpush1.xpose.msra.mxu0 0.0
    %2798 = vmatprep.subr.mxu0 0.0
    %2799 = vmatpush1.xpose.msra.mxu0 0.0
    %2800 = vmatprep.subr.mxu0 0.0
    %2801 = vmatpush1.xpose.msra.mxu0 0.0
    %2802 = vmatprep.subr.mxu0 0.0
    %2803 = vmatpush1.xpose.msra.mxu0 0.0
    %2804 = vmatprep.subr.mxu0 0.0
    %2805 = vmatpush1.xpose.msra.mxu0 0.0
    %2806 = vmatprep.subr.mxu0 0.0
    %2807 = vmatpush1.xpose.msra.mxu0 0.0
    %2808 = vmatprep.subr.mxu0 0.0
    %2809 = vmatpush1.xpose.msra.mxu0 0.0
    %2810 = vmatprep.subr.mxu0 0.0
    %2811 = vmatpush1.xpose.msra.mxu0 %v2778
    %2812 = vmatprep.subr.mxu0 0.0
    %2813 = vmatpush2.xpose.msra.mxu0 0.0
    %2814 = vmatprep.subr.mxu0 0.0
    %2815 = vmatpush2.xpose.msra.mxu0 0.0
    %2816 = vmatprep.subr.mxu0 0.0
    %2817 = vmatpush2.xpose.msra.mxu0 0.0
    %2818 = vmatprep.subr.mxu0 0.0
    %2819 = vmatpush2.xpose.msra.mxu0 0.0
    %2820 = vmatprep.subr.mxu0 0.0
    %2821 = vmatpush2.xpose.msra.mxu0 0.0
    %2822 = vmatprep.subr.mxu0 0.0
    %2823 = vmatpush2.xpose.msra.mxu0 0.0
    %2824 = vmatprep.subr.mxu0 0.0
    %2825 = vmatpush2.xpose.msra.mxu0 0.0
    %2826 = vmatprep.subr.mxu0 0.0
    %2827 = vmatpush2.xpose.msra.mxu0 0.0
    %2828 = vmatprep.subr.mxu0 0.0
    %2829 = vmatpush2.xpose.msra.mxu0 0.0
    %2830 = vmatprep.subr.mxu0 0.0
    %2831 = vmatpush2.xpose.msra.mxu0 0.0
    %2832 = vmatprep.subr.mxu0 0.0
    %2833 = vmatpush2.xpose.msra.mxu0 0.0
    %2834 = vmatprep.subr.mxu0 0.0
    %2835 = vmatpush2.xpose.msra.mxu0 0.0
    %2836 = vmatprep.subr.mxu0 0.0
    %2837 = vmatpush2.xpose.msra.mxu0 0.0
    %2838 = vmatprep.subr.mxu0 0.0
    %2839 = vmatpush2.xpose.msra.mxu0 0.0
    %2840 = vmatprep.subr.mxu0 0.0
    %2841 = vmatpush2.xpose.msra.mxu0 0.0
    %2842 = vmatprep.subr.mxu0 0.0
    %2843 = vmatpush2.xpose.msra.mxu0 0.0
    %2844 = vmatprep.mubr.f32.mxu0 0.0
    %2845 = vmatmul.mubr.f32.gmra.mxu0 %v2778
    %v2846 = vpop.f32.mrf.mxu0
    %v2847 = vadd.f32 0.0, %v2846
    %v2848 = vpop.f32.mrf.mxu0
    %2849 = vdwg.mxu0
    %v2850 = vpack.c.bf16 %v2847, %v2847
    %v2851 = vrot.slane %v2725, 2
    %2852 = vrot.lane.b32.xlu0 %v2851, 96
    %v2853 = vpop.permute.xlu0 %2852
    %v2855 = vsel %vm340, %v2850, 0
    %v2858 = vsel %vm344, %v2853, 0
    %2860 = vmatprep.subr.bf16.mxu0 0
    %2861 = vmatpush1.bf16.msra.mxu0 0
    %2862 = vmatprep.subr.bf16.mxu0 0
    %2863 = vmatpush1.bf16.msra.mxu0 0
    %2864 = vmatprep.subr.bf16.mxu0 0
    %2865 = vmatpush1.bf16.msra.mxu0 0
    %2866 = vmatprep.subr.bf16.mxu0 0
    %2867 = vmatpush1.bf16.msra.mxu0 0
    %2868 = vmatprep.subr.bf16.mxu0 0
    %2869 = vmatpush1.bf16.msra.mxu0 0
    %2870 = vmatprep.subr.bf16.mxu0 0
    %2871 = vmatpush1.bf16.msra.mxu0 0
    %2872 = vmatprep.subr.bf16.mxu0 0
    %2873 = vmatpush1.bf16.msra.mxu0 0
    %2874 = vmatprep.subr.bf16.mxu0 0
    %2875 = vmatpush1.bf16.msra.mxu0 %v2858
    %2876 = vmatprep.subr.bf16.mxu0 0
    %2877 = vmatpush2.bf16.msra.mxu0 0
    %2878 = vmatprep.subr.bf16.mxu0 0
    %2879 = vmatpush2.bf16.msra.mxu0 0
    %2880 = vmatprep.subr.bf16.mxu0 0
    %2881 = vmatpush2.bf16.msra.mxu0 0
    %2882 = vmatprep.subr.bf16.mxu0 0
    %2883 = vmatpush2.bf16.msra.mxu0 0
    %2884 = vmatprep.subr.bf16.mxu0 0
    %2885 = vmatpush2.bf16.msra.mxu0 0
    %2886 = vmatprep.subr.bf16.mxu0 0
    %2887 = vmatpush2.bf16.msra.mxu0 0
    %2888 = vmatprep.subr.bf16.mxu0 0
    %2889 = vmatpush2.bf16.msra.mxu0 0
    %2890 = vmatprep.subr.bf16.mxu0 0
    %2891 = vmatpush2.bf16.msra.mxu0 0
    %2892 = vmatprep.mubr.bf16.mxu0 0
    %2893 = vmatmul.mubr.bf16.gmra.mxu0 %v2855
    %v2894 = vpop.f32.mrf.mxu0
    %v2895 = vadd.f32 0.0, %v2894
    %v2896 = vpop.f32.mrf.mxu0
    %v2897 = vpop.f32.mrf.mxu0
    %v2898 = vpop.f32.mrf.mxu0
    %2899 = vdwg.mxu0
    %v2901 = vrot.slane %v2895, 4
    %v2903 = vsel %vm516, %v2770, %v2901
    %v2904 = vpack.c.bf16 %v2903, %v2903
    %v2906 = vsel %vm159, %v2904, 0
    %2908 = vmatprep.subr.bf16.mxu0 0
    %2909 = vmatpush1.bf16.msra.mxu0 0
    %2910 = vmatprep.subr.bf16.mxu0 0
    %2911 = vmatpush1.bf16.msra.mxu0 0
    %2912 = vmatprep.subr.bf16.mxu0 0
    %2913 = vmatpush1.bf16.msra.mxu0 0
    %2914 = vmatprep.subr.bf16.mxu0 0
    %2915 = vmatpush1.bf16.msra.mxu0 0
    %2916 = vmatprep.subr.bf16.mxu0 0
    %2917 = vmatpush1.bf16.msra.mxu0 0
    %2918 = vmatprep.subr.bf16.mxu0 0
    %2919 = vmatpush1.bf16.msra.mxu0 0
    %2920 = vmatprep.subr.bf16.mxu0 0
    %2921 = vmatpush1.bf16.msra.mxu0 %v528
    %2922 = vmatprep.subr.bf16.mxu0 0
    %2923 = vmatpush1.bf16.msra.mxu0 %v527
    %2924 = vmatprep.subr.bf16.mxu0 0
    %2925 = vmatpush2.bf16.msra.mxu0 0
    %2926 = vmatprep.subr.bf16.mxu0 0
    %2927 = vmatpush2.bf16.msra.mxu0 0
    %2928 = vmatprep.subr.bf16.mxu0 0
    %2929 = vmatpush2.bf16.msra.mxu0 0
    %2930 = vmatprep.subr.bf16.mxu0 0
    %2931 = vmatpush2.bf16.msra.mxu0 0
    %2932 = vmatprep.subr.bf16.mxu0 0
    %2933 = vmatpush2.bf16.msra.mxu0 0
    %2934 = vmatprep.subr.bf16.mxu0 0
    %2935 = vmatpush2.bf16.msra.mxu0 0
    %2936 = vmatprep.subr.bf16.mxu0 0
    %2937 = vmatpush2.bf16.msra.mxu0 0
    %2938 = vmatprep.subr.bf16.mxu0 0
    %2939 = vmatpush2.bf16.msra.mxu0 0
    %2940 = vmatprep.mubr.bf16.mxu0 0
    %2941 = vmatmul.mubr.bf16.gmra.mxu0 %v2906
    %v2942 = vpop.f32.mrf.mxu0
    %v2943 = vadd.f32 0.0, %v2942
    %v2944 = vpop.f32.mrf.mxu0
    %v2945 = vpop.f32.mrf.mxu0
    %v2946 = vpop.f32.mrf.mxu0
    %2947 = vdwg.mxu0
    %v2948 = vmax.f32 %v2943, 0.0
    %v2949 = vpack.c.bf16 %v2948, %v2948
    %v2951 = vsel %vm159, %v2949, 0
    %2953 = vmatprep.subr.bf16.mxu0 0
    %2954 = vmatpush1.bf16.msra.mxu0 0
    %2955 = vmatprep.subr.bf16.mxu0 0
    %2956 = vmatpush1.bf16.msra.mxu0 0
    %2957 = vmatprep.subr.bf16.mxu0 0
    %2958 = vmatpush1.bf16.msra.mxu0 0
    %2959 = vmatprep.subr.bf16.mxu0 0
    %2960 = vmatpush1.bf16.msra.mxu0 0
    %2961 = vmatprep.subr.bf16.mxu0 0
    %2962 = vmatpush1.bf16.msra.mxu0 0
    %2963 = vmatprep.subr.bf16.mxu0 0
    %2964 = vmatpush1.bf16.msra.mxu0 0
    %2965 = vmatprep.subr.bf16.mxu0 0
    %2966 = vmatpush1.bf16.msra.mxu0 %v585
    %2967 = vmatprep.subr.bf16.mxu0 0
    %2968 = vmatpush1.bf16.msra.mxu0 %v584
    %2969 = vmatprep.subr.bf16.mxu0 0
    %2970 = vmatpush2.bf16.msra.mxu0 0
    %2971 = vmatprep.subr.bf16.mxu0 0
    %2972 = vmatpush2.bf16.msra.mxu0 0
    %2973 = vmatprep.subr.bf16.mxu0 0
    %2974 = vmatpush2.bf16.msra.mxu0 0
    %2975 = vmatprep.subr.bf16.mxu0 0
    %2976 = vmatpush2.bf16.msra.mxu0 0
    %2977 = vmatprep.subr.bf16.mxu0 0
    %2978 = vmatpush2.bf16.msra.mxu0 0
    %2979 = vmatprep.subr.bf16.mxu0 0
    %2980 = vmatpush2.bf16.msra.mxu0 0
    %2981 = vmatprep.subr.bf16.mxu0 0
    %2982 = vmatpush2.bf16.msra.mxu0 0
    %2983 = vmatprep.subr.bf16.mxu0 0
    %2984 = vmatpush2.bf16.msra.mxu0 0
    %2985 = vmatprep.mubr.bf16.mxu0 0
    %2986 = vmatmul.mubr.bf16.gmra.mxu0 %v2951
    %v2987 = vpop.f32.mrf.mxu0
    %v2988 = vadd.f32 0.0, %v2987
    %v2989 = vpop.f32.mrf.mxu0
    %v2990 = vpop.f32.mrf.mxu0
    %v2991 = vpop.f32.mrf.mxu0
    %2992 = vdwg.mxu0
    %v2993 = vsel %vm159, %v2988, 0.0
    %v2994 = vrot.slane %v2993, 4
    %v2995 = vadd.f32 %v2993, %v2994
    %v2996 = vrot.slane %v2995, 2
    %v2997 = vadd.f32 %v2995, %v2996
    %v2998 = vrot.slane %v2997, 1
    %v2999 = vadd.f32 %v2997, %v2998
    %v3000 = vmul.f32 %v2999, 0.125
    %v3001 = vmul.f32 %v2988, %v2988
    %v3002 = vsel %vm159, %v3001, 0.0
    %v3003 = vrot.slane %v3002, 4
    %v3004 = vadd.f32 %v3002, %v3003
    %v3005 = vrot.slane %v3004, 2
    %v3006 = vadd.f32 %v3004, %v3005
    %v3007 = vrot.slane %v3006, 1
    %v3008 = vadd.f32 %v3006, %v3007
    %v3009 = vmul.f32 %v3008, 0.125
    %v3010 = vmul.f32 %v3000, %v3000
    %v3011 = vsub.f32 %v3009, %v3010
    %v3012 = vsub.f32 %v2988, %v3000
    %v3013 = vadd.f32 %v3011, 1e-05
    %v3014 = vrsqrt.pop %v3013
    %v3015 = vmul.f32 %v3012, %v3014
    %v3016 = vmul.f32 %v3015, %v658
    %v3017 = vadd.f32 %v3016, %v665
    %3019 = vrot.lane.b32.xlu0 %v3017, 32
    %v3020 = vpop.permute.xlu0 %3019
    %v3022 = vadd.f32 %v2626, %v3020
    %v3023 = vpack.c.bf16 %v3022, %v3022
    %3025 = vrot.lane.b32.xlu0 %v3023, 96
    %v3026 = vpop.permute.xlu0 %3025
    %v3028 = vsel %vm159, %v3026, 0
    %3030 = vmatprep.subr.bf16.mxu0 0
    %3031 = vmatpush1.bf16.msra.mxu0 0
    %3032 = vmatprep.subr.bf16.mxu0 0
    %3033 = vmatpush1.bf16.msra.mxu0 0
    %3034 = vmatprep.subr.bf16.mxu0 0
    %3035 = vmatpush1.bf16.msra.mxu0 0
    %3036 = vmatprep.subr.bf16.mxu0 0
    %3037 = vmatpush1.bf16.msra.mxu0 0
    %3038 = vmatprep.subr.bf16.mxu0 0
    %3039 = vmatpush1.bf16.msra.mxu0 0
    %3040 = vmatprep.subr.bf16.mxu0 0
    %3041 = vmatpush1.bf16.msra.mxu0 0
    %3042 = vmatprep.subr.bf16.mxu0 0
    %3043 = vmatpush1.bf16.msra.mxu0 %v156
    %3044 = vmatprep.subr.bf16.mxu0 0
    %3045 = vmatpush1.bf16.msra.mxu0 %v155
    %3046 = vmatprep.subr.bf16.mxu0 0
    %3047 = vmatpush2.bf16.msra.mxu0 0
    %3048 = vmatprep.subr.bf16.mxu0 0
    %3049 = vmatpush2.bf16.msra.mxu0 0
    %3050 = vmatprep.subr.bf16.mxu0 0
    %3051 = vmatpush2.bf16.msra.mxu0 0
    %3052 = vmatprep.subr.bf16.mxu0 0
    %3053 = vmatpush2.bf16.msra.mxu0 0
    %3054 = vmatprep.subr.bf16.mxu0 0
    %3055 = vmatpush2.bf16.msra.mxu0 0
    %3056 = vmatprep.subr.bf16.mxu0 0
    %3057 = vmatpush2.bf16.msra.mxu0 0
    %3058 = vmatprep.subr.bf16.mxu0 0
    %3059 = vmatpush2.bf16.msra.mxu0 0
    %3060 = vmatprep.subr.bf16.mxu0 0
    %3061 = vmatpush2.bf16.msra.mxu0 0
    %3062 = vmatprep.mubr.bf16.mxu0 0
    %3063 = vmatmul.mubr.bf16.gmra.mxu0 %v3028
    %v3064 = vpop.f32.mrf.mxu0
    %v3065 = vadd.f32 0.0, %v3064
    %v3066 = vpop.f32.mrf.mxu0
    %v3067 = vpop.f32.mrf.mxu0
    %v3068 = vpop.f32.mrf.mxu0
    %3069 = vdwg.mxu0
    %v3070 = vadd.f32 %v128, %v3065
    %v3071 = vxor.u32 %v3070, 2147483648
    %v3072 = vmul.f32 %v3071, 1.442695
    %v3073 = vpow.pop %v3072
    %v3074 = vadd.f32 %v3073, 1.0
    %v3075 = vrcp.pop %v3074
    %v3076 = vmul.f32 1.0, %v3075
    %v3077 = vadd.f32 %v3065, %v216
    %3079 = vrot.lane.b32.xlu0 %v3077, 64
    %v3080 = vpop.permute.xlu0 %3079
    %v3082 = vmul.f32 %v3076, %v3080
    %3084 = vrot.lane.b32.xlu0 %v3082, 64
    %v3085 = vpop.permute.xlu0 %3084
    %v3087 = vadd.f32 %v145, %v3085
    %v3088 = vtanh.pop %v3087
    %v3089 = vsub.f32 1.0, %v3076
    %3091 = vrot.lane.b32.xlu0 %v3088, 96
    %v3092 = vpop.permute.xlu0 %3091
    %v3094 = vmul.f32 %v3089, %v3092
    %v3095 = vmul.f32 %v3076, %v3022
    %v3096 = vadd.f32 %v3094, %v3095
    %3098 = vrot.lane.b32.xlu0 %v3096, 96
    %v3099 = vpop.permute.xlu0 %3098
    %v3101 = vsel %vm159, %v3099, 0.0
    %3102 = vadd.xlane.f32.xlu0 %v3101
    %v3103 = vpop.xlane.xlu0 %3102
    %v3104 = vmul.f32 %v3096, %v3096
    %3106 = vrot.lane.b32.xlu0 %v3104, 96
    %v3107 = vpop.permute.xlu0 %3106
    %v3109 = vsel %vm159, %v3107, 0.0
    %3110 = vadd.xlane.f32.xlu0 %v3109
    %v3111 = vpop.xlane.xlu0 %3110
    %v3112 = vmul.f32 %v3103, 0.03125
    %v3113 = vmul.f32 %v3112, %v3103
    %v3114 = vsub.f32 %v3111, %v3113
    %v3115 = vsub.f32 %v3096, %v3112
    %v3116 = vadd.f32 %v3114, 1e-08
    %v3117 = vrsqrt.pop %v3116
    %v3118 = vmul.f32 %v3115, %v3117
    %3120 = vrot.lane.b32.xlu0 %v3118, 96
    %v3121 = vpop.permute.xlu0 %3120
    %v3122 = vsel %vm159, %v3121, 0
    %3124 = vmatprep.subr.mxu0 0.0
    %3125 = vmatpush1.xpose.msra.mxu0 0.0
    %3126 = vmatprep.subr.mxu0 0.0
    %3127 = vmatpush1.xpose.msra.mxu0 0.0
    %3128 = vmatprep.subr.mxu0 0.0
    %3129 = vmatpush1.xpose.msra.mxu0 0.0
    %3130 = vmatprep.subr.mxu0 0.0
    %3131 = vmatpush1.xpose.msra.mxu0 0.0
    %3132 = vmatprep.subr.mxu0 0.0
    %3133 = vmatpush1.xpose.msra.mxu0 0.0
    %3134 = vmatprep.subr.mxu0 0.0
    %3135 = vmatpush1.xpose.msra.mxu0 0.0
    %3136 = vmatprep.subr.mxu0 0.0
    %3137 = vmatpush1.xpose.msra.mxu0 0.0
    %3138 = vmatprep.subr.mxu0 0.0
    %3139 = vmatpush1.xpose.msra.mxu0 0.0
    %3140 = vmatprep.subr.mxu0 0.0
    %3141 = vmatpush1.xpose.msra.mxu0 0.0
    %3142 = vmatprep.subr.mxu0 0.0
    %3143 = vmatpush1.xpose.msra.mxu0 0.0
    %3144 = vmatprep.subr.mxu0 0.0
    %3145 = vmatpush1.xpose.msra.mxu0 0.0
    %3146 = vmatprep.subr.mxu0 0.0
    %3147 = vmatpush1.xpose.msra.mxu0 0.0
    %3148 = vmatprep.subr.mxu0 0.0
    %3149 = vmatpush1.xpose.msra.mxu0 0.0
    %3150 = vmatprep.subr.mxu0 0.0
    %3151 = vmatpush1.xpose.msra.mxu0 0.0
    %3152 = vmatprep.subr.mxu0 0.0
    %3153 = vmatpush1.xpose.msra.mxu0 0.0
    %3154 = vmatprep.subr.mxu0 0.0
    %3155 = vmatpush1.xpose.msra.mxu0 %v3122
    %3156 = vmatprep.subr.mxu0 0.0
    %3157 = vmatpush2.xpose.msra.mxu0 0.0
    %3158 = vmatprep.subr.mxu0 0.0
    %3159 = vmatpush2.xpose.msra.mxu0 0.0
    %3160 = vmatprep.subr.mxu0 0.0
    %3161 = vmatpush2.xpose.msra.mxu0 0.0
    %3162 = vmatprep.subr.mxu0 0.0
    %3163 = vmatpush2.xpose.msra.mxu0 0.0
    %3164 = vmatprep.subr.mxu0 0.0
    %3165 = vmatpush2.xpose.msra.mxu0 0.0
    %3166 = vmatprep.subr.mxu0 0.0
    %3167 = vmatpush2.xpose.msra.mxu0 0.0
    %3168 = vmatprep.subr.mxu0 0.0
    %3169 = vmatpush2.xpose.msra.mxu0 0.0
    %3170 = vmatprep.subr.mxu0 0.0
    %3171 = vmatpush2.xpose.msra.mxu0 0.0
    %3172 = vmatprep.subr.mxu0 0.0
    %3173 = vmatpush2.xpose.msra.mxu0 0.0
    %3174 = vmatprep.subr.mxu0 0.0
    %3175 = vmatpush2.xpose.msra.mxu0 0.0
    %3176 = vmatprep.subr.mxu0 0.0
    %3177 = vmatpush2.xpose.msra.mxu0 0.0
    %3178 = vmatprep.subr.mxu0 0.0
    %3179 = vmatpush2.xpose.msra.mxu0 0.0
    %3180 = vmatprep.subr.mxu0 0.0
    %3181 = vmatpush2.xpose.msra.mxu0 0.0
    %3182 = vmatprep.subr.mxu0 0.0
    %3183 = vmatpush2.xpose.msra.mxu0 0.0
    %3184 = vmatprep.subr.mxu0 0.0
    %3185 = vmatpush2.xpose.msra.mxu0 0.0
    %3186 = vmatprep.subr.mxu0 0.0
    %3187 = vmatpush2.xpose.msra.mxu0 0.0
    %3188 = vmatprep.mubr.f32.mxu0 0.0
    %3189 = vmatmul.mubr.f32.gmra.mxu0 %v3122
    %v3190 = vpop.f32.mrf.mxu0
    %v3191 = vadd.f32 0.0, %v3190
    %v3192 = vpop.f32.mrf.mxu0
    %3193 = vdwg.mxu0
    %v3194 = vpack.c.bf16 %v3191, %v3191
    %v3195 = vpack.c.bf16 %v3096, %v3096
    %3197 = vrot.lane.b32.xlu0 %v3195, 96
    %v3198 = vpop.permute.xlu0 %3197
    %v3200 = vsel %vm340, %v3194, 0
    %v3203 = vsel %vm344, %v3198, 0
    %3205 = vmatprep.subr.bf16.mxu0 0
    %3206 = vmatpush1.bf16.msra.mxu0 0
    %3207 = vmatprep.subr.bf16.mxu0 0
    %3208 = vmatpush1.bf16.msra.mxu0 0
    %3209 = vmatprep.subr.bf16.mxu0 0
    %3210 = vmatpush1.bf16.msra.mxu0 0
    %3211 = vmatprep.subr.bf16.mxu0 0
    %3212 = vmatpush1.bf16.msra.mxu0 0
    %3213 = vmatprep.subr.bf16.mxu0 0
    %3214 = vmatpush1.bf16.msra.mxu0 0
    %3215 = vmatprep.subr.bf16.mxu0 0
    %3216 = vmatpush1.bf16.msra.mxu0 0
    %3217 = vmatprep.subr.bf16.mxu0 0
    %3218 = vmatpush1.bf16.msra.mxu0 0
    %3219 = vmatprep.subr.bf16.mxu0 0
    %3220 = vmatpush1.bf16.msra.mxu0 %v3203
    %3221 = vmatprep.subr.bf16.mxu0 0
    %3222 = vmatpush2.bf16.msra.mxu0 0
    %3223 = vmatprep.subr.bf16.mxu0 0
    %3224 = vmatpush2.bf16.msra.mxu0 0
    %3225 = vmatprep.subr.bf16.mxu0 0
    %3226 = vmatpush2.bf16.msra.mxu0 0
    %3227 = vmatprep.subr.bf16.mxu0 0
    %3228 = vmatpush2.bf16.msra.mxu0 0
    %3229 = vmatprep.subr.bf16.mxu0 0
    %3230 = vmatpush2.bf16.msra.mxu0 0
    %3231 = vmatprep.subr.bf16.mxu0 0
    %3232 = vmatpush2.bf16.msra.mxu0 0
    %3233 = vmatprep.subr.bf16.mxu0 0
    %3234 = vmatpush2.bf16.msra.mxu0 0
    %3235 = vmatprep.subr.bf16.mxu0 0
    %3236 = vmatpush2.bf16.msra.mxu0 0
    %3237 = vmatprep.mubr.bf16.mxu0 0
    %3238 = vmatmul.mubr.bf16.gmra.mxu0 %v3200
    %v3239 = vpop.f32.mrf.mxu0
    %v3240 = vadd.f32 0.0, %v3239
    %v3241 = vpop.f32.mrf.mxu0
    %v3242 = vpop.f32.mrf.mxu0
    %v3243 = vpop.f32.mrf.mxu0
    %3244 = vdwg.mxu0
    %v3245 = vrot.slane %v3118, 4
    %3246 = vrot.lane.b32.xlu0 %v3245, 96
    %v3247 = vpop.permute.xlu0 %3246
    %v3248 = vsel %vm159, %v3247, 0
    %3250 = vmatprep.subr.mxu0 0.0
    %3251 = vmatpush1.xpose.msra.mxu0 0.0
    %3252 = vmatprep.subr.mxu0 0.0
    %3253 = vmatpush1.xpose.msra.mxu0 0.0
    %3254 = vmatprep.subr.mxu0 0.0
    %3255 = vmatpush1.xpose.msra.mxu0 0.0
    %3256 = vmatprep.subr.mxu0 0.0
    %3257 = vmatpush1.xpose.msra.mxu0 0.0
    %3258 = vmatprep.subr.mxu0 0.0
    %3259 = vmatpush1.xpose.msra.mxu0 0.0
    %3260 = vmatprep.subr.mxu0 0.0
    %3261 = vmatpush1.xpose.msra.mxu0 0.0
    %3262 = vmatprep.subr.mxu0 0.0
    %3263 = vmatpush1.xpose.msra.mxu0 0.0
    %3264 = vmatprep.subr.mxu0 0.0
    %3265 = vmatpush1.xpose.msra.mxu0 0.0
    %3266 = vmatprep.subr.mxu0 0.0
    %3267 = vmatpush1.xpose.msra.mxu0 0.0
    %3268 = vmatprep.subr.mxu0 0.0
    %3269 = vmatpush1.xpose.msra.mxu0 0.0
    %3270 = vmatprep.subr.mxu0 0.0
    %3271 = vmatpush1.xpose.msra.mxu0 0.0
    %3272 = vmatprep.subr.mxu0 0.0
    %3273 = vmatpush1.xpose.msra.mxu0 0.0
    %3274 = vmatprep.subr.mxu0 0.0
    %3275 = vmatpush1.xpose.msra.mxu0 0.0
    %3276 = vmatprep.subr.mxu0 0.0
    %3277 = vmatpush1.xpose.msra.mxu0 0.0
    %3278 = vmatprep.subr.mxu0 0.0
    %3279 = vmatpush1.xpose.msra.mxu0 0.0
    %3280 = vmatprep.subr.mxu0 0.0
    %3281 = vmatpush1.xpose.msra.mxu0 %v3248
    %3282 = vmatprep.subr.mxu0 0.0
    %3283 = vmatpush2.xpose.msra.mxu0 0.0
    %3284 = vmatprep.subr.mxu0 0.0
    %3285 = vmatpush2.xpose.msra.mxu0 0.0
    %3286 = vmatprep.subr.mxu0 0.0
    %3287 = vmatpush2.xpose.msra.mxu0 0.0
    %3288 = vmatprep.subr.mxu0 0.0
    %3289 = vmatpush2.xpose.msra.mxu0 0.0
    %3290 = vmatprep.subr.mxu0 0.0
    %3291 = vmatpush2.xpose.msra.mxu0 0.0
    %3292 = vmatprep.subr.mxu0 0.0
    %3293 = vmatpush2.xpose.msra.mxu0 0.0
    %3294 = vmatprep.subr.mxu0 0.0
    %3295 = vmatpush2.xpose.msra.mxu0 0.0
    %3296 = vmatprep.subr.mxu0 0.0
    %3297 = vmatpush2.xpose.msra.mxu0 0.0
    %3298 = vmatprep.subr.mxu0 0.0
    %3299 = vmatpush2.xpose.msra.mxu0 0.0
    %3300 = vmatprep.subr.mxu0 0.0
    %3301 = vmatpush2.xpose.msra.mxu0 0.0
    %3302 = vmatprep.subr.mxu0 0.0
    %3303 = vmatpush2.xpose.msra.mxu0 0.0
    %3304 = vmatprep.subr.mxu0 0.0
    %3305 = vmatpush2.xpose.msra.mxu0 0.0
    %3306 = vmatprep.subr.mxu0 0.0
    %3307 = vmatpush2.xpose.msra.mxu0 0.0
    %3308 = vmatprep.subr.mxu0 0.0
    %3309 = vmatpush2.xpose.msra.mxu0 0.0
    %3310 = vmatprep.subr.mxu0 0.0
    %3311 = vmatpush2.xpose.msra.mxu0 0.0
    %3312 = vmatprep.subr.mxu0 0.0
    %3313 = vmatpush2.xpose.msra.mxu0 0.0
    %3314 = vmatprep.mubr.f32.mxu0 0.0
    %3315 = vmatmul.mubr.f32.gmra.mxu0 %v3248
    %v3316 = vpop.f32.mrf.mxu0
    %v3317 = vadd.f32 0.0, %v3316
    %v3318 = vpop.f32.mrf.mxu0
    %3319 = vdwg.mxu0
    %v3320 = vpack.c.bf16 %v3317, %v3317
    %v3321 = vrot.slane %v3195, 2
    %3322 = vrot.lane.b32.xlu0 %v3321, 96
    %v3323 = vpop.permute.xlu0 %3322
    %v3325 = vsel %vm340, %v3320, 0
    %v3328 = vsel %vm344, %v3323, 0
    %3330 = vmatprep.subr.bf16.mxu0 0
    %3331 = vmatpush1.bf16.msra.mxu0 0
    %3332 = vmatprep.subr.bf16.mxu0 0
    %3333 = vmatpush1.bf16.msra.mxu0 0
    %3334 = vmatprep.subr.bf16.mxu0 0
    %3335 = vmatpush1.bf16.msra.mxu0 0
    %3336 = vmatprep.subr.bf16.mxu0 0
    %3337 = vmatpush1.bf16.msra.mxu0 0
    %3338 = vmatprep.subr.bf16.mxu0 0
    %3339 = vmatpush1.bf16.msra.mxu0 0
    %3340 = vmatprep.subr.bf16.mxu0 0
    %3341 = vmatpush1.bf16.msra.mxu0 0
    %3342 = vmatprep.subr.bf16.mxu0 0
    %3343 = vmatpush1.bf16.msra.mxu0 0
    %3344 = vmatprep.subr.bf16.mxu0 0
    %3345 = vmatpush1.bf16.msra.mxu0 %v3328
    %3346 = vmatprep.subr.bf16.mxu0 0
    %3347 = vmatpush2.bf16.msra.mxu0 0
    %3348 = vmatprep.subr.bf16.mxu0 0
    %3349 = vmatpush2.bf16.msra.mxu0 0
    %3350 = vmatprep.subr.bf16.mxu0 0
    %3351 = vmatpush2.bf16.msra.mxu0 0
    %3352 = vmatprep.subr.bf16.mxu0 0
    %3353 = vmatpush2.bf16.msra.mxu0 0
    %3354 = vmatprep.subr.bf16.mxu0 0
    %3355 = vmatpush2.bf16.msra.mxu0 0
    %3356 = vmatprep.subr.bf16.mxu0 0
    %3357 = vmatpush2.bf16.msra.mxu0 0
    %3358 = vmatprep.subr.bf16.mxu0 0
    %3359 = vmatpush2.bf16.msra.mxu0 0
    %3360 = vmatprep.subr.bf16.mxu0 0
    %3361 = vmatpush2.bf16.msra.mxu0 0
    %3362 = vmatprep.mubr.bf16.mxu0 0
    %3363 = vmatmul.mubr.bf16.gmra.mxu0 %v3325
    %v3364 = vpop.f32.mrf.mxu0
    %v3365 = vadd.f32 0.0, %v3364
    %v3366 = vpop.f32.mrf.mxu0
    %v3367 = vpop.f32.mrf.mxu0
    %v3368 = vpop.f32.mrf.mxu0
    %3369 = vdwg.mxu0
    %v3371 = vrot.slane %v3365, 4
    %v3373 = vsel %vm516, %v3240, %v3371
    %v3374 = vpack.c.bf16 %v3373, %v3373
    %v3376 = vsel %vm159, %v3374, 0
    %3378 = vmatprep.subr.bf16.mxu0 0
    %3379 = vmatpush1.bf16.msra.mxu0 0
    %3380 = vmatprep.subr.bf16.mxu0 0
    %3381 = vmatpush1.bf16.msra.mxu0 0
    %3382 = vmatprep.subr.bf16.mxu0 0
    %3383 = vmatpush1.bf16.msra.mxu0 0
    %3384 = vmatprep.subr.bf16.mxu0 0
    %3385 = vmatpush1.bf16.msra.mxu0 0
    %3386 = vmatprep.subr.bf16.mxu0 0
    %3387 = vmatpush1.bf16.msra.mxu0 0
    %3388 = vmatprep.subr.bf16.mxu0 0
    %3389 = vmatpush1.bf16.msra.mxu0 0
    %3390 = vmatprep.subr.bf16.mxu0 0
    %3391 = vmatpush1.bf16.msra.mxu0 %v528
    %3392 = vmatprep.subr.bf16.mxu0 0
    %3393 = vmatpush1.bf16.msra.mxu0 %v527
    %3394 = vmatprep.subr.bf16.mxu0 0
    %3395 = vmatpush2.bf16.msra.mxu0 0
    %3396 = vmatprep.subr.bf16.mxu0 0
    %3397 = vmatpush2.bf16.msra.mxu0 0
    %3398 = vmatprep.subr.bf16.mxu0 0
    %3399 = vmatpush2.bf16.msra.mxu0 0
    %3400 = vmatprep.subr.bf16.mxu0 0
    %3401 = vmatpush2.bf16.msra.mxu0 0
    %3402 = vmatprep.subr.bf16.mxu0 0
    %3403 = vmatpush2.bf16.msra.mxu0 0
    %3404 = vmatprep.subr.bf16.mxu0 0
    %3405 = vmatpush2.bf16.msra.mxu0 0
    %3406 = vmatprep.subr.bf16.mxu0 0
    %3407 = vmatpush2.bf16.msra.mxu0 0
    %3408 = vmatprep.subr.bf16.mxu0 0
    %3409 = vmatpush2.bf16.msra.mxu0 0
    %3410 = vmatprep.mubr.bf16.mxu0 0
    %3411 = vmatmul.mubr.bf16.gmra.mxu0 %v3376
    %v3412 = vpop.f32.mrf.mxu0
    %v3413 = vadd.f32 0.0, %v3412
    %v3414 = vpop.f32.mrf.mxu0
    %v3415 = vpop.f32.mrf.mxu0
    %v3416 = vpop.f32.mrf.mxu0
    %3417 = vdwg.mxu0
    %v3418 = vmax.f32 %v3413, 0.0
    %v3419 = vpack.c.bf16 %v3418, %v3418
    %v3421 = vsel %vm159, %v3419, 0
    %3423 = vmatprep.subr.bf16.mxu0 0
    %3424 = vmatpush1.bf16.msra.mxu0 0
    %3425 = vmatprep.subr.bf16.mxu0 0
    %3426 = vmatpush1.bf16.msra.mxu0 0
    %3427 = vmatprep.subr.bf16.mxu0 0
    %3428 = vmatpush1.bf16.msra.mxu0 0
    %3429 = vmatprep.subr.bf16.mxu0 0
    %3430 = vmatpush1.bf16.msra.mxu0 0
    %3431 = vmatprep.subr.bf16.mxu0 0
    %3432 = vmatpush1.bf16.msra.mxu0 0
    %3433 = vmatprep.subr.bf16.mxu0 0
    %3434 = vmatpush1.bf16.msra.mxu0 0
    %3435 = vmatprep.subr.bf16.mxu0 0
    %3436 = vmatpush1.bf16.msra.mxu0 %v585
    %3437 = vmatprep.subr.bf16.mxu0 0
    %3438 = vmatpush1.bf16.msra.mxu0 %v584
    %3439 = vmatprep.subr.bf16.mxu0 0
    %3440 = vmatpush2.bf16.msra.mxu0 0
    %3441 = vmatprep.subr.bf16.mxu0 0
    %3442 = vmatpush2.bf16.msra.mxu0 0
    %3443 = vmatprep.subr.bf16.mxu0 0
    %3444 = vmatpush2.bf16.msra.mxu0 0
    %3445 = vmatprep.subr.bf16.mxu0 0
    %3446 = vmatpush2.bf16.msra.mxu0 0
    %3447 = vmatprep.subr.bf16.mxu0 0
    %3448 = vmatpush2.bf16.msra.mxu0 0
    %3449 = vmatprep.subr.bf16.mxu0 0
    %3450 = vmatpush2.bf16.msra.mxu0 0
    %3451 = vmatprep.subr.bf16.mxu0 0
    %3452 = vmatpush2.bf16.msra.mxu0 0
    %3453 = vmatprep.subr.bf16.mxu0 0
    %3454 = vmatpush2.bf16.msra.mxu0 0
    %3455 = vmatprep.mubr.bf16.mxu0 0
    %3456 = vmatmul.mubr.bf16.gmra.mxu0 %v3421
    %v3457 = vpop.f32.mrf.mxu0
    %v3458 = vadd.f32 0.0, %v3457
    %v3459 = vpop.f32.mrf.mxu0
    %v3460 = vpop.f32.mrf.mxu0
    %v3461 = vpop.f32.mrf.mxu0
    %3462 = vdwg.mxu0
    %v3463 = vsel %vm159, %v3458, 0.0
    %v3464 = vrot.slane %v3463, 4
    %v3465 = vadd.f32 %v3463, %v3464
    %v3466 = vrot.slane %v3465, 2
    %v3467 = vadd.f32 %v3465, %v3466
    %v3468 = vrot.slane %v3467, 1
    %v3469 = vadd.f32 %v3467, %v3468
    %v3470 = vmul.f32 %v3469, 0.125
    %v3471 = vmul.f32 %v3458, %v3458
    %v3472 = vsel %vm159, %v3471, 0.0
    %v3473 = vrot.slane %v3472, 4
    %v3474 = vadd.f32 %v3472, %v3473
    %v3475 = vrot.slane %v3474, 2
    %v3476 = vadd.f32 %v3474, %v3475
    %v3477 = vrot.slane %v3476, 1
    %v3478 = vadd.f32 %v3476, %v3477
    %v3479 = vmul.f32 %v3478, 0.125
    %v3480 = vmul.f32 %v3470, %v3470
    %v3481 = vsub.f32 %v3479, %v3480
    %v3482 = vsub.f32 %v3458, %v3470
    %v3483 = vadd.f32 %v3481, 1e-05
    %v3484 = vrsqrt.pop %v3483
    %v3485 = vmul.f32 %v3482, %v3484
    %v3486 = vmul.f32 %v3485, %v658
    %v3487 = vadd.f32 %v3486, %v665
    %3489 = vrot.lane.b32.xlu0 %v3487, 32
    %v3490 = vpop.permute.xlu0 %3489
    %v3492 = vadd.f32 %v3096, %v3490
    %v3493 = vpack.c.bf16 %v3492, %v3492
    %3495 = vrot.lane.b32.xlu0 %v3493, 96
    %v3496 = vpop.permute.xlu0 %3495
    %v3498 = vsel %vm159, %v3496, 0
    %3500 = vmatprep.subr.bf16.mxu0 0
    %3501 = vmatpush1.bf16.msra.mxu0 0
    %3502 = vmatprep.subr.bf16.mxu0 0
    %3503 = vmatpush1.bf16.msra.mxu0 0
    %3504 = vmatprep.subr.bf16.mxu0 0
    %3505 = vmatpush1.bf16.msra.mxu0 0
    %3506 = vmatprep.subr.bf16.mxu0 0
    %3507 = vmatpush1.bf16.msra.mxu0 0
    %3508 = vmatprep.subr.bf16.mxu0 0
    %3509 = vmatpush1.bf16.msra.mxu0 0
    %3510 = vmatprep.subr.bf16.mxu0 0
    %3511 = vmatpush1.bf16.msra.mxu0 0
    %3512 = vmatprep.subr.bf16.mxu0 0
    %3513 = vmatpush1.bf16.msra.mxu0 %v156
    %3514 = vmatprep.subr.bf16.mxu0 0
    %3515 = vmatpush1.bf16.msra.mxu0 %v155
    %3516 = vmatprep.subr.bf16.mxu0 0
    %3517 = vmatpush2.bf16.msra.mxu0 0
    %3518 = vmatprep.subr.bf16.mxu0 0
    %3519 = vmatpush2.bf16.msra.mxu0 0
    %3520 = vmatprep.subr.bf16.mxu0 0
    %3521 = vmatpush2.bf16.msra.mxu0 0
    %3522 = vmatprep.subr.bf16.mxu0 0
    %3523 = vmatpush2.bf16.msra.mxu0 0
    %3524 = vmatprep.subr.bf16.mxu0 0
    %3525 = vmatpush2.bf16.msra.mxu0 0
    %3526 = vmatprep.subr.bf16.mxu0 0
    %3527 = vmatpush2.bf16.msra.mxu0 0
    %3528 = vmatprep.subr.bf16.mxu0 0
    %3529 = vmatpush2.bf16.msra.mxu0 0
    %3530 = vmatprep.subr.bf16.mxu0 0
    %3531 = vmatpush2.bf16.msra.mxu0 0
    %3532 = vmatprep.mubr.bf16.mxu0 0
    %3533 = vmatmul.mubr.bf16.gmra.mxu0 %v3498
    %v3534 = vpop.f32.mrf.mxu0
    %v3535 = vadd.f32 0.0, %v3534
    %v3536 = vpop.f32.mrf.mxu0
    %v3537 = vpop.f32.mrf.mxu0
    %v3538 = vpop.f32.mrf.mxu0
    %3539 = vdwg.mxu0
    %v3540 = vadd.f32 %v129, %v3535
    %v3541 = vxor.u32 %v3540, 2147483648
    %v3542 = vmul.f32 %v3541, 1.442695
    %v3543 = vpow.pop %v3542
    %v3544 = vadd.f32 %v3543, 1.0
    %v3545 = vrcp.pop %v3544
    %v3546 = vmul.f32 1.0, %v3545
    %v3547 = vadd.f32 %v3535, %v216
    %3549 = vrot.lane.b32.xlu0 %v3547, 64
    %v3550 = vpop.permute.xlu0 %3549
    %v3552 = vmul.f32 %v3546, %v3550
    %3554 = vrot.lane.b32.xlu0 %v3552, 64
    %v3555 = vpop.permute.xlu0 %3554
    %v3557 = vadd.f32 %v146, %v3555
    %v3558 = vtanh.pop %v3557
    %v3559 = vsub.f32 1.0, %v3546
    %3561 = vrot.lane.b32.xlu0 %v3558, 96
    %v3562 = vpop.permute.xlu0 %3561
    %v3564 = vmul.f32 %v3559, %v3562
    %v3565 = vmul.f32 %v3546, %v3492
    %v3566 = vadd.f32 %v3564, %v3565
    %3568 = vrot.lane.b32.xlu0 %v3566, 96
    %v3569 = vpop.permute.xlu0 %3568
    %v3571 = vsel %vm159, %v3569, 0.0
    %3572 = vadd.xlane.f32.xlu0 %v3571
    %v3573 = vpop.xlane.xlu0 %3572
    %v3574 = vmul.f32 %v3566, %v3566
    %3576 = vrot.lane.b32.xlu0 %v3574, 96
    %v3577 = vpop.permute.xlu0 %3576
    %v3579 = vsel %vm159, %v3577, 0.0
    %3580 = vadd.xlane.f32.xlu0 %v3579
    %v3581 = vpop.xlane.xlu0 %3580
    %v3582 = vmul.f32 %v3573, 0.03125
    %v3583 = vmul.f32 %v3582, %v3573
    %v3584 = vsub.f32 %v3581, %v3583
    %v3585 = vsub.f32 %v3566, %v3582
    %v3586 = vadd.f32 %v3584, 1e-08
    %v3587 = vrsqrt.pop %v3586
    %v3588 = vmul.f32 %v3585, %v3587
    %3590 = vrot.lane.b32.xlu0 %v3588, 96
    %v3591 = vpop.permute.xlu0 %3590
    %v3592 = vsel %vm159, %v3591, 0
    %3594 = vmatprep.subr.mxu0 0.0
    %3595 = vmatpush1.xpose.msra.mxu0 0.0
    %3596 = vmatprep.subr.mxu0 0.0
    %3597 = vmatpush1.xpose.msra.mxu0 0.0
    %3598 = vmatprep.subr.mxu0 0.0
    %3599 = vmatpush1.xpose.msra.mxu0 0.0
    %3600 = vmatprep.subr.mxu0 0.0
    %3601 = vmatpush1.xpose.msra.mxu0 0.0
    %3602 = vmatprep.subr.mxu0 0.0
    %3603 = vmatpush1.xpose.msra.mxu0 0.0
    %3604 = vmatprep.subr.mxu0 0.0
    %3605 = vmatpush1.xpose.msra.mxu0 0.0
    %3606 = vmatprep.subr.mxu0 0.0
    %3607 = vmatpush1.xpose.msra.mxu0 0.0
    %3608 = vmatprep.subr.mxu0 0.0
    %3609 = vmatpush1.xpose.msra.mxu0 0.0
    %3610 = vmatprep.subr.mxu0 0.0
    %3611 = vmatpush1.xpose.msra.mxu0 0.0
    %3612 = vmatprep.subr.mxu0 0.0
    %3613 = vmatpush1.xpose.msra.mxu0 0.0
    %3614 = vmatprep.subr.mxu0 0.0
    %3615 = vmatpush1.xpose.msra.mxu0 0.0
    %3616 = vmatprep.subr.mxu0 0.0
    %3617 = vmatpush1.xpose.msra.mxu0 0.0
    %3618 = vmatprep.subr.mxu0 0.0
    %3619 = vmatpush1.xpose.msra.mxu0 0.0
    %3620 = vmatprep.subr.mxu0 0.0
    %3621 = vmatpush1.xpose.msra.mxu0 0.0
    %3622 = vmatprep.subr.mxu0 0.0
    %3623 = vmatpush1.xpose.msra.mxu0 0.0
    %3624 = vmatprep.subr.mxu0 0.0
    %3625 = vmatpush1.xpose.msra.mxu0 %v3592
    %3626 = vmatprep.subr.mxu0 0.0
    %3627 = vmatpush2.xpose.msra.mxu0 0.0
    %3628 = vmatprep.subr.mxu0 0.0
    %3629 = vmatpush2.xpose.msra.mxu0 0.0
    %3630 = vmatprep.subr.mxu0 0.0
    %3631 = vmatpush2.xpose.msra.mxu0 0.0
    %3632 = vmatprep.subr.mxu0 0.0
    %3633 = vmatpush2.xpose.msra.mxu0 0.0
    %3634 = vmatprep.subr.mxu0 0.0
    %3635 = vmatpush2.xpose.msra.mxu0 0.0
    %3636 = vmatprep.subr.mxu0 0.0
    %3637 = vmatpush2.xpose.msra.mxu0 0.0
    %3638 = vmatprep.subr.mxu0 0.0
    %3639 = vmatpush2.xpose.msra.mxu0 0.0
    %3640 = vmatprep.subr.mxu0 0.0
    %3641 = vmatpush2.xpose.msra.mxu0 0.0
    %3642 = vmatprep.subr.mxu0 0.0
    %3643 = vmatpush2.xpose.msra.mxu0 0.0
    %3644 = vmatprep.subr.mxu0 0.0
    %3645 = vmatpush2.xpose.msra.mxu0 0.0
    %3646 = vmatprep.subr.mxu0 0.0
    %3647 = vmatpush2.xpose.msra.mxu0 0.0
    %3648 = vmatprep.subr.mxu0 0.0
    %3649 = vmatpush2.xpose.msra.mxu0 0.0
    %3650 = vmatprep.subr.mxu0 0.0
    %3651 = vmatpush2.xpose.msra.mxu0 0.0
    %3652 = vmatprep.subr.mxu0 0.0
    %3653 = vmatpush2.xpose.msra.mxu0 0.0
    %3654 = vmatprep.subr.mxu0 0.0
    %3655 = vmatpush2.xpose.msra.mxu0 0.0
    %3656 = vmatprep.subr.mxu0 0.0
    %3657 = vmatpush2.xpose.msra.mxu0 0.0
    %3658 = vmatprep.mubr.f32.mxu0 0.0
    %3659 = vmatmul.mubr.f32.gmra.mxu0 %v3592
    %v3660 = vpop.f32.mrf.mxu0
    %v3661 = vadd.f32 0.0, %v3660
    %v3662 = vpop.f32.mrf.mxu0
    %3663 = vdwg.mxu0
    %v3664 = vpack.c.bf16 %v3661, %v3661
    %v3665 = vpack.c.bf16 %v3566, %v3566
    %3667 = vrot.lane.b32.xlu0 %v3665, 96
    %v3668 = vpop.permute.xlu0 %3667
    %v3670 = vsel %vm340, %v3664, 0
    %v3673 = vsel %vm344, %v3668, 0
    %3675 = vmatprep.subr.bf16.mxu0 0
    %3676 = vmatpush1.bf16.msra.mxu0 0
    %3677 = vmatprep.subr.bf16.mxu0 0
    %3678 = vmatpush1.bf16.msra.mxu0 0
    %3679 = vmatprep.subr.bf16.mxu0 0
    %3680 = vmatpush1.bf16.msra.mxu0 0
    %3681 = vmatprep.subr.bf16.mxu0 0
    %3682 = vmatpush1.bf16.msra.mxu0 0
    %3683 = vmatprep.subr.bf16.mxu0 0
    %3684 = vmatpush1.bf16.msra.mxu0 0
    %3685 = vmatprep.subr.bf16.mxu0 0
    %3686 = vmatpush1.bf16.msra.mxu0 0
    %3687 = vmatprep.subr.bf16.mxu0 0
    %3688 = vmatpush1.bf16.msra.mxu0 0
    %3689 = vmatprep.subr.bf16.mxu0 0
    %3690 = vmatpush1.bf16.msra.mxu0 %v3673
    %3691 = vmatprep.subr.bf16.mxu0 0
    %3692 = vmatpush2.bf16.msra.mxu0 0
    %3693 = vmatprep.subr.bf16.mxu0 0
    %3694 = vmatpush2.bf16.msra.mxu0 0
    %3695 = vmatprep.subr.bf16.mxu0 0
    %3696 = vmatpush2.bf16.msra.mxu0 0
    %3697 = vmatprep.subr.bf16.mxu0 0
    %3698 = vmatpush2.bf16.msra.mxu0 0
    %3699 = vmatprep.subr.bf16.mxu0 0
    %3700 = vmatpush2.bf16.msra.mxu0 0
    %3701 = vmatprep.subr.bf16.mxu0 0
    %3702 = vmatpush2.bf16.msra.mxu0 0
    %3703 = vmatprep.subr.bf16.mxu0 0
    %3704 = vmatpush2.bf16.msra.mxu0 0
    %3705 = vmatprep.subr.bf16.mxu0 0
    %3706 = vmatpush2.bf16.msra.mxu0 0
    %3707 = vmatprep.mubr.bf16.mxu0 0
    %3708 = vmatmul.mubr.bf16.gmra.mxu0 %v3670
    %v3709 = vpop.f32.mrf.mxu0
    %v3710 = vadd.f32 0.0, %v3709
    %v3711 = vpop.f32.mrf.mxu0
    %v3712 = vpop.f32.mrf.mxu0
    %v3713 = vpop.f32.mrf.mxu0
    %3714 = vdwg.mxu0
    %v3715 = vrot.slane %v3588, 4
    %3716 = vrot.lane.b32.xlu0 %v3715, 96
    %v3717 = vpop.permute.xlu0 %3716
    %v3718 = vsel %vm159, %v3717, 0
    %3720 = vmatprep.subr.mxu0 0.0
    %3721 = vmatpush1.xpose.msra.mxu0 0.0
    %3722 = vmatprep.subr.mxu0 0.0
    %3723 = vmatpush1.xpose.msra.mxu0 0.0
    %3724 = vmatprep.subr.mxu0 0.0
    %3725 = vmatpush1.xpose.msra.mxu0 0.0
    %3726 = vmatprep.subr.mxu0 0.0
    %3727 = vmatpush1.xpose.msra.mxu0 0.0
    %3728 = vmatprep.subr.mxu0 0.0
    %3729 = vmatpush1.xpose.msra.mxu0 0.0
    %3730 = vmatprep.subr.mxu0 0.0
    %3731 = vmatpush1.xpose.msra.mxu0 0.0
    %3732 = vmatprep.subr.mxu0 0.0
    %3733 = vmatpush1.xpose.msra.mxu0 0.0
    %3734 = vmatprep.subr.mxu0 0.0
    %3735 = vmatpush1.xpose.msra.mxu0 0.0
    %3736 = vmatprep.subr.mxu0 0.0
    %3737 = vmatpush1.xpose.msra.mxu0 0.0
    %3738 = vmatprep.subr.mxu0 0.0
    %3739 = vmatpush1.xpose.msra.mxu0 0.0
    %3740 = vmatprep.subr.mxu0 0.0
    %3741 = vmatpush1.xpose.msra.mxu0 0.0
    %3742 = vmatprep.subr.mxu0 0.0
    %3743 = vmatpush1.xpose.msra.mxu0 0.0
    %3744 = vmatprep.subr.mxu0 0.0
    %3745 = vmatpush1.xpose.msra.mxu0 0.0
    %3746 = vmatprep.subr.mxu0 0.0
    %3747 = vmatpush1.xpose.msra.mxu0 0.0
    %3748 = vmatprep.subr.mxu0 0.0
    %3749 = vmatpush1.xpose.msra.mxu0 0.0
    %3750 = vmatprep.subr.mxu0 0.0
    %3751 = vmatpush1.xpose.msra.mxu0 %v3718
    %3752 = vmatprep.subr.mxu0 0.0
    %3753 = vmatpush2.xpose.msra.mxu0 0.0
    %3754 = vmatprep.subr.mxu0 0.0
    %3755 = vmatpush2.xpose.msra.mxu0 0.0
    %3756 = vmatprep.subr.mxu0 0.0
    %3757 = vmatpush2.xpose.msra.mxu0 0.0
    %3758 = vmatprep.subr.mxu0 0.0
    %3759 = vmatpush2.xpose.msra.mxu0 0.0
    %3760 = vmatprep.subr.mxu0 0.0
    %3761 = vmatpush2.xpose.msra.mxu0 0.0
    %3762 = vmatprep.subr.mxu0 0.0
    %3763 = vmatpush2.xpose.msra.mxu0 0.0
    %3764 = vmatprep.subr.mxu0 0.0
    %3765 = vmatpush2.xpose.msra.mxu0 0.0
    %3766 = vmatprep.subr.mxu0 0.0
    %3767 = vmatpush2.xpose.msra.mxu0 0.0
    %3768 = vmatprep.subr.mxu0 0.0
    %3769 = vmatpush2.xpose.msra.mxu0 0.0
    %3770 = vmatprep.subr.mxu0 0.0
    %3771 = vmatpush2.xpose.msra.mxu0 0.0
    %3772 = vmatprep.subr.mxu0 0.0
    %3773 = vmatpush2.xpose.msra.mxu0 0.0
    %3774 = vmatprep.subr.mxu0 0.0
    %3775 = vmatpush2.xpose.msra.mxu0 0.0
    %3776 = vmatprep.subr.mxu0 0.0
    %3777 = vmatpush2.xpose.msra.mxu0 0.0
    %3778 = vmatprep.subr.mxu0 0.0
    %3779 = vmatpush2.xpose.msra.mxu0 0.0
    %3780 = vmatprep.subr.mxu0 0.0
    %3781 = vmatpush2.xpose.msra.mxu0 0.0
    %3782 = vmatprep.subr.mxu0 0.0
    %3783 = vmatpush2.xpose.msra.mxu0 0.0
    %3784 = vmatprep.mubr.f32.mxu0 0.0
    %3785 = vmatmul.mubr.f32.gmra.mxu0 %v3718
    %v3786 = vpop.f32.mrf.mxu0
    %v3787 = vadd.f32 0.0, %v3786
    %v3788 = vpop.f32.mrf.mxu0
    %3789 = vdwg.mxu0
    %v3790 = vpack.c.bf16 %v3787, %v3787
    %v3791 = vrot.slane %v3665, 2
    %3792 = vrot.lane.b32.xlu0 %v3791, 96
    %v3793 = vpop.permute.xlu0 %3792
    %v3795 = vsel %vm340, %v3790, 0
    %v3798 = vsel %vm344, %v3793, 0
    %3800 = vmatprep.subr.bf16.mxu0 0
    %3801 = vmatpush1.bf16.msra.mxu0 0
    %3802 = vmatprep.subr.bf16.mxu0 0
    %3803 = vmatpush1.bf16.msra.mxu0 0
    %3804 = vmatprep.subr.bf16.mxu0 0
    %3805 = vmatpush1.bf16.msra.mxu0 0
    %3806 = vmatprep.subr.bf16.mxu0 0
    %3807 = vmatpush1.bf16.msra.mxu0 0
    %3808 = vmatprep.subr.bf16.mxu0 0
    %3809 = vmatpush1.bf16.msra.mxu0 0
    %3810 = vmatprep.subr.bf16.mxu0 0
    %3811 = vmatpush1.bf16.msra.mxu0 0
    %3812 = vmatprep.subr.bf16.mxu0 0
    %3813 = vmatpush1.bf16.msra.mxu0 0
    %3814 = vmatprep.subr.bf16.mxu0 0
    %3815 = vmatpush1.bf16.msra.mxu0 %v3798
    %3816 = vmatprep.subr.bf16.mxu0 0
    %3817 = vmatpush2.bf16.msra.mxu0 0
    %3818 = vmatprep.subr.bf16.mxu0 0
    %3819 = vmatpush2.bf16.msra.mxu0 0
    %3820 = vmatprep.subr.bf16.mxu0 0
    %3821 = vmatpush2.bf16.msra.mxu0 0
    %3822 = vmatprep.subr.bf16.mxu0 0
    %3823 = vmatpush2.bf16.msra.mxu0 0
    %3824 = vmatprep.subr.bf16.mxu0 0
    %3825 = vmatpush2.bf16.msra.mxu0 0
    %3826 = vmatprep.subr.bf16.mxu0 0
    %3827 = vmatpush2.bf16.msra.mxu0 0
    %3828 = vmatprep.subr.bf16.mxu0 0
    %3829 = vmatpush2.bf16.msra.mxu0 0
    %3830 = vmatprep.subr.bf16.mxu0 0
    %3831 = vmatpush2.bf16.msra.mxu0 0
    %3832 = vmatprep.mubr.bf16.mxu0 0
    %3833 = vmatmul.mubr.bf16.gmra.mxu0 %v3795
    %v3834 = vpop.f32.mrf.mxu0
    %v3835 = vadd.f32 0.0, %v3834
    %v3836 = vpop.f32.mrf.mxu0
    %v3837 = vpop.f32.mrf.mxu0
    %v3838 = vpop.f32.mrf.mxu0
    %3839 = vdwg.mxu0
    %v3841 = vrot.slane %v3835, 4
    %v3843 = vsel %vm516, %v3710, %v3841
    %v3844 = vpack.c.bf16 %v3843, %v3843
    %v3846 = vsel %vm159, %v3844, 0
    %3848 = vmatprep.subr.bf16.mxu0 0
    %3849 = vmatpush1.bf16.msra.mxu0 0
    %3850 = vmatprep.subr.bf16.mxu0 0
    %3851 = vmatpush1.bf16.msra.mxu0 0
    %3852 = vmatprep.subr.bf16.mxu0 0
    %3853 = vmatpush1.bf16.msra.mxu0 0
    %3854 = vmatprep.subr.bf16.mxu0 0
    %3855 = vmatpush1.bf16.msra.mxu0 0
    %3856 = vmatprep.subr.bf16.mxu0 0
    %3857 = vmatpush1.bf16.msra.mxu0 0
    %3858 = vmatprep.subr.bf16.mxu0 0
    %3859 = vmatpush1.bf16.msra.mxu0 0
    %3860 = vmatprep.subr.bf16.mxu0 0
    %3861 = vmatpush1.bf16.msra.mxu0 %v528
    %3862 = vmatprep.subr.bf16.mxu0 0
    %3863 = vmatpush1.bf16.msra.mxu0 %v527
    %3864 = vmatprep.subr.bf16.mxu0 0
    %3865 = vmatpush2.bf16.msra.mxu0 0
    %3866 = vmatprep.subr.bf16.mxu0 0
    %3867 = vmatpush2.bf16.msra.mxu0 0
    %3868 = vmatprep.subr.bf16.mxu0 0
    %3869 = vmatpush2.bf16.msra.mxu0 0
    %3870 = vmatprep.subr.bf16.mxu0 0
    %3871 = vmatpush2.bf16.msra.mxu0 0
    %3872 = vmatprep.subr.bf16.mxu0 0
    %3873 = vmatpush2.bf16.msra.mxu0 0
    %3874 = vmatprep.subr.bf16.mxu0 0
    %3875 = vmatpush2.bf16.msra.mxu0 0
    %3876 = vmatprep.subr.bf16.mxu0 0
    %3877 = vmatpush2.bf16.msra.mxu0 0
    %3878 = vmatprep.subr.bf16.mxu0 0
    %3879 = vmatpush2.bf16.msra.mxu0 0
    %3880 = vmatprep.mubr.bf16.mxu0 0
    %3881 = vmatmul.mubr.bf16.gmra.mxu0 %v3846
    %v3882 = vpop.f32.mrf.mxu0
    %v3883 = vadd.f32 0.0, %v3882
    %v3884 = vpop.f32.mrf.mxu0
    %v3885 = vpop.f32.mrf.mxu0
    %v3886 = vpop.f32.mrf.mxu0
    %3887 = vdwg.mxu0
    %v3888 = vmax.f32 %v3883, 0.0
    %v3889 = vpack.c.bf16 %v3888, %v3888
    %v3891 = vsel %vm159, %v3889, 0
    %3893 = vmatprep.subr.bf16.mxu0 0
    %3894 = vmatpush1.bf16.msra.mxu0 0
    %3895 = vmatprep.subr.bf16.mxu0 0
    %3896 = vmatpush1.bf16.msra.mxu0 0
    %3897 = vmatprep.subr.bf16.mxu0 0
    %3898 = vmatpush1.bf16.msra.mxu0 0
    %3899 = vmatprep.subr.bf16.mxu0 0
    %3900 = vmatpush1.bf16.msra.mxu0 0
    %3901 = vmatprep.subr.bf16.mxu0 0
    %3902 = vmatpush1.bf16.msra.mxu0 0
    %3903 = vmatprep.subr.bf16.mxu0 0
    %3904 = vmatpush1.bf16.msra.mxu0 0
    %3905 = vmatprep.subr.bf16.mxu0 0
    %3906 = vmatpush1.bf16.msra.mxu0 %v585
    %3907 = vmatprep.subr.bf16.mxu0 0
    %3908 = vmatpush1.bf16.msra.mxu0 %v584
    %3909 = vmatprep.subr.bf16.mxu0 0
    %3910 = vmatpush2.bf16.msra.mxu0 0
    %3911 = vmatprep.subr.bf16.mxu0 0
    %3912 = vmatpush2.bf16.msra.mxu0 0
    %3913 = vmatprep.subr.bf16.mxu0 0
    %3914 = vmatpush2.bf16.msra.mxu0 0
    %3915 = vmatprep.subr.bf16.mxu0 0
    %3916 = vmatpush2.bf16.msra.mxu0 0
    %3917 = vmatprep.subr.bf16.mxu0 0
    %3918 = vmatpush2.bf16.msra.mxu0 0
    %3919 = vmatprep.subr.bf16.mxu0 0
    %3920 = vmatpush2.bf16.msra.mxu0 0
    %3921 = vmatprep.subr.bf16.mxu0 0
    %3922 = vmatpush2.bf16.msra.mxu0 0
    %3923 = vmatprep.subr.bf16.mxu0 0
    %3924 = vmatpush2.bf16.msra.mxu0 0
    %3925 = vmatprep.mubr.bf16.mxu0 0
    %3926 = vmatmul.mubr.bf16.gmra.mxu0 %v3891
    %v3927 = vpop.f32.mrf.mxu0
    %v3928 = vadd.f32 0.0, %v3927
    %v3929 = vpop.f32.mrf.mxu0
    %v3930 = vpop.f32.mrf.mxu0
    %v3931 = vpop.f32.mrf.mxu0
    %3932 = vdwg.mxu0
    %v3933 = vsel %vm159, %v3928, 0.0
    %v3934 = vrot.slane %v3933, 4
    %v3935 = vadd.f32 %v3933, %v3934
    %v3936 = vrot.slane %v3935, 2
    %v3937 = vadd.f32 %v3935, %v3936
    %v3938 = vrot.slane %v3937, 1
    %v3939 = vadd.f32 %v3937, %v3938
    %v3940 = vmul.f32 %v3939, 0.125
    %v3941 = vmul.f32 %v3928, %v3928
    %v3942 = vsel %vm159, %v3941, 0.0
    %v3943 = vrot.slane %v3942, 4
    %v3944 = vadd.f32 %v3942, %v3943
    %v3945 = vrot.slane %v3944, 2
    %v3946 = vadd.f32 %v3944, %v3945
    %v3947 = vrot.slane %v3946, 1
    %v3948 = vadd.f32 %v3946, %v3947
    %v3949 = vmul.f32 %v3948, 0.125
    %v3950 = vmul.f32 %v3940, %v3940
    %v3951 = vsub.f32 %v3949, %v3950
    %v3952 = vsub.f32 %v3928, %v3940
    %v3953 = vadd.f32 %v3951, 1e-05
    %v3954 = vrsqrt.pop %v3953
    %v3955 = vmul.f32 %v3952, %v3954
    %v3956 = vmul.f32 %v3955, %v658
    %v3957 = vadd.f32 %v3956, %v665
    %3959 = vrot.lane.b32.xlu0 %v3957, 32
    %v3960 = vpop.permute.xlu0 %3959
    %v3962 = vadd.f32 %v3566, %v3960
    %3964 = vrot.lane.b32.xlu0 %v3962, 96
    %v3965 = vpop.permute.xlu0 %3964
    %3967 = vst.msk [vmem:[#allocation2] sm:$0xff] %vm159, %v3965
    // Predicated region
    $region42: #{tpu_custom_call.1} parent=1 // pred_check
      _
    $region43: #{tpu_custom_call.1} parent=1 // pred_check_branch
      %3969 = sbr.rel (0) target = $region45
    $region44: #{tpu_custom_call.1} parent=1 // pred_region
      %s3971 = ssub.s32 128, 128
      %3972 = vsyncadd [#allocation3], %s3971
      %s3974 = sshll.u32 [#allocation2], 4
      %s3975 = int_to_ptr.vmem [resolvable:$true] %s3974
      %3977 = dma.vmem_to_hbm [thread:$0]  %s3975, 128, %s10, [#allocation3]
    $region45: #{tpu_custom_call.1} parent=1 // pred_fallthru
      _
    // Predicated region
    $region46: #{tpu_custom_call.1} parent=1 // pred_check
      _
    $region47: #{tpu_custom_call.1} parent=1 // pred_check_branch
      %3979 = sbr.rel (0) target = $region49
    $region48: #{tpu_custom_call.1} parent=1 // pred_region
      %3980 = dma.done [#allocation3], 128
    $region49: #{tpu_custom_call.1} parent=1 // pred_fallthru
      _
    %3981 = vsyncpa [#allocation3], 1

</llo_original>
